<compile_context>
chip_gen: v7x
topology: tpu7x:2x2x1
jax: 0.10.0
libtpu: 0.0.40
codegen_flags: <defaults>
</compile_context>

<pallas_src>
import functools

import jax
import jax.numpy as jnp
from jax import lax
from jax.experimental import pallas as pl
from jax.experimental.pallas import tpu as pltpu


def _round_up(x, m):
    return (x + m - 1) // m * m


def _erf(x):
    # Abramowitz & Stegun 7.1.26 erf polynomial, |err| < 1.5e-7.
    # Exact divide (review: approx reciprocal error dominates otherwise).
    a1, a2, a3, a4, a5 = (0.254829592, -0.284496736, 1.421413741,
                          -1.453152027, 1.061405429)
    p = 0.3275911
    s = jnp.where(x >= 0.0, 1.0, -1.0)
    ax = jnp.abs(x)
    t = 1.0 / (1.0 + p * ax)
    poly = ((((a5 * t + a4) * t + a3) * t + a2) * t + a1) * t
    return s * (1.0 - poly * jnp.exp(-ax * ax))


def _down_fused_kernel(p_ref, w0_ref, w1_ref, w2g_ref, s_ref, b_ref,
                       o_ref, y_scr, z1_scr, zim_scr, *, wp, eps):
    mid_c = w0_ref.shape[1]
    rows1 = z1_scr.shape[0]          # rows of the width-expanded buffer
    m_rows = zim_scr.shape[0]        # padded output rows (multiple of 128)

    # ---- stage 1: 2x2/stride-2 conv as one GEMM into the halo'd padded-flat
    # scratch (halo rows of p_ref are zero -> the 7x7 zero padding is free).
    y_scr[...] = jnp.dot(p_ref[...], w0_ref[...],
                         preferred_element_type=jnp.float32)

    # ---- stage 2a-i: width-direction im2col -- 7 shifted copies (4 -> 28 lanes).
    for dj in range(7):
        z1_scr[:, dj * mid_c:(dj + 1) * mid_c] = y_scr[dj:dj + rows1, :]

    # ---- stage 2a-ii: height-direction im2col -- 7 WIDE copies whose row
    # offsets di*wp are sublane-aligned because wp % 8 == 0 (no relayout).
    for di in range(7):
        off = di * wp
        zim_scr[:, di * 7 * mid_c:(di + 1) * 7 * mid_c] = \
            z1_scr[off:off + m_rows, :]

    # ---- stage 2a-iii: the whole 7x7 conv as ONE K = 49*mid_c GEMM.
    acc = jnp.dot(zim_scr[...], w1_ref[...],
                  preferred_element_type=jnp.float32)           # (M, c2)

    # ---- stage 2b/2c: LayerNorm folded into the flipped 1x1 conv.
    # Everything elementwise runs in the lane-dense (out_c, M) / (1, M)
    # layout; only the channel-mean reductions touch the narrow (c2, M) tile.
    acc_t = jnp.transpose(acc)                                  # (c2, M)
    mu = jnp.mean(acc_t, axis=0, keepdims=True)                 # (1, M)
    var = jnp.mean(acc_t * acc_t, axis=0, keepdims=True) - mu * mu
    inv_std = lax.rsqrt(var + eps)                              # (1, M)
    a = jnp.dot(w2g_ref[...], acc_t,
                preferred_element_type=jnp.float32)             # (out_c, M)
    z = inv_std * (a - mu * s_ref[...]) + b_ref[...]            # (out_c, M)

    # ---- stage 2d: exact (erf) GELU, stored lane-dense (already NCHW-flat).
    o_ref[...] = 0.5 * z * (1.0 + _erf(z * 0.7071067811865476))


def init_params(key, in_c, out_c):
    # mid_c defaults to out_c in DOWN; conv weights kept in HWIO layout
    # (== torch_weight.permute(2, 3, 1, 0)); deterministic synthetic init.
    mid_c = out_c
    k0, k1, k2, k3, k4 = jax.random.split(key, 5)
    return {
        "w_down":  0.1 * jax.random.normal(k0, (2, 2, in_c, mid_c), jnp.float32),
        "w_conv7": 0.1 * jax.random.normal(k1, (7, 7, mid_c, out_c), jnp.float32),
        "ln_gamma": 1.0 + 0.1 * jax.random.normal(k2, (out_c,), jnp.float32),
        "ln_beta": 0.1 * jax.random.normal(k3, (out_c,), jnp.float32),
        "w_pw":    0.1 * jax.random.normal(k4, (out_c, out_c), jnp.float32),
    }


@jax.jit
def down_forward(x_nchw, params):
    n, in_c, h, w = x_nchw.shape
    mid_c = params["w_down"].shape[-1]        # channels after the 2x2 conv
    c2 = params["w_conv7"].shape[-1]          # channels after 7x7 (= LN width)
    out_c = params["w_pw"].shape[-1]

    # stage-1 geometry (k=2, s=2, p=1); stage-2 keeps spatial size (7x7, p=3)
    ho = (h + 2 - 2) // 2 + 1
    wo = (w + 2 - 2) // 2 + 1
    wp = _round_up(wo + 6, 8)                 # halo'd row width, sublane-aligned
    hp = ho + 6
    zrows = ho * wp                           # conv-output rows (padded-W coords)
    m_rows = _round_up(zrows, 128)            # lane-dense output width
    rows1 = 6 * wp + m_rows                   # width-expanded im2col rows
    yrows = _round_up(rows1 + 6, 8)           # stage-1 scratch rows

    # ---- stage-1 patches in padded-flat coordinates (stride == kernel, so
    # this is a pure reorganization of x plus halo zeros -- no HBM blow-up).
    xp = jnp.pad(x_nchw, ((0, 0), (0, 0), (1, 1), (1, 1)))       # conv pad=1
    taps = [xp[:, :, a:a + 2 * ho:2, b:b + 2 * wo:2]
            for a in range(2) for b in range(2)]                 # 4 x (n,ic,ho,wo)
    p0 = jnp.stack(taps, axis=1).reshape(n, 4 * in_c, ho, wo)    # (tap, ci) rows
    p0 = jnp.pad(p0, ((0, 0), (0, 0), (3, 3), (3, 3 + wp - (wo + 6))))
    p0 = p0.reshape(n, 4 * in_c, hp * wp).transpose(0, 2, 1)     # (n, hp*wp, 4ic)
    p0 = jnp.pad(p0, ((0, 0), (0, yrows - hp * wp), (0, 0)))     # (n, yrows, 4ic)

    w0 = params["w_down"].reshape(4 * in_c, mid_c)               # (4ic, mid)
    w1 = params["w_conv7"].reshape(49 * mid_c, c2)               # K order (di,dj,ci)
    # LayerNorm folded into the flipped 1x1: z = inv_std*(W2g@acc^T - mu*s) + b
    w2g = (params["w_pw"] * params["ln_gamma"][:, None]).T        # (out_c, c2)
    svec = jnp.sum(w2g, axis=1, keepdims=True)                    # (out_c, 1)
    bvec = (params["w_pw"].T @ params["ln_beta"]).reshape(out_c, 1)

    out = pl.pallas_call(
        functools.partial(_down_fused_kernel, wp=wp, eps=1e-6),
        out_shape=jax.ShapeDtypeStruct((n, out_c, m_rows), jnp.float32),
        grid=(n,),
        in_specs=[
            pl.BlockSpec((None, yrows, 4 * in_c), lambda i: (i, 0, 0)),
            pl.BlockSpec((4 * in_c, mid_c), lambda i: (0, 0)),
            pl.BlockSpec((49 * mid_c, c2), lambda i: (0, 0)),
            pl.BlockSpec((out_c, c2), lambda i: (0, 0)),
            pl.BlockSpec((out_c, 1), lambda i: (0, 0)),
            pl.BlockSpec((out_c, 1), lambda i: (0, 0)),
        ],
        out_specs=pl.BlockSpec((None, out_c, m_rows), lambda i: (i, 0, 0)),
        scratch_shapes=[
            pltpu.VMEM((yrows, mid_c), jnp.float32),          # stage-1 output
            pltpu.VMEM((rows1, 7 * mid_c), jnp.float32),      # width im2col
            pltpu.VMEM((m_rows, 49 * mid_c), jnp.float32),    # full im2col
        ],
        compiler_params=pltpu.CompilerParams(
            dimension_semantics=("parallel",)),
    )(p0, w0, w1, w2g, svec, bvec)

    # (n, out_c, m_rows) -> NCHW; drop lane padding and the wp halo columns.
    return out[:, :, :zrows].reshape(n, out_c, ho, wp)[:, :, :, :wo]


def ref_forward(x_nchw, params, eps=1e-6):
    # pure-JAX reference for sanity checking
    x = jnp.transpose(x_nchw, (0, 2, 3, 1))
    dn = ("NHWC", "HWIO", "NHWC")
    y = lax.conv_general_dilated(x, params["w_down"], (2, 2),
                                 ((1, 1), (1, 1)), dimension_numbers=dn)
    y = lax.conv_general_dilated(y, params["w_conv7"], (1, 1),
                                 ((3, 3), (3, 3)), dimension_numbers=dn)
    mu = jnp.mean(y, -1, keepdims=True)
    var = jnp.mean((y - mu) ** 2, -1, keepdims=True)
    y = (y - mu) / jnp.sqrt(var + eps) * params["ln_gamma"] + params["ln_beta"]
    z = y @ params["w_pw"]
    z = 0.5 * z * (1.0 + lax.erf(z / jnp.sqrt(2.0)))
    return jnp.transpose(z, (0, 3, 1, 2))


if __name__ == "__main__":
    key = jax.random.PRNGKey(0)
    kx, kp = jax.random.split(key)

    # DOWN's Sequential only composes when mid_c (= out_c) == in_c.
    in_c = out_c = 4
    x = jax.random.normal(kx, (2, in_c, 16, 16), jnp.float32)  # NCHW like torch
    params = init_params(kp, in_c, out_c)

    out = jax.block_until_ready(down_forward(x, params))
    assert out.shape == (2, out_c, 9, 9), out.shape

    ref = ref_forward(x, params)
    assert jnp.allclose(out, ref, rtol=2e-3, atol=2e-3), \
        float(jnp.max(jnp.abs(out - ref)))

    print("KERNEL_OK")
</pallas_src>

<mosaic_0001>
module attributes {stable_mosaic.version = 11 : i64} {
  func.func @_down_fused_kernel(%arg0: i32, %arg1: memref<1x360x16xf32, #tpu.memory_space<vmem>>, %arg2: memref<16x4xf32, #tpu.memory_space<vmem>>, %arg3: memref<196x4xf32, #tpu.memory_space<vmem>>, %arg4: memref<4x4xf32, #tpu.memory_space<vmem>>, %arg5: memref<4x1xf32, #tpu.memory_space<vmem>>, %arg6: memref<4x1xf32, #tpu.memory_space<vmem>>, %arg7: memref<1x4x256xf32, #tpu.memory_space<vmem>>, %arg8: memref<360x4xf32, #tpu.memory_space<vmem>>, %arg9: memref<352x28xf32, #tpu.memory_space<vmem>>, %arg10: memref<256x196xf32, #tpu.memory_space<vmem>>) attributes {dimension_semantics = [#tpu.dimension_semantics<parallel>], iteration_bounds = array<i64: 2>, scalar_prefetch = 0 : i64, scratch_operands = 3 : i64, tpu.core_type = #tpu.core_type<tc>, window_params = [{transform_indices = @transform_0, window_bounds = array<i64: 1, 360, 16>}, {pipeline_mode = #tpu.pipeline_mode<synchronous>, transform_indices = @transform_1, window_bounds = array<i64: 16, 4>}, {pipeline_mode = #tpu.pipeline_mode<synchronous>, transform_indices = @transform_2, window_bounds = array<i64: 196, 4>}, {pipeline_mode = #tpu.pipeline_mode<synchronous>, transform_indices = @transform_3, window_bounds = array<i64: 4, 4>}, {pipeline_mode = #tpu.pipeline_mode<synchronous>, transform_indices = @transform_4, window_bounds = array<i64: 4, 1>}, {pipeline_mode = #tpu.pipeline_mode<synchronous>, transform_indices = @transform_5, window_bounds = array<i64: 4, 1>}, {transform_indices = @transform_6, window_bounds = array<i64: 1, 4, 256>}]} {
    %c0 = arith.constant 0 : index
    %c0_0 = arith.constant 0 : index
    %c0_1 = arith.constant 0 : index
    %0 = vector.load %arg1[%c0, %c0_0, %c0_1] : memref<1x360x16xf32, #tpu.memory_space<vmem>>, vector<1x360x16xf32>
    %1 = vector.shape_cast %0 : vector<1x360x16xf32> to vector<360x16xf32>
    %c0_2 = arith.constant 0 : index
    %c0_3 = arith.constant 0 : index
    %2 = vector.load %arg2[%c0_2, %c0_3] : memref<16x4xf32, #tpu.memory_space<vmem>>, vector<16x4xf32>
    %cst = arith.constant dense<0.000000e+00> : vector<360x4xf32>
    %3 = tpu.matmul %1, %2, %cst {dimension_numbers = #tpu.dot_dimension_numbers<[1], [0], [0], [1], [0, 0, 1, 1], [], []>} : vector<360x16xf32>, vector<16x4xf32>, vector<360x4xf32> -> vector<360x4xf32>
    %c0_4 = arith.constant 0 : index
    %c0_5 = arith.constant 0 : index
    %4 = vector.load %arg8[%c0_4, %c0_5] : memref<360x4xf32, #tpu.memory_space<vmem>>, vector<360x4xf32>
    tpu.vector_store %arg8[%c0_4, %c0_5], %3 {strides = array<i32>} : memref<360x4xf32, #tpu.memory_space<vmem>>, vector<360x4xf32>,
    %c0_6 = arith.constant 0 : index
    %c0_7 = arith.constant 0 : index
    %5 = vector.load %arg8[%c0_6, %c0_7] : memref<360x4xf32, #tpu.memory_space<vmem>>, vector<352x4xf32>
    %c0_8 = arith.constant 0 : index
    %c0_9 = arith.constant 0 : index
    %6 = vector.load %arg9[%c0_8, %c0_9] : memref<352x28xf32, #tpu.memory_space<vmem>>, vector<352x4xf32>
    tpu.vector_store %arg9[%c0_8, %c0_9], %5 {strides = array<i32>} : memref<352x28xf32, #tpu.memory_space<vmem>>, vector<352x4xf32>,
    %c1 = arith.constant 1 : index
    %c0_10 = arith.constant 0 : index
    %7 = vector.load %arg8[%c1, %c0_10] : memref<360x4xf32, #tpu.memory_space<vmem>>, vector<352x4xf32>
    %c0_11 = arith.constant 0 : index
    %c4 = arith.constant 4 : index
    %8 = vector.load %arg9[%c0_11, %c4] : memref<352x28xf32, #tpu.memory_space<vmem>>, vector<352x4xf32>
    tpu.vector_store %arg9[%c0_11, %c4], %7 {strides = array<i32>} : memref<352x28xf32, #tpu.memory_space<vmem>>, vector<352x4xf32>,
    %c2 = arith.constant 2 : index
    %c0_12 = arith.constant 0 : index
    %9 = vector.load %arg8[%c2, %c0_12] : memref<360x4xf32, #tpu.memory_space<vmem>>, vector<352x4xf32>
    %c0_13 = arith.constant 0 : index
    %c8 = arith.constant 8 : index
    %10 = vector.load %arg9[%c0_13, %c8] : memref<352x28xf32, #tpu.memory_space<vmem>>, vector<352x4xf32>
    tpu.vector_store %arg9[%c0_13, %c8], %9 {strides = array<i32>} : memref<352x28xf32, #tpu.memory_space<vmem>>, vector<352x4xf32>,
    %c3 = arith.constant 3 : index
    %c0_14 = arith.constant 0 : index
    %11 = vector.load %arg8[%c3, %c0_14] : memref<360x4xf32, #tpu.memory_space<vmem>>, vector<352x4xf32>
    %c0_15 = arith.constant 0 : index
    %c12 = arith.constant 12 : index
    %12 = vector.load %arg9[%c0_15, %c12] : memref<352x28xf32, #tpu.memory_space<vmem>>, vector<352x4xf32>
    tpu.vector_store %arg9[%c0_15, %c12], %11 {strides = array<i32>} : memref<352x28xf32, #tpu.memory_space<vmem>>, vector<352x4xf32>,
    %c4_16 = arith.constant 4 : index
    %c0_17 = arith.constant 0 : index
    %13 = vector.load %arg8[%c4_16, %c0_17] : memref<360x4xf32, #tpu.memory_space<vmem>>, vector<352x4xf32>
    %c0_18 = arith.constant 0 : index
    %c16 = arith.constant 16 : index
    %14 = vector.load %arg9[%c0_18, %c16] : memref<352x28xf32, #tpu.memory_space<vmem>>, vector<352x4xf32>
    tpu.vector_store %arg9[%c0_18, %c16], %13 {strides = array<i32>} : memref<352x28xf32, #tpu.memory_space<vmem>>, vector<352x4xf32>,
    %c5 = arith.constant 5 : index
    %c0_19 = arith.constant 0 : index
    %15 = vector.load %arg8[%c5, %c0_19] : memref<360x4xf32, #tpu.memory_space<vmem>>, vector<352x4xf32>
    %c0_20 = arith.constant 0 : index
    %c20 = arith.constant 20 : index
    %16 = vector.load %arg9[%c0_20, %c20] : memref<352x28xf32, #tpu.memory_space<vmem>>, vector<352x4xf32>
    tpu.vector_store %arg9[%c0_20, %c20], %15 {strides = array<i32>} : memref<352x28xf32, #tpu.memory_space<vmem>>, vector<352x4xf32>,
    %c6 = arith.constant 6 : index
    %c0_21 = arith.constant 0 : index
    %17 = vector.load %arg8[%c6, %c0_21] : memref<360x4xf32, #tpu.memory_space<vmem>>, vector<352x4xf32>
    %c0_22 = arith.constant 0 : index
    %c24 = arith.constant 24 : index
    %18 = vector.load %arg9[%c0_22, %c24] : memref<352x28xf32, #tpu.memory_space<vmem>>, vector<352x4xf32>
    tpu.vector_store %arg9[%c0_22, %c24], %17 {strides = array<i32>} : memref<352x28xf32, #tpu.memory_space<vmem>>, vector<352x4xf32>,
    %c0_23 = arith.constant 0 : index
    %c0_24 = arith.constant 0 : index
    %19 = vector.load %arg9[%c0_23, %c0_24] : memref<352x28xf32, #tpu.memory_space<vmem>>, vector<256x28xf32>
    %c0_25 = arith.constant 0 : index
    %c0_26 = arith.constant 0 : index
    %20 = vector.load %arg10[%c0_25, %c0_26] : memref<256x196xf32, #tpu.memory_space<vmem>>, vector<256x28xf32>
    tpu.vector_store %arg10[%c0_25, %c0_26], %19 {strides = array<i32>} : memref<256x196xf32, #tpu.memory_space<vmem>>, vector<256x28xf32>,
    %c16_27 = arith.constant 16 : index
    %c0_28 = arith.constant 0 : index
    %21 = vector.load %arg9[%c16_27, %c0_28] : memref<352x28xf32, #tpu.memory_space<vmem>>, vector<256x28xf32>
    %c0_29 = arith.constant 0 : index
    %c28 = arith.constant 28 : index
    %22 = vector.load %arg10[%c0_29, %c28] : memref<256x196xf32, #tpu.memory_space<vmem>>, vector<256x28xf32>
    tpu.vector_store %arg10[%c0_29, %c28], %21 {strides = array<i32>} : memref<256x196xf32, #tpu.memory_space<vmem>>, vector<256x28xf32>,
    %c32 = arith.constant 32 : index
    %c0_30 = arith.constant 0 : index
    %23 = vector.load %arg9[%c32, %c0_30] : memref<352x28xf32, #tpu.memory_space<vmem>>, vector<256x28xf32>
    %c0_31 = arith.constant 0 : index
    %c56 = arith.constant 56 : index
    %24 = vector.load %arg10[%c0_31, %c56] : memref<256x196xf32, #tpu.memory_space<vmem>>, vector<256x28xf32>
    tpu.vector_store %arg10[%c0_31, %c56], %23 {strides = array<i32>} : memref<256x196xf32, #tpu.memory_space<vmem>>, vector<256x28xf32>,
    %c48 = arith.constant 48 : index
    %c0_32 = arith.constant 0 : index
    %25 = vector.load %arg9[%c48, %c0_32] : memref<352x28xf32, #tpu.memory_space<vmem>>, vector<256x28xf32>
    %c0_33 = arith.constant 0 : index
    %c84 = arith.constant 84 : index
    %26 = vector.load %arg10[%c0_33, %c84] : memref<256x196xf32, #tpu.memory_space<vmem>>, vector<256x28xf32>
    tpu.vector_store %arg10[%c0_33, %c84], %25 {strides = array<i32>} : memref<256x196xf32, #tpu.memory_space<vmem>>, vector<256x28xf32>,
    %c64 = arith.constant 64 : index
    %c0_34 = arith.constant 0 : index
    %27 = vector.load %arg9[%c64, %c0_34] : memref<352x28xf32, #tpu.memory_space<vmem>>, vector<256x28xf32>
    %c0_35 = arith.constant 0 : index
    %c112 = arith.constant 112 : index
    %28 = vector.load %arg10[%c0_35, %c112] : memref<256x196xf32, #tpu.memory_space<vmem>>, vector<256x28xf32>
    tpu.vector_store %arg10[%c0_35, %c112], %27 {strides = array<i32>} : memref<256x196xf32, #tpu.memory_space<vmem>>, vector<256x28xf32>,
    %c80 = arith.constant 80 : index
    %c0_36 = arith.constant 0 : index
    %29 = vector.load %arg9[%c80, %c0_36] : memref<352x28xf32, #tpu.memory_space<vmem>>, vector<256x28xf32>
    %c0_37 = arith.constant 0 : index
    %c140 = arith.constant 140 : index
    %30 = vector.load %arg10[%c0_37, %c140] : memref<256x196xf32, #tpu.memory_space<vmem>>, vector<256x28xf32>
    tpu.vector_store %arg10[%c0_37, %c140], %29 {strides = array<i32>} : memref<256x196xf32, #tpu.memory_space<vmem>>, vector<256x28xf32>,
    %c96 = arith.constant 96 : index
    %c0_38 = arith.constant 0 : index
    %31 = vector.load %arg9[%c96, %c0_38] : memref<352x28xf32, #tpu.memory_space<vmem>>, vector<256x28xf32>
    %c0_39 = arith.constant 0 : index
    %c168 = arith.constant 168 : index
    %32 = vector.load %arg10[%c0_39, %c168] : memref<256x196xf32, #tpu.memory_space<vmem>>, vector<256x28xf32>
    tpu.vector_store %arg10[%c0_39, %c168], %31 {strides = array<i32>} : memref<256x196xf32, #tpu.memory_space<vmem>>, vector<256x28xf32>,
    %c0_40 = arith.constant 0 : index
    %c0_41 = arith.constant 0 : index
    %33 = vector.load %arg10[%c0_40, %c0_41] : memref<256x196xf32, #tpu.memory_space<vmem>>, vector<256x196xf32>
    %c0_42 = arith.constant 0 : index
    %c0_43 = arith.constant 0 : index
    %34 = vector.load %arg3[%c0_42, %c0_43] : memref<196x4xf32, #tpu.memory_space<vmem>>, vector<196x4xf32>
    %cst_44 = arith.constant dense<0.000000e+00> : vector<256x4xf32>
    %35 = tpu.matmul %33, %34, %cst_44 {dimension_numbers = #tpu.dot_dimension_numbers<[1], [0], [0], [1], [0, 0, 1, 1], [], []>} : vector<256x196xf32>, vector<196x4xf32>, vector<256x4xf32> -> vector<256x4xf32>
    %36 = tpu.transpose %35, [1, 0] : vector<256x4xf32> -> vector<4x256xf32>
    %cst_45 = arith.constant dense<0.000000e+00> : vector<256xf32>
    %37 = vector.multi_reduction <add>, %36, %cst_45 [0] : vector<4x256xf32> to vector<256xf32>
    %38 = vector.shape_cast %37 : vector<256xf32> to vector<1x256xf32>
    %cst_46 = arith.constant 4.000000e+00 : f32
    %39 = vector.broadcast %cst_46 : f32 to vector<1x256xf32>
    %40 = arith.divf %38, %39 : vector<1x256xf32>
    %41 = arith.mulf %36, %36 : vector<4x256xf32>
    %cst_47 = arith.constant dense<0.000000e+00> : vector<256xf32>
    %42 = vector.multi_reduction <add>, %41, %cst_47 [0] : vector<4x256xf32> to vector<256xf32>
    %43 = vector.shape_cast %42 : vector<256xf32> to vector<1x256xf32>
    %cst_48 = arith.constant 4.000000e+00 : f32
    %44 = vector.broadcast %cst_48 : f32 to vector<1x256xf32>
    %45 = arith.divf %43, %44 : vector<1x256xf32>
    %46 = arith.mulf %40, %40 : vector<1x256xf32>
    %47 = arith.subf %45, %46 : vector<1x256xf32>
    %cst_49 = arith.constant 9.99999997E-7 : f32
    %48 = vector.broadcast %cst_49 : f32 to vector<1x256xf32>
    %49 = arith.addf %47, %48 : vector<1x256xf32>
    %50 = math.rsqrt %49 : vector<1x256xf32>
    %c0_50 = arith.constant 0 : index
    %c0_51 = arith.constant 0 : index
    %51 = vector.load %arg4[%c0_50, %c0_51] : memref<4x4xf32, #tpu.memory_space<vmem>>, vector<4x4xf32>
    %cst_52 = arith.constant dense<0.000000e+00> : vector<4x256xf32>
    %52 = tpu.matmul %51, %36, %cst_52 {dimension_numbers = #tpu.dot_dimension_numbers<[1], [0], [0], [1], [0, 0, 1, 1], [], []>} : vector<4x4xf32>, vector<4x256xf32>, vector<4x256xf32> -> vector<4x256xf32>
    %c0_53 = arith.constant 0 : index
    %c0_54 = arith.constant 0 : index
    %53 = vector.load %arg5[%c0_53, %c0_54] : memref<4x1xf32, #tpu.memory_space<vmem>>, vector<4x1xf32>
    %54 = vector.broadcast %40 : vector<1x256xf32> to vector<4x256xf32>
    %55 = vector.broadcast %53 : vector<4x1xf32> to vector<4x256xf32>
    %56 = arith.mulf %54, %55 : vector<4x256xf32>
    %57 = arith.subf %52, %56 : vector<4x256xf32>
    %58 = vector.broadcast %50 : vector<1x256xf32> to vector<4x256xf32>
    %59 = arith.mulf %58, %57 : vector<4x256xf32>
    %c0_55 = arith.constant 0 : index
    %c0_56 = arith.constant 0 : index
    %60 = vector.load %arg6[%c0_55, %c0_56] : memref<4x1xf32, #tpu.memory_space<vmem>>, vector<4x1xf32>
    %61 = vector.broadcast %60 : vector<4x1xf32> to vector<4x256xf32>
    %62 = arith.addf %59, %61 : vector<4x256xf32>
    %cst_57 = arith.constant 5.000000e-01 : f32
    %63 = vector.broadcast %cst_57 : f32 to vector<4x256xf32>
    %64 = arith.mulf %63, %62 : vector<4x256xf32>
    %cst_58 = arith.constant 0.707106769 : f32
    %65 = vector.broadcast %cst_58 : f32 to vector<4x256xf32>
    %66 = arith.mulf %62, %65 : vector<4x256xf32>
    %cst_59 = arith.constant 0.000000e+00 : f32
    %67 = vector.broadcast %cst_59 : f32 to vector<4x256xf32>
    %68 = arith.cmpf oge, %66, %67 : vector<4x256xf32>
    %cst_60 = arith.constant 1.000000e+00 : f32
    %cst_61 = arith.constant -1.000000e+00 : f32
    %69 = vector.broadcast %cst_60 : f32 to vector<4x256xf32>
    %70 = vector.broadcast %cst_61 : f32 to vector<4x256xf32>
    %71 = arith.select %68, %69, %70 : vector<4x256xi1>, vector<4x256xf32>
    %72 = math.absf %66 : vector<4x256xf32>
    %cst_62 = arith.constant 0.327591091 : f32
    %73 = vector.broadcast %cst_62 : f32 to vector<4x256xf32>
    %74 = arith.mulf %73, %72 : vector<4x256xf32>
    %cst_63 = arith.constant 1.000000e+00 : f32
    %75 = vector.broadcast %cst_63 : f32 to vector<4x256xf32>
    %76 = arith.addf %75, %74 : vector<4x256xf32>
    %cst_64 = arith.constant 1.000000e+00 : f32
    %77 = vector.broadcast %cst_64 : f32 to vector<4x256xf32>
    %78 = arith.divf %77, %76 : vector<4x256xf32>
    %cst_65 = arith.constant 1.06140542 : f32
    %79 = vector.broadcast %cst_65 : f32 to vector<4x256xf32>
    %80 = arith.mulf %79, %78 : vector<4x256xf32>
    %cst_66 = arith.constant -1.45315206 : f32
    %81 = vector.broadcast %cst_66 : f32 to vector<4x256xf32>
    %82 = arith.addf %80, %81 : vector<4x256xf32>
    %83 = arith.mulf %82, %78 : vector<4x256xf32>
    %cst_67 = arith.constant 1.42141378 : f32
    %84 = vector.broadcast %cst_67 : f32 to vector<4x256xf32>
    %85 = arith.addf %83, %84 : vector<4x256xf32>
    %86 = arith.mulf %85, %78 : vector<4x256xf32>
    %cst_68 = arith.constant -0.284496725 : f32
    %87 = vector.broadcast %cst_68 : f32 to vector<4x256xf32>
    %88 = arith.addf %86, %87 : vector<4x256xf32>
    %89 = arith.mulf %88, %78 : vector<4x256xf32>
    %cst_69 = arith.constant 0.254829586 : f32
    %90 = vector.broadcast %cst_69 : f32 to vector<4x256xf32>
    %91 = arith.addf %89, %90 : vector<4x256xf32>
    %92 = arith.mulf %91, %78 : vector<4x256xf32>
    %cst_70 = arith.constant 0.000000e+00 : f32
    %93 = vector.broadcast %cst_70 : f32 to vector<4x256xf32>
    %94 = arith.subf %93, %72 : vector<4x256xf32>
    %95 = arith.mulf %94, %72 : vector<4x256xf32>
    %96 = math.exp %95 : vector<4x256xf32>
    %97 = arith.mulf %92, %96 : vector<4x256xf32>
    %cst_71 = arith.constant 1.000000e+00 : f32
    %98 = vector.broadcast %cst_71 : f32 to vector<4x256xf32>
    %99 = arith.subf %98, %97 : vector<4x256xf32>
    %100 = arith.mulf %71, %99 : vector<4x256xf32>
    %cst_72 = arith.constant 1.000000e+00 : f32
    %101 = vector.broadcast %cst_72 : f32 to vector<4x256xf32>
    %102 = arith.addf %101, %100 : vector<4x256xf32>
    %103 = arith.mulf %64, %102 : vector<4x256xf32>
    %c0_73 = arith.constant 0 : index
    %c0_74 = arith.constant 0 : index
    %c0_75 = arith.constant 0 : index
    %104 = vector.load %arg7[%c0_73, %c0_74, %c0_75] : memref<1x4x256xf32, #tpu.memory_space<vmem>>, vector<1x4x256xf32>
    %105 = vector.shape_cast %104 : vector<1x4x256xf32> to vector<4x256xf32>
    %106 = vector.shape_cast %103 : vector<4x256xf32> to vector<1x4x256xf32>
    tpu.vector_store %arg7[%c0_73, %c0_74, %c0_75], %106 {strides = array<i32>} : memref<1x4x256xf32, #tpu.memory_space<vmem>>, vector<1x4x256xf32>,
    return
  }
  func.func @transform_0(%arg0: i32) -> (i32, i32, i32) {
    %c0_i32 = arith.constant 0 : i32
    %c0_i32_0 = arith.constant 0 : i32
    %c0_i32_1 = arith.constant 0 : i32
    return %arg0, %c0_i32, %c0_i32_0 : i32, i32, i32
  }
  func.func @transform_1(%arg0: i32) -> (i32, i32) {
    %c0_i32 = arith.constant 0 : i32
    %c0_i32_0 = arith.constant 0 : i32
    %c0_i32_1 = arith.constant 0 : i32
    return %c0_i32, %c0_i32_0 : i32, i32
  }
  func.func @transform_2(%arg0: i32) -> (i32, i32) {
    %c0_i32 = arith.constant 0 : i32
    %c0_i32_0 = arith.constant 0 : i32
    %c0_i32_1 = arith.constant 0 : i32
    return %c0_i32, %c0_i32_0 : i32, i32
  }
  func.func @transform_3(%arg0: i32) -> (i32, i32) {
    %c0_i32 = arith.constant 0 : i32
    %c0_i32_0 = arith.constant 0 : i32
    %c0_i32_1 = arith.constant 0 : i32
    return %c0_i32, %c0_i32_0 : i32, i32
  }
  func.func @transform_4(%arg0: i32) -> (i32, i32) {
    %c0_i32 = arith.constant 0 : i32
    %c0_i32_0 = arith.constant 0 : i32
    %c0_i32_1 = arith.constant 0 : i32
    return %c0_i32, %c0_i32_0 : i32, i32
  }
  func.func @transform_5(%arg0: i32) -> (i32, i32) {
    %c0_i32 = arith.constant 0 : i32
    %c0_i32_0 = arith.constant 0 : i32
    %c0_i32_1 = arith.constant 0 : i32
    return %c0_i32, %c0_i32_0 : i32, i32
  }
  func.func @transform_6(%arg0: i32) -> (i32, i32, i32) {
    %c0_i32 = arith.constant 0 : i32
    %c0_i32_0 = arith.constant 0 : i32
    %c0_i32_1 = arith.constant 0 : i32
    return %arg0, %c0_i32, %c0_i32_0 : i32, i32, i32
  }
}

</mosaic_0001>

<llo_original>
// kernel: down_forward.1
$region0: #{down_forward.1}
  #allocation0 [shape = 'u32[]', space=smem, size = 0x4, offset = 0x4, fixed_abs, tag = 'smem constant byte address 0x4 - core index']
  #allocation1 [shape = 'u32[144,128]{1,0:T(1,128)}', space=vmem, size = 0x12000, scoped, tag = 'internal scratch']
  #allocation2 [shape = 'f32[360,4]{1,0:T(8,128)}', space=vmem, size = 0x2d000, scoped, tag = 'scratch operand']
  #allocation3 [shape = 'f32[352,28]{1,0:T(8,128)}', space=vmem, size = 0x2c000, scoped, tag = 'scratch operand']
  #allocation4 [shape = 'f32[256,196]{1,0:T(8,128)}', space=vmem, size = 0x40000, scoped, tag = 'scratch operand']
  %s0 = inlined_call_operand.vmem [shape: f32[2,360,16], index: 0, kind: input, shape index: {}]
  %s1 = inlined_call_operand.vmem [shape: f32[16,4], index: 1, kind: input, shape index: {}]
  %s2 = inlined_call_operand.vmem [shape: f32[196,4], index: 2, kind: input, shape index: {}]
  %s3 = inlined_call_operand.vmem [shape: f32[4,4], index: 3, kind: input, shape index: {}]
  %s4 = inlined_call_operand.vmem [shape: f32[4,1], index: 4, kind: input, shape index: {}]
  %s5 = inlined_call_operand.vmem [shape: f32[4,1], index: 5, kind: input, shape index: {}]
  %s6 = inlined_call_operand.vmem [shape: f32[2,4,256], index: 6, kind: output, shape index: {}]
  %s7 = sld [smem:[#allocation0]]
  $region57: #{down_forward.1} parent=0
    _
  %s9 = ssub.s32 1, %s7
  %s10 = scalar_select 0, %s9, %s7
  loop: start=0, step=1, limit=4
  $region2: #{down_forward.1} parent=0 // loop_pre_header
    _
  $region3: #{down_forward.1} parent=0 // loop_header
    %s12 = sphi 0, %s16
    %p13 = scmp.ge.s32.totalorder %s12, 4
    %s22 = sphi 0, %s24
    %s25 = sphi 0, %s22
    %s26 = sphi 0, %s25
    %s42 = sphi 0, %s26
    %s46 = sphi 0, %s46
    %s48 = sphi 0, %s46
    %s49 = sphi 0, %s48
    %s63 = sphi 0, %s49
    %s67 = sphi 0, %s67
    %s69 = sphi 0, %s67
    %s70 = sphi 0, %s69
    %s84 = sphi 0, %s70
    %s88 = sphi 0, %s88
    %s90 = sphi 0, %s88
    %s91 = sphi 0, %s90
    %s105 = sphi 0, %s91
    %s109 = sphi 0, %s109
    %s111 = sphi 0, %s109
    %s112 = sphi 0, %s111
    %s126 = sphi 0, %s112
    %s130 = sphi 0, %s130
    %s132 = sphi 0, %s130
    %s133 = sphi 0, %s132
    %s147 = sphi 0, %s133
    %s153 = sphi 0, %s155
    %s156 = sphi 0, %s153
    %s157 = sphi 0, %s156
    %s173 = sphi 0, %s157
  $region4: #{down_forward.1} parent=0 // loop_header_branch
    %15 = sbr.rel (%p13) target = $region8
  $region5: #{down_forward.1} parent=0 // loop_body
    %s17 = ssub.s32 %s12, 1
    %s18 = ssub.s32 %s12, 2
    %s19 = sadd.s32 %s12, 1
    %s20 = ssub.s32 %s12, %s19
    %p21 = scmp.eq.s32.totalorder %s20, 0
    %s23 = sadd.s32 %s22, 1
    %s24 = scalar_select %p21, %s22, %s23
    %p27 = pneg %p21
    %p28 = scmp.eq.s32.totalorder %s12, 1
    %p29 = por %p27, %p28
    %p30 = scmp.ne.s32.totalorder %s22, %s25
    %p31 = scmp.eq.s32.totalorder %s12, 0
    %p32 = por %p30, %p31
    %p33 = scmp.ne.s32.totalorder %s22, %s25
    %p34 = scmp.eq.s32.totalorder %s17, 1
    %p35 = por %p33, %p34
    %p36 = scmp.ne.s32.totalorder %s25, %s26
    %p37 = scmp.eq.s32.totalorder %s17, 0
    %p38 = por %p36, %p37
    %p39 = scmp.ne.s32.totalorder %s25, %s26
    %p40 = scmp.eq.s32.totalorder %s18, 1
    %p41 = por %p39, %p40
    %p43 = scmp.ne.s32.totalorder %s26, %s42
    %p44 = scmp.eq.s32.totalorder %s18, 0
    %p45 = por %p43, %p44
    %s47 = sadd.s32 %s46, 1
    %p50 = scmp.eq.s32.totalorder %s12, 1
    %p51 = scmp.ne.s32.totalorder %s46, %s48
    %p52 = scmp.eq.s32.totalorder %s12, 0
    %p53 = por %p51, %p52
    %p54 = scmp.ne.s32.totalorder %s46, %s48
    %p55 = scmp.eq.s32.totalorder %s17, 1
    %p56 = por %p54, %p55
    %p57 = scmp.ne.s32.totalorder %s48, %s49
    %p58 = scmp.eq.s32.totalorder %s17, 0
    %p59 = por %p57, %p58
    %p60 = scmp.ne.s32.totalorder %s48, %s49
    %p61 = scmp.eq.s32.totalorder %s18, 1
    %p62 = por %p60, %p61
    %p64 = scmp.ne.s32.totalorder %s49, %s63
    %p65 = scmp.eq.s32.totalorder %s18, 0
    %p66 = por %p64, %p65
    %s68 = sadd.s32 %s67, 1
    %p71 = scmp.eq.s32.totalorder %s12, 1
    %p72 = scmp.ne.s32.totalorder %s67, %s69
    %p73 = scmp.eq.s32.totalorder %s12, 0
    %p74 = por %p72, %p73
    %p75 = scmp.ne.s32.totalorder %s67, %s69
    %p76 = scmp.eq.s32.totalorder %s17, 1
    %p77 = por %p75, %p76
    %p78 = scmp.ne.s32.totalorder %s69, %s70
    %p79 = scmp.eq.s32.totalorder %s17, 0
    %p80 = por %p78, %p79
    %p81 = scmp.ne.s32.totalorder %s69, %s70
    %p82 = scmp.eq.s32.totalorder %s18, 1
    %p83 = por %p81, %p82
    %p85 = scmp.ne.s32.totalorder %s70, %s84
    %p86 = scmp.eq.s32.totalorder %s18, 0
    %p87 = por %p85, %p86
    %s89 = sadd.s32 %s88, 1
    %p92 = scmp.eq.s32.totalorder %s12, 1
    %p93 = scmp.ne.s32.totalorder %s88, %s90
    %p94 = scmp.eq.s32.totalorder %s12, 0
    %p95 = por %p93, %p94
    %p96 = scmp.ne.s32.totalorder %s88, %s90
    %p97 = scmp.eq.s32.totalorder %s17, 1
    %p98 = por %p96, %p97
    %p99 = scmp.ne.s32.totalorder %s90, %s91
    %p100 = scmp.eq.s32.totalorder %s17, 0
    %p101 = por %p99, %p100
    %p102 = scmp.ne.s32.totalorder %s90, %s91
    %p103 = scmp.eq.s32.totalorder %s18, 1
    %p104 = por %p102, %p103
    %p106 = scmp.ne.s32.totalorder %s91, %s105
    %p107 = scmp.eq.s32.totalorder %s18, 0
    %p108 = por %p106, %p107
    %s110 = sadd.s32 %s109, 1
    %p113 = scmp.eq.s32.totalorder %s12, 1
    %p114 = scmp.ne.s32.totalorder %s109, %s111
    %p115 = scmp.eq.s32.totalorder %s12, 0
    %p116 = por %p114, %p115
    %p117 = scmp.ne.s32.totalorder %s109, %s111
    %p118 = scmp.eq.s32.totalorder %s17, 1
    %p119 = por %p117, %p118
    %p120 = scmp.ne.s32.totalorder %s111, %s112
    %p121 = scmp.eq.s32.totalorder %s17, 0
    %p122 = por %p120, %p121
    %p123 = scmp.ne.s32.totalorder %s111, %s112
    %p124 = scmp.eq.s32.totalorder %s18, 1
    %p125 = por %p123, %p124
    %p127 = scmp.ne.s32.totalorder %s112, %s126
    %p128 = scmp.eq.s32.totalorder %s18, 0
    %p129 = por %p127, %p128
    %s131 = sadd.s32 %s130, 1
    %p134 = scmp.eq.s32.totalorder %s12, 1
    %p135 = scmp.ne.s32.totalorder %s130, %s132
    %p136 = scmp.eq.s32.totalorder %s12, 0
    %p137 = por %p135, %p136
    %p138 = scmp.ne.s32.totalorder %s130, %s132
    %p139 = scmp.eq.s32.totalorder %s17, 1
    %p140 = por %p138, %p139
    %p141 = scmp.ne.s32.totalorder %s132, %s133
    %p142 = scmp.eq.s32.totalorder %s17, 0
    %p143 = por %p141, %p142
    %p144 = scmp.ne.s32.totalorder %s132, %s133
    %p145 = scmp.eq.s32.totalorder %s18, 1
    %p146 = por %p144, %p145
    %p148 = scmp.ne.s32.totalorder %s133, %s147
    %p149 = scmp.eq.s32.totalorder %s18, 0
    %p150 = por %p148, %p149
    %s151 = ssub.s32 %s12, %s19
    %p152 = scmp.eq.s32.totalorder %s151, 0
    %s154 = sadd.s32 %s153, 1
    %s155 = scalar_select %p152, %s153, %s154
    %p158 = pneg %p152
    %p159 = scmp.eq.s32.totalorder %s12, 1
    %p160 = por %p158, %p159
    %p161 = scmp.ne.s32.totalorder %s153, %s156
    %p162 = scmp.eq.s32.totalorder %s12, 0
    %p163 = por %p161, %p162
    %p164 = scmp.ne.s32.totalorder %s153, %s156
    %p165 = scmp.eq.s32.totalorder %s17, 1
    %p166 = por %p164, %p165
    %p167 = scmp.ne.s32.totalorder %s156, %s157
    %p168 = scmp.eq.s32.totalorder %s17, 0
    %p169 = por %p167, %p168
    %p170 = scmp.ne.s32.totalorder %s156, %s157
    %p171 = scmp.eq.s32.totalorder %s18, 1
    %p172 = por %p170, %p171
    %p174 = scmp.ne.s32.totalorder %s157, %s173
    %p175 = scmp.eq.s32.totalorder %s18, 0
    %p176 = por %p174, %p175
    %p177 = scmp.le.s32.totalorder 1, %s12
    %p178 = scmp.lt.s32.totalorder %s12, 3
    %p179 = pnand %p177, %p178
    %p180 = pneg %p179
    // Predicated region
    $region9: #{down_forward.1} parent=5 // pred_check
      _
    $region10: #{down_forward.1} parent=5 // pred_check_branch
      %182 = sbr.rel (%p179) target = $region12
    $region11: #{down_forward.1} parent=5 // pred_region
      %s183 = ssub.s32 %s12, 1
      // Predicated region
      $region13: #{down_forward.1} parent=11 // pred_check
        %p184 = pneg %p59
      $region14: #{down_forward.1} parent=11 // pred_check_branch
        %186 = sbr.rel (%p184) target = $region16
      $region15: #{down_forward.1} parent=11 // pred_region
        _
      $region16: #{down_forward.1} parent=11 // pred_fallthru
        _
      // Predicated region
      $region17: #{down_forward.1} parent=11 // pred_check
        %p187 = pneg %p80
      $region18: #{down_forward.1} parent=11 // pred_check_branch
        %189 = sbr.rel (%p187) target = $region20
      $region19: #{down_forward.1} parent=11 // pred_region
        _
      $region20: #{down_forward.1} parent=11 // pred_fallthru
        _
      // Predicated region
      $region21: #{down_forward.1} parent=11 // pred_check
        %p190 = pneg %p101
      $region22: #{down_forward.1} parent=11 // pred_check_branch
        %192 = sbr.rel (%p190) target = $region24
      $region23: #{down_forward.1} parent=11 // pred_region
        _
      $region24: #{down_forward.1} parent=11 // pred_fallthru
        _
      // Predicated region
      $region25: #{down_forward.1} parent=11 // pred_check
        %p193 = pneg %p122
      $region26: #{down_forward.1} parent=11 // pred_check_branch
        %195 = sbr.rel (%p193) target = $region28
      $region27: #{down_forward.1} parent=11 // pred_region
        _
      $region28: #{down_forward.1} parent=11 // pred_fallthru
        _
      // Predicated region
      $region29: #{down_forward.1} parent=11 // pred_check
        %p196 = pneg %p143
      $region30: #{down_forward.1} parent=11 // pred_check_branch
        %198 = sbr.rel (%p196) target = $region32
      $region31: #{down_forward.1} parent=11 // pred_region
        _
      $region32: #{down_forward.1} parent=11 // pred_fallthru
        _
    $region12: #{down_forward.1} parent=5 // pred_fallthru
      _
    %p199 = scmp.lt.s32.totalorder %s12, 2
    // Predicated region
    $region33: #{down_forward.1} parent=5 // pred_check
      %p200 = pneg %p199
    $region34: #{down_forward.1} parent=5 // pred_check_branch
      %202 = sbr.rel (%p200) target = $region36
    $region35: #{down_forward.1} parent=5 // pred_region
      // Predicated region
      $region37: #{down_forward.1} parent=35 // pred_check
        %p203 = pneg %p32
      $region38: #{down_forward.1} parent=35 // pred_check_branch
        %205 = sbr.rel (%p203) target = $region40
      $region39: #{down_forward.1} parent=35 // pred_region
        %p206 = scmp.lt.s32.totalorder %s12, 1
        %s207 = scalar_select %p206, %s12, 1
        %s208 = smul.addr %s207, 45
        %s209 = smul.addr %s208, 8
        %s210 = scalar_lea.vmem %s0, %s209
      $region40: #{down_forward.1} parent=35 // pred_fallthru
        _
    $region36: #{down_forward.1} parent=5 // pred_fallthru
      _
    %p211 = scmp.le.s32.totalorder 1, %s12
    %p212 = scmp.lt.s32.totalorder %s12, 3
    %p213 = pnand %p211, %p212
    %p214 = pneg %p213
    // Predicated region
    $region41: #{down_forward.1} parent=5 // pred_check
      _
    $region42: #{down_forward.1} parent=5 // pred_check_branch
      %216 = sbr.rel (%p213) target = $region44
    $region43: #{down_forward.1} parent=5 // pred_region
      %s217 = ssub.s32 %s12, 1
      %p218 = scmp.lt.s32.totalorder %s17, 1
      %s219 = scalar_select %p218, %s17, 1
      %s220 = smul.addr %s219, 45
      %s221 = smul.addr %s220, 8
      %s222 = scalar_lea.vmem %s0, %s221
      %p223 = pneg %p38
      %p224 = pneg %p35
      %p225 = pneg %p59
      %p226 = pneg %p56
      %p227 = pneg %p80
      %p228 = pneg %p77
      %p229 = pneg %p101
      %p230 = pneg %p98
      %p231 = pneg %p122
      %p232 = pneg %p119
      %p233 = pneg %p143
      %p234 = pneg %p140
      %p235 = pneg %p169
      %p236 = pneg %p166
      %p237 = scmp.lt.s32.totalorder %s17, 1
      %s238 = scalar_select %p237, %s17, 1
      %s239 = smul.addr %s238, 2
      %s240 = smul.addr %s239, 4
      %s241 = scalar_lea.vmem %s6, %s240
      %p242 = scmp.lt.s32.totalorder %s17, 1
      %s243 = scalar_select %p242, %s17, 1
      %s244 = smul.addr %s243, 45
      %s245 = smul.addr %s244, 8
      %s246 = scalar_lea.vmem %s0, %s245
      %p247 = scmp.lt.s32.totalorder %s17, 1
      %s248 = scalar_select %p247, %s17, 1
      %s249 = smul.addr %s248, 2
      %s250 = smul.addr %s249, 4
      %s251 = scalar_lea.vmem %s6, %s250
      %v252 = vld [vmem:[%s246] sm:$0xff]
      %v253 = vld [vmem:[%s246 + $0x8] sm:$0xff]
      %v254 = vld [vmem:[%s246 + $0x10] sm:$0xff]
      %v255 = vld [vmem:[%s246 + $0x18] sm:$0xff]
      %v256 = vld [vmem:[%s246 + $0x20] sm:$0xff]
      %v257 = vld [vmem:[%s246 + $0x28] sm:$0xff]
      %v258 = vld [vmem:[%s246 + $0x30] sm:$0xff]
      %v259 = vld [vmem:[%s246 + $0x38] sm:$0xff]
      %v260 = vld [vmem:[%s246 + $0x40] sm:$0xff]
      %v261 = vld [vmem:[%s246 + $0x48] sm:$0xff]
      %v262 = vld [vmem:[%s246 + $0x50] sm:$0xff]
      %v263 = vld [vmem:[%s246 + $0x58] sm:$0xff]
      %v264 = vld [vmem:[%s246 + $0x60] sm:$0xff]
      %v265 = vld [vmem:[%s246 + $0x68] sm:$0xff]
      %v266 = vld [vmem:[%s246 + $0x70] sm:$0xff]
      %v267 = vld [vmem:[%s246 + $0x78] sm:$0xff]
      %v268 = vld [vmem:[%s246 + $0x80] sm:$0xff]
      %v269 = vld [vmem:[%s246 + $0x88] sm:$0xff]
      %v270 = vld [vmem:[%s246 + $0x90] sm:$0xff]
      %v271 = vld [vmem:[%s246 + $0x98] sm:$0xff]
      %v272 = vld [vmem:[%s246 + $0xa0] sm:$0xff]
      %v273 = vld [vmem:[%s246 + $0xa8] sm:$0xff]
      %v274 = vld [vmem:[%s246 + $0xb0] sm:$0xff]
      %v275 = vld [vmem:[%s246 + $0xb8] sm:$0xff]
      %v276 = vld [vmem:[%s246 + $0xc0] sm:$0xff]
      %v277 = vld [vmem:[%s246 + $0xc8] sm:$0xff]
      %v278 = vld [vmem:[%s246 + $0xd0] sm:$0xff]
      %v279 = vld [vmem:[%s246 + $0xd8] sm:$0xff]
      %v280 = vld [vmem:[%s246 + $0xe0] sm:$0xff]
      %v281 = vld [vmem:[%s246 + $0xe8] sm:$0xff]
      %v282 = vld [vmem:[%s246 + $0xf0] sm:$0xff]
      %v283 = vld [vmem:[%s246 + $0xf8] sm:$0xff]
      %v284 = vld [vmem:[%s246 + $0x100] sm:$0xff]
      %v285 = vld [vmem:[%s246 + $0x108] sm:$0xff]
      %v286 = vld [vmem:[%s246 + $0x110] sm:$0xff]
      %v287 = vld [vmem:[%s246 + $0x118] sm:$0xff]
      %v288 = vld [vmem:[%s246 + $0x120] sm:$0xff]
      %v289 = vld [vmem:[%s246 + $0x128] sm:$0xff]
      %v290 = vld [vmem:[%s246 + $0x130] sm:$0xff]
      %v291 = vld [vmem:[%s246 + $0x138] sm:$0xff]
      %v292 = vld [vmem:[%s246 + $0x140] sm:$0xff]
      %v293 = vld [vmem:[%s246 + $0x148] sm:$0xff]
      %v294 = vld [vmem:[%s246 + $0x150] sm:$0xff]
      %v295 = vld [vmem:[%s246 + $0x158] sm:$0xff]
      %v296 = vld [vmem:[%s246 + $0x160] sm:$0xff]
      %v297 = vld [vmem:[%s1] sm:$0xff]
      %v298 = vld [vmem:[%s1 + $0x8] sm:$0xff]
      %vm299 = vcmask 130048
      %v301 = vsel %vm299, %v252, 0
      %v304 = vsel %vm299, %v253, 0
      %v307 = vsel %vm299, %v254, 0
      %v310 = vsel %vm299, %v255, 0
      %v313 = vsel %vm299, %v256, 0
      %v316 = vsel %vm299, %v257, 0
      %v319 = vsel %vm299, %v258, 0
      %v322 = vsel %vm299, %v259, 0
      %v325 = vsel %vm299, %v260, 0
      %v328 = vsel %vm299, %v261, 0
      %v331 = vsel %vm299, %v262, 0
      %v334 = vsel %vm299, %v263, 0
      %v337 = vsel %vm299, %v264, 0
      %v340 = vsel %vm299, %v265, 0
      %v343 = vsel %vm299, %v266, 0
      %v346 = vsel %vm299, %v267, 0
      %v349 = vsel %vm299, %v268, 0
      %v352 = vsel %vm299, %v269, 0
      %v355 = vsel %vm299, %v270, 0
      %v358 = vsel %vm299, %v271, 0
      %v361 = vsel %vm299, %v272, 0
      %v364 = vsel %vm299, %v273, 0
      %v367 = vsel %vm299, %v274, 0
      %v370 = vsel %vm299, %v275, 0
      %v373 = vsel %vm299, %v276, 0
      %v376 = vsel %vm299, %v277, 0
      %v379 = vsel %vm299, %v278, 0
      %v382 = vsel %vm299, %v279, 0
      %v385 = vsel %vm299, %v280, 0
      %v388 = vsel %vm299, %v281, 0
      %v391 = vsel %vm299, %v282, 0
      %v394 = vsel %vm299, %v283, 0
      %v397 = vsel %vm299, %v284, 0
      %v400 = vsel %vm299, %v285, 0
      %v403 = vsel %vm299, %v286, 0
      %v406 = vsel %vm299, %v287, 0
      %v409 = vsel %vm299, %v288, 0
      %v412 = vsel %vm299, %v289, 0
      %v415 = vsel %vm299, %v290, 0
      %v418 = vsel %vm299, %v291, 0
      %v421 = vsel %vm299, %v292, 0
      %v424 = vsel %vm299, %v293, 0
      %v427 = vsel %vm299, %v294, 0
      %v430 = vsel %vm299, %v295, 0
      %v433 = vsel %vm299, %v296, 0
      %435 = vmatprep.subr.mxu0 0.0
      %436 = vmatpush1.msra.mxu0 %v297
      %437 = vmatprep.subr.mxu0 0.0
      %438 = vmatpush1.msra.mxu0 %v298
      %439 = vmatprep.subr.mxu0 0.0
      %440 = vmatpush1.msra.mxu0 0.0
      %441 = vmatprep.subr.mxu0 0.0
      %442 = vmatpush1.msra.mxu0 0.0
      %443 = vmatprep.subr.mxu0 0.0
      %444 = vmatpush1.msra.mxu0 0.0
      %445 = vmatprep.subr.mxu0 0.0
      %446 = vmatpush1.msra.mxu0 0.0
      %447 = vmatprep.subr.mxu0 0.0
      %448 = vmatpush1.msra.mxu0 0.0
      %449 = vmatprep.subr.mxu0 0.0
      %450 = vmatpush1.msra.mxu0 0.0
      %451 = vmatprep.subr.mxu0 0.0
      %452 = vmatpush1.msra.mxu0 0.0
      %453 = vmatprep.subr.mxu0 0.0
      %454 = vmatpush1.msra.mxu0 0.0
      %455 = vmatprep.subr.mxu0 0.0
      %456 = vmatpush1.msra.mxu0 0.0
      %457 = vmatprep.subr.mxu0 0.0
      %458 = vmatpush1.msra.mxu0 0.0
      %459 = vmatprep.subr.mxu0 0.0
      %460 = vmatpush1.msra.mxu0 0.0
      %461 = vmatprep.subr.mxu0 0.0
      %462 = vmatpush1.msra.mxu0 0.0
      %463 = vmatprep.subr.mxu0 0.0
      %464 = vmatpush1.msra.mxu0 0.0
      %465 = vmatprep.subr.mxu0 0.0
      %466 = vmatpush1.msra.mxu0 0.0
      %467 = vmatprep.subr.mxu0 0.0
      %468 = vmatpush1.msra.mxu0 0.0
      %469 = vmatprep.subr.mxu0 0.0
      %470 = vmatpush1.msra.mxu0 0.0
      %471 = vmatprep.subr.mxu0 0.0
      %472 = vmatpush1.msra.mxu0 0.0
      %473 = vmatprep.subr.mxu0 0.0
      %474 = vmatpush1.msra.mxu0 0.0
      %475 = vmatprep.subr.mxu0 0.0
      %476 = vmatpush1.msra.mxu0 0.0
      %477 = vmatprep.subr.mxu0 0.0
      %478 = vmatpush1.msra.mxu0 0.0
      %479 = vmatprep.subr.mxu0 0.0
      %480 = vmatpush1.msra.mxu0 0.0
      %481 = vmatprep.subr.mxu0 0.0
      %482 = vmatpush1.msra.mxu0 0.0
      %483 = vmatprep.subr.mxu0 0.0
      %484 = vmatpush1.msra.mxu0 0.0
      %485 = vmatprep.subr.mxu0 0.0
      %486 = vmatpush1.msra.mxu0 0.0
      %487 = vmatprep.subr.mxu0 0.0
      %488 = vmatpush1.msra.mxu0 0.0
      %489 = vmatprep.subr.mxu0 0.0
      %490 = vmatpush1.msra.mxu0 0.0
      %491 = vmatprep.subr.mxu0 0.0
      %492 = vmatpush1.msra.mxu0 0.0
      %493 = vmatprep.subr.mxu0 0.0
      %494 = vmatpush1.msra.mxu0 0.0
      %495 = vmatprep.subr.mxu0 0.0
      %496 = vmatpush1.msra.mxu0 0.0
      %497 = vmatprep.subr.mxu0 0.0
      %498 = vmatpush1.msra.mxu0 0.0
      %499 = vmatprep.mubr.f32.mxu0 0.0
      %500 = vmatmul.mubr.f32.gmra.mrb[0].mxu0 %v301
      %v501 = vpop.f32.mrb[0].mxu0
      %v502 = vadd.f32 0.0, %v501
      %v503 = vpop.f32.mrb[0].mxu0
      %504 = vmatprep.mubr.f32.mxu0 0.0
      %505 = vmatmul.mubr.f32.gmra.mrb[0].mxu0 %v304
      %v506 = vpop.f32.mrb[0].mxu0
      %v507 = vadd.f32 0.0, %v506
      %v508 = vpop.f32.mrb[0].mxu0
      %509 = vmatprep.mubr.f32.mxu0 0.0
      %510 = vmatmul.mubr.f32.gmra.mrb[0].mxu0 %v307
      %v511 = vpop.f32.mrb[0].mxu0
      %v512 = vadd.f32 0.0, %v511
      %v513 = vpop.f32.mrb[0].mxu0
      %514 = vmatprep.mubr.f32.mxu0 0.0
      %515 = vmatmul.mubr.f32.gmra.mrb[0].mxu0 %v310
      %v516 = vpop.f32.mrb[0].mxu0
      %v517 = vadd.f32 0.0, %v516
      %v518 = vpop.f32.mrb[0].mxu0
      %519 = vmatprep.mubr.f32.mxu0 0.0
      %520 = vmatmul.mubr.f32.gmra.mrb[0].mxu0 %v313
      %v521 = vpop.f32.mrb[0].mxu0
      %v522 = vadd.f32 0.0, %v521
      %v523 = vpop.f32.mrb[0].mxu0
      %524 = vmatprep.mubr.f32.mxu0 0.0
      %525 = vmatmul.mubr.f32.gmra.mrb[0].mxu0 %v316
      %v526 = vpop.f32.mrb[0].mxu0
      %v527 = vadd.f32 0.0, %v526
      %v528 = vpop.f32.mrb[0].mxu0
      %529 = vmatprep.mubr.f32.mxu0 0.0
      %530 = vmatmul.mubr.f32.gmra.mrb[0].mxu0 %v319
      %v531 = vpop.f32.mrb[0].mxu0
      %v532 = vadd.f32 0.0, %v531
      %v533 = vpop.f32.mrb[0].mxu0
      %534 = vmatprep.mubr.f32.mxu0 0.0
      %535 = vmatmul.mubr.f32.gmra.mrb[0].mxu0 %v322
      %v536 = vpop.f32.mrb[0].mxu0
      %v537 = vadd.f32 0.0, %v536
      %v538 = vpop.f32.mrb[0].mxu0
      %539 = vmatprep.mubr.f32.mxu0 0.0
      %540 = vmatmul.mubr.f32.gmra.mrb[0].mxu0 %v325
      %v541 = vpop.f32.mrb[0].mxu0
      %v542 = vadd.f32 0.0, %v541
      %v543 = vpop.f32.mrb[0].mxu0
      %544 = vmatprep.mubr.f32.mxu0 0.0
      %545 = vmatmul.mubr.f32.gmra.mrb[0].mxu0 %v328
      %v546 = vpop.f32.mrb[0].mxu0
      %v547 = vadd.f32 0.0, %v546
      %v548 = vpop.f32.mrb[0].mxu0
      %549 = vmatprep.mubr.f32.mxu0 0.0
      %550 = vmatmul.mubr.f32.gmra.mrb[0].mxu0 %v331
      %v551 = vpop.f32.mrb[0].mxu0
      %v552 = vadd.f32 0.0, %v551
      %v553 = vpop.f32.mrb[0].mxu0
      %554 = vmatprep.mubr.f32.mxu0 0.0
      %555 = vmatmul.mubr.f32.gmra.mrb[0].mxu0 %v334
      %v556 = vpop.f32.mrb[0].mxu0
      %v557 = vadd.f32 0.0, %v556
      %v558 = vpop.f32.mrb[0].mxu0
      %559 = vmatprep.mubr.f32.mxu0 0.0
      %560 = vmatmul.mubr.f32.gmra.mrb[0].mxu0 %v337
      %v561 = vpop.f32.mrb[0].mxu0
      %v562 = vadd.f32 0.0, %v561
      %v563 = vpop.f32.mrb[0].mxu0
      %564 = vmatprep.mubr.f32.mxu0 0.0
      %565 = vmatmul.mubr.f32.gmra.mrb[0].mxu0 %v340
      %v566 = vpop.f32.mrb[0].mxu0
      %v567 = vadd.f32 0.0, %v566
      %v568 = vpop.f32.mrb[0].mxu0
      %569 = vmatprep.mubr.f32.mxu0 0.0
      %570 = vmatmul.mubr.f32.gmra.mrb[0].mxu0 %v343
      %v571 = vpop.f32.mrb[0].mxu0
      %v572 = vadd.f32 0.0, %v571
      %v573 = vpop.f32.mrb[0].mxu0
      %574 = vmatprep.mubr.f32.mxu0 0.0
      %575 = vmatmul.mubr.f32.gmra.mrb[0].mxu0 %v346
      %v576 = vpop.f32.mrb[0].mxu0
      %v577 = vadd.f32 0.0, %v576
      %v578 = vpop.f32.mrb[0].mxu0
      %579 = vmatprep.mubr.f32.mxu0 0.0
      %580 = vmatmul.mubr.f32.gmra.mrb[0].mxu0 %v349
      %v581 = vpop.f32.mrb[0].mxu0
      %v582 = vadd.f32 0.0, %v581
      %v583 = vpop.f32.mrb[0].mxu0
      %584 = vmatprep.mubr.f32.mxu0 0.0
      %585 = vmatmul.mubr.f32.gmra.mrb[0].mxu0 %v352
      %v586 = vpop.f32.mrb[0].mxu0
      %v587 = vadd.f32 0.0, %v586
      %v588 = vpop.f32.mrb[0].mxu0
      %589 = vmatprep.mubr.f32.mxu0 0.0
      %590 = vmatmul.mubr.f32.gmra.mrb[0].mxu0 %v355
      %v591 = vpop.f32.mrb[0].mxu0
      %v592 = vadd.f32 0.0, %v591
      %v593 = vpop.f32.mrb[0].mxu0
      %594 = vmatprep.mubr.f32.mxu0 0.0
      %595 = vmatmul.mubr.f32.gmra.mrb[0].mxu0 %v358
      %v596 = vpop.f32.mrb[0].mxu0
      %v597 = vadd.f32 0.0, %v596
      %v598 = vpop.f32.mrb[0].mxu0
      %599 = vmatprep.mubr.f32.mxu0 0.0
      %600 = vmatmul.mubr.f32.gmra.mrb[0].mxu0 %v361
      %v601 = vpop.f32.mrb[0].mxu0
      %v602 = vadd.f32 0.0, %v601
      %v603 = vpop.f32.mrb[0].mxu0
      %604 = vmatprep.mubr.f32.mxu0 0.0
      %605 = vmatmul.mubr.f32.gmra.mrb[0].mxu0 %v364
      %v606 = vpop.f32.mrb[0].mxu0
      %v607 = vadd.f32 0.0, %v606
      %v608 = vpop.f32.mrb[0].mxu0
      %609 = vmatprep.mubr.f32.mxu0 0.0
      %610 = vmatmul.mubr.f32.gmra.mrb[0].mxu0 %v367
      %v611 = vpop.f32.mrb[0].mxu0
      %v612 = vadd.f32 0.0, %v611
      %v613 = vpop.f32.mrb[0].mxu0
      %614 = vmatprep.mubr.f32.mxu0 0.0
      %615 = vmatmul.mubr.f32.gmra.mrb[0].mxu0 %v370
      %v616 = vpop.f32.mrb[0].mxu0
      %v617 = vadd.f32 0.0, %v616
      %v618 = vpop.f32.mrb[0].mxu0
      %619 = vmatprep.mubr.f32.mxu0 0.0
      %620 = vmatmul.mubr.f32.gmra.mrb[0].mxu0 %v373
      %v621 = vpop.f32.mrb[0].mxu0
      %v622 = vadd.f32 0.0, %v621
      %v623 = vpop.f32.mrb[0].mxu0
      %624 = vmatprep.mubr.f32.mxu0 0.0
      %625 = vmatmul.mubr.f32.gmra.mrb[0].mxu0 %v376
      %v626 = vpop.f32.mrb[0].mxu0
      %v627 = vadd.f32 0.0, %v626
      %v628 = vpop.f32.mrb[0].mxu0
      %629 = vmatprep.mubr.f32.mxu0 0.0
      %630 = vmatmul.mubr.f32.gmra.mrb[0].mxu0 %v379
      %v631 = vpop.f32.mrb[0].mxu0
      %v632 = vadd.f32 0.0, %v631
      %v633 = vpop.f32.mrb[0].mxu0
      %634 = vmatprep.mubr.f32.mxu0 0.0
      %635 = vmatmul.mubr.f32.gmra.mrb[0].mxu0 %v382
      %v636 = vpop.f32.mrb[0].mxu0
      %v637 = vadd.f32 0.0, %v636
      %v638 = vpop.f32.mrb[0].mxu0
      %639 = vmatprep.mubr.f32.mxu0 0.0
      %640 = vmatmul.mubr.f32.gmra.mrb[0].mxu0 %v385
      %v641 = vpop.f32.mrb[0].mxu0
      %v642 = vadd.f32 0.0, %v641
      %v643 = vpop.f32.mrb[0].mxu0
      %644 = vmatprep.mubr.f32.mxu0 0.0
      %645 = vmatmul.mubr.f32.gmra.mrb[0].mxu0 %v388
      %v646 = vpop.f32.mrb[0].mxu0
      %v647 = vadd.f32 0.0, %v646
      %v648 = vpop.f32.mrb[0].mxu0
      %649 = vmatprep.mubr.f32.mxu0 0.0
      %650 = vmatmul.mubr.f32.gmra.mrb[0].mxu0 %v391
      %v651 = vpop.f32.mrb[0].mxu0
      %v652 = vadd.f32 0.0, %v651
      %v653 = vpop.f32.mrb[0].mxu0
      %654 = vmatprep.mubr.f32.mxu0 0.0
      %655 = vmatmul.mubr.f32.gmra.mrb[0].mxu0 %v394
      %v656 = vpop.f32.mrb[0].mxu0
      %v657 = vadd.f32 0.0, %v656
      %v658 = vpop.f32.mrb[0].mxu0
      %659 = vmatprep.mubr.f32.mxu0 0.0
      %660 = vmatmul.mubr.f32.gmra.mrb[0].mxu0 %v397
      %v661 = vpop.f32.mrb[0].mxu0
      %v662 = vadd.f32 0.0, %v661
      %v663 = vpop.f32.mrb[0].mxu0
      %664 = vmatprep.mubr.f32.mxu0 0.0
      %665 = vmatmul.mubr.f32.gmra.mrb[0].mxu0 %v400
      %v666 = vpop.f32.mrb[0].mxu0
      %v667 = vadd.f32 0.0, %v666
      %v668 = vpop.f32.mrb[0].mxu0
      %669 = vmatprep.mubr.f32.mxu0 0.0
      %670 = vmatmul.mubr.f32.gmra.mrb[0].mxu0 %v403
      %v671 = vpop.f32.mrb[0].mxu0
      %v672 = vadd.f32 0.0, %v671
      %v673 = vpop.f32.mrb[0].mxu0
      %674 = vmatprep.mubr.f32.mxu0 0.0
      %675 = vmatmul.mubr.f32.gmra.mrb[0].mxu0 %v406
      %v676 = vpop.f32.mrb[0].mxu0
      %v677 = vadd.f32 0.0, %v676
      %v678 = vpop.f32.mrb[0].mxu0
      %679 = vmatprep.mubr.f32.mxu0 0.0
      %680 = vmatmul.mubr.f32.gmra.mrb[0].mxu0 %v409
      %v681 = vpop.f32.mrb[0].mxu0
      %v682 = vadd.f32 0.0, %v681
      %v683 = vpop.f32.mrb[0].mxu0
      %684 = vmatprep.mubr.f32.mxu0 0.0
      %685 = vmatmul.mubr.f32.gmra.mrb[0].mxu0 %v412
      %v686 = vpop.f32.mrb[0].mxu0
      %v687 = vadd.f32 0.0, %v686
      %v688 = vpop.f32.mrb[0].mxu0
      %689 = vmatprep.mubr.f32.mxu0 0.0
      %690 = vmatmul.mubr.f32.gmra.mrb[0].mxu0 %v415
      %v691 = vpop.f32.mrb[0].mxu0
      %v692 = vadd.f32 0.0, %v691
      %v693 = vpop.f32.mrb[0].mxu0
      %694 = vmatprep.mubr.f32.mxu0 0.0
      %695 = vmatmul.mubr.f32.gmra.mrb[0].mxu0 %v418
      %v696 = vpop.f32.mrb[0].mxu0
      %v697 = vadd.f32 0.0, %v696
      %v698 = vpop.f32.mrb[0].mxu0
      %699 = vmatprep.mubr.f32.mxu0 0.0
      %700 = vmatmul.mubr.f32.gmra.mrb[0].mxu0 %v421
      %v701 = vpop.f32.mrb[0].mxu0
      %v702 = vadd.f32 0.0, %v701
      %v703 = vpop.f32.mrb[0].mxu0
      %704 = vmatprep.mubr.f32.mxu0 0.0
      %705 = vmatmul.mubr.f32.gmra.mrb[0].mxu0 %v424
      %v706 = vpop.f32.mrb[0].mxu0
      %v707 = vadd.f32 0.0, %v706
      %v708 = vpop.f32.mrb[0].mxu0
      %709 = vmatprep.mubr.f32.mxu0 0.0
      %710 = vmatmul.mubr.f32.gmra.mrb[0].mxu0 %v427
      %v711 = vpop.f32.mrb[0].mxu0
      %v712 = vadd.f32 0.0, %v711
      %v713 = vpop.f32.mrb[0].mxu0
      %714 = vmatprep.mubr.f32.mxu0 0.0
      %715 = vmatmul.mubr.f32.gmra.mrb[0].mxu0 %v430
      %v716 = vpop.f32.mrb[0].mxu0
      %v717 = vadd.f32 0.0, %v716
      %v718 = vpop.f32.mrb[0].mxu0
      %719 = vmatprep.mubr.f32.mxu0 0.0
      %720 = vmatmul.mubr.f32.gmra.mrb[0].mxu0 %v433
      %v721 = vpop.f32.mrb[0].mxu0
      %v722 = vadd.f32 0.0, %v721
      %v723 = vpop.f32.mrb[0].mxu0
      %724 = vdwg.mxu0
      %vm725 = vcmask 31744
      %726 = vst.msk [vmem:[#allocation2] sm:$0xff] %vm725, %v502
      %727 = vst.msk [vmem:[#allocation2 + $0x8] sm:$0xff] %vm725, %v507
      %728 = vst.msk [vmem:[#allocation2 + $0x10] sm:$0xff] %vm725, %v512
      %729 = vst.msk [vmem:[#allocation2 + $0x18] sm:$0xff] %vm725, %v517
      %730 = vst.msk [vmem:[#allocation2 + $0x20] sm:$0xff] %vm725, %v522
      %731 = vst.msk [vmem:[#allocation2 + $0x28] sm:$0xff] %vm725, %v527
      %732 = vst.msk [vmem:[#allocation2 + $0x30] sm:$0xff] %vm725, %v532
      %733 = vst.msk [vmem:[#allocation2 + $0x38] sm:$0xff] %vm725, %v537
      %734 = vst.msk [vmem:[#allocation2 + $0x40] sm:$0xff] %vm725, %v542
      %735 = vst.msk [vmem:[#allocation2 + $0x48] sm:$0xff] %vm725, %v547
      %736 = vst.msk [vmem:[#allocation2 + $0x50] sm:$0xff] %vm725, %v552
      %737 = vst.msk [vmem:[#allocation2 + $0x58] sm:$0xff] %vm725, %v557
      %738 = vst.msk [vmem:[#allocation2 + $0x60] sm:$0xff] %vm725, %v562
      %739 = vst.msk [vmem:[#allocation2 + $0x68] sm:$0xff] %vm725, %v567
      %740 = vst.msk [vmem:[#allocation2 + $0x70] sm:$0xff] %vm725, %v572
      %741 = vst.msk [vmem:[#allocation2 + $0x78] sm:$0xff] %vm725, %v577
      %742 = vst.msk [vmem:[#allocation2 + $0x80] sm:$0xff] %vm725, %v582
      %743 = vst.msk [vmem:[#allocation2 + $0x88] sm:$0xff] %vm725, %v587
      %744 = vst.msk [vmem:[#allocation2 + $0x90] sm:$0xff] %vm725, %v592
      %745 = vst.msk [vmem:[#allocation2 + $0x98] sm:$0xff] %vm725, %v597
      %746 = vst.msk [vmem:[#allocation2 + $0xa0] sm:$0xff] %vm725, %v602
      %747 = vst.msk [vmem:[#allocation2 + $0xa8] sm:$0xff] %vm725, %v607
      %748 = vst.msk [vmem:[#allocation2 + $0xb0] sm:$0xff] %vm725, %v612
      %749 = vst.msk [vmem:[#allocation2 + $0xb8] sm:$0xff] %vm725, %v617
      %750 = vst.msk [vmem:[#allocation2 + $0xc0] sm:$0xff] %vm725, %v622
      %751 = vst.msk [vmem:[#allocation2 + $0xc8] sm:$0xff] %vm725, %v627
      %752 = vst.msk [vmem:[#allocation2 + $0xd0] sm:$0xff] %vm725, %v632
      %753 = vst.msk [vmem:[#allocation2 + $0xd8] sm:$0xff] %vm725, %v637
      %754 = vst.msk [vmem:[#allocation2 + $0xe0] sm:$0xff] %vm725, %v642
      %755 = vst.msk [vmem:[#allocation2 + $0xe8] sm:$0xff] %vm725, %v647
      %756 = vst.msk [vmem:[#allocation2 + $0xf0] sm:$0xff] %vm725, %v652
      %757 = vst.msk [vmem:[#allocation2 + $0xf8] sm:$0xff] %vm725, %v657
      %758 = vst.msk [vmem:[#allocation2 + $0x100] sm:$0xff] %vm725, %v662
      %759 = vst.msk [vmem:[#allocation2 + $0x108] sm:$0xff] %vm725, %v667
      %760 = vst.msk [vmem:[#allocation2 + $0x110] sm:$0xff] %vm725, %v672
      %761 = vst.msk [vmem:[#allocation2 + $0x118] sm:$0xff] %vm725, %v677
      %762 = vst.msk [vmem:[#allocation2 + $0x120] sm:$0xff] %vm725, %v682
      %763 = vst.msk [vmem:[#allocation2 + $0x128] sm:$0xff] %vm725, %v687
      %764 = vst.msk [vmem:[#allocation2 + $0x130] sm:$0xff] %vm725, %v692
      %765 = vst.msk [vmem:[#allocation2 + $0x138] sm:$0xff] %vm725, %v697
      %766 = vst.msk [vmem:[#allocation2 + $0x140] sm:$0xff] %vm725, %v702
      %767 = vst.msk [vmem:[#allocation2 + $0x148] sm:$0xff] %vm725, %v707
      %768 = vst.msk [vmem:[#allocation2 + $0x150] sm:$0xff] %vm725, %v712
      %769 = vst.msk [vmem:[#allocation2 + $0x158] sm:$0xff] %vm725, %v717
      %770 = vst.msk [vmem:[#allocation2 + $0x160] sm:$0xff] %vm725, %v722
      %v771 = vld [vmem:[#allocation2] sm:$0xff]
      %v772 = vld [vmem:[#allocation2 + $0x8] sm:$0xff]
      %v773 = vld [vmem:[#allocation2 + $0x10] sm:$0xff]
      %v774 = vld [vmem:[#allocation2 + $0x18] sm:$0xff]
      %v775 = vld [vmem:[#allocation2 + $0x20] sm:$0xff]
      %v776 = vld [vmem:[#allocation2 + $0x28] sm:$0xff]
      %v777 = vld [vmem:[#allocation2 + $0x30] sm:$0xff]
      %v778 = vld [vmem:[#allocation2 + $0x38] sm:$0xff]
      %v779 = vld [vmem:[#allocation2 + $0x40] sm:$0xff]
      %v780 = vld [vmem:[#allocation2 + $0x48] sm:$0xff]
      %v781 = vld [vmem:[#allocation2 + $0x50] sm:$0xff]
      %v782 = vld [vmem:[#allocation2 + $0x58] sm:$0xff]
      %v783 = vld [vmem:[#allocation2 + $0x60] sm:$0xff]
      %v784 = vld [vmem:[#allocation2 + $0x68] sm:$0xff]
      %v785 = vld [vmem:[#allocation2 + $0x70] sm:$0xff]
      %v786 = vld [vmem:[#allocation2 + $0x78] sm:$0xff]
      %v787 = vld [vmem:[#allocation2 + $0x80] sm:$0xff]
      %v788 = vld [vmem:[#allocation2 + $0x88] sm:$0xff]
      %v789 = vld [vmem:[#allocation2 + $0x90] sm:$0xff]
      %v790 = vld [vmem:[#allocation2 + $0x98] sm:$0xff]
      %v791 = vld [vmem:[#allocation2 + $0xa0] sm:$0xff]
      %v792 = vld [vmem:[#allocation2 + $0xa8] sm:$0xff]
      %v793 = vld [vmem:[#allocation2 + $0xb0] sm:$0xff]
      %v794 = vld [vmem:[#allocation2 + $0xb8] sm:$0xff]
      %v795 = vld [vmem:[#allocation2 + $0xc0] sm:$0xff]
      %v796 = vld [vmem:[#allocation2 + $0xc8] sm:$0xff]
      %v797 = vld [vmem:[#allocation2 + $0xd0] sm:$0xff]
      %v798 = vld [vmem:[#allocation2 + $0xd8] sm:$0xff]
      %v799 = vld [vmem:[#allocation2 + $0xe0] sm:$0xff]
      %v800 = vld [vmem:[#allocation2 + $0xe8] sm:$0xff]
      %v801 = vld [vmem:[#allocation2 + $0xf0] sm:$0xff]
      %v802 = vld [vmem:[#allocation2 + $0xf8] sm:$0xff]
      %v803 = vld [vmem:[#allocation2 + $0x100] sm:$0xff]
      %v804 = vld [vmem:[#allocation2 + $0x108] sm:$0xff]
      %v805 = vld [vmem:[#allocation2 + $0x110] sm:$0xff]
      %v806 = vld [vmem:[#allocation2 + $0x118] sm:$0xff]
      %v807 = vld [vmem:[#allocation2 + $0x120] sm:$0xff]
      %v808 = vld [vmem:[#allocation2 + $0x128] sm:$0xff]
      %v809 = vld [vmem:[#allocation2 + $0x130] sm:$0xff]
      %v810 = vld [vmem:[#allocation2 + $0x138] sm:$0xff]
      %v811 = vld [vmem:[#allocation2 + $0x140] sm:$0xff]
      %v812 = vld [vmem:[#allocation2 + $0x148] sm:$0xff]
      %v813 = vld [vmem:[#allocation2 + $0x150] sm:$0xff]
      %v814 = vld [vmem:[#allocation2 + $0x158] sm:$0xff]
      %815 = vst.msk [vmem:[#allocation3] sm:$0xff] %vm725, %v771
      %816 = vst.msk [vmem:[#allocation3 + $0x8] sm:$0xff] %vm725, %v772
      %817 = vst.msk [vmem:[#allocation3 + $0x10] sm:$0xff] %vm725, %v773
      %818 = vst.msk [vmem:[#allocation3 + $0x18] sm:$0xff] %vm725, %v774
      %819 = vst.msk [vmem:[#allocation3 + $0x20] sm:$0xff] %vm725, %v775
      %820 = vst.msk [vmem:[#allocation3 + $0x28] sm:$0xff] %vm725, %v776
      %821 = vst.msk [vmem:[#allocation3 + $0x30] sm:$0xff] %vm725, %v777
      %822 = vst.msk [vmem:[#allocation3 + $0x38] sm:$0xff] %vm725, %v778
      %823 = vst.msk [vmem:[#allocation3 + $0x40] sm:$0xff] %vm725, %v779
      %824 = vst.msk [vmem:[#allocation3 + $0x48] sm:$0xff] %vm725, %v780
      %825 = vst.msk [vmem:[#allocation3 + $0x50] sm:$0xff] %vm725, %v781
      %826 = vst.msk [vmem:[#allocation3 + $0x58] sm:$0xff] %vm725, %v782
      %827 = vst.msk [vmem:[#allocation3 + $0x60] sm:$0xff] %vm725, %v783
      %828 = vst.msk [vmem:[#allocation3 + $0x68] sm:$0xff] %vm725, %v784
      %829 = vst.msk [vmem:[#allocation3 + $0x70] sm:$0xff] %vm725, %v785
      %830 = vst.msk [vmem:[#allocation3 + $0x78] sm:$0xff] %vm725, %v786
      %831 = vst.msk [vmem:[#allocation3 + $0x80] sm:$0xff] %vm725, %v787
      %832 = vst.msk [vmem:[#allocation3 + $0x88] sm:$0xff] %vm725, %v788
      %833 = vst.msk [vmem:[#allocation3 + $0x90] sm:$0xff] %vm725, %v789
      %834 = vst.msk [vmem:[#allocation3 + $0x98] sm:$0xff] %vm725, %v790
      %835 = vst.msk [vmem:[#allocation3 + $0xa0] sm:$0xff] %vm725, %v791
      %836 = vst.msk [vmem:[#allocation3 + $0xa8] sm:$0xff] %vm725, %v792
      %837 = vst.msk [vmem:[#allocation3 + $0xb0] sm:$0xff] %vm725, %v793
      %838 = vst.msk [vmem:[#allocation3 + $0xb8] sm:$0xff] %vm725, %v794
      %839 = vst.msk [vmem:[#allocation3 + $0xc0] sm:$0xff] %vm725, %v795
      %840 = vst.msk [vmem:[#allocation3 + $0xc8] sm:$0xff] %vm725, %v796
      %841 = vst.msk [vmem:[#allocation3 + $0xd0] sm:$0xff] %vm725, %v797
      %842 = vst.msk [vmem:[#allocation3 + $0xd8] sm:$0xff] %vm725, %v798
      %843 = vst.msk [vmem:[#allocation3 + $0xe0] sm:$0xff] %vm725, %v799
      %844 = vst.msk [vmem:[#allocation3 + $0xe8] sm:$0xff] %vm725, %v800
      %845 = vst.msk [vmem:[#allocation3 + $0xf0] sm:$0xff] %vm725, %v801
      %846 = vst.msk [vmem:[#allocation3 + $0xf8] sm:$0xff] %vm725, %v802
      %847 = vst.msk [vmem:[#allocation3 + $0x100] sm:$0xff] %vm725, %v803
      %848 = vst.msk [vmem:[#allocation3 + $0x108] sm:$0xff] %vm725, %v804
      %849 = vst.msk [vmem:[#allocation3 + $0x110] sm:$0xff] %vm725, %v805
      %850 = vst.msk [vmem:[#allocation3 + $0x118] sm:$0xff] %vm725, %v806
      %851 = vst.msk [vmem:[#allocation3 + $0x120] sm:$0xff] %vm725, %v807
      %852 = vst.msk [vmem:[#allocation3 + $0x128] sm:$0xff] %vm725, %v808
      %853 = vst.msk [vmem:[#allocation3 + $0x130] sm:$0xff] %vm725, %v809
      %854 = vst.msk [vmem:[#allocation3 + $0x138] sm:$0xff] %vm725, %v810
      %855 = vst.msk [vmem:[#allocation3 + $0x140] sm:$0xff] %vm725, %v811
      %856 = vst.msk [vmem:[#allocation3 + $0x148] sm:$0xff] %vm725, %v812
      %857 = vst.msk [vmem:[#allocation3 + $0x150] sm:$0xff] %vm725, %v813
      %858 = vst.msk [vmem:[#allocation3 + $0x158] sm:$0xff] %vm725, %v814
      %v859 = vld [vmem:[#allocation2 + $0x1] sm:$0xff]
      %v860 = vld [vmem:[#allocation2 + $0x9] sm:$0xff]
      %v861 = vld [vmem:[#allocation2 + $0x11] sm:$0xff]
      %v862 = vld [vmem:[#allocation2 + $0x19] sm:$0xff]
      %v863 = vld [vmem:[#allocation2 + $0x21] sm:$0xff]
      %v864 = vld [vmem:[#allocation2 + $0x29] sm:$0xff]
      %v865 = vld [vmem:[#allocation2 + $0x31] sm:$0xff]
      %v866 = vld [vmem:[#allocation2 + $0x39] sm:$0xff]
      %v867 = vld [vmem:[#allocation2 + $0x41] sm:$0xff]
      %v868 = vld [vmem:[#allocation2 + $0x49] sm:$0xff]
      %v869 = vld [vmem:[#allocation2 + $0x51] sm:$0xff]
      %v870 = vld [vmem:[#allocation2 + $0x59] sm:$0xff]
      %v871 = vld [vmem:[#allocation2 + $0x61] sm:$0xff]
      %v872 = vld [vmem:[#allocation2 + $0x69] sm:$0xff]
      %v873 = vld [vmem:[#allocation2 + $0x71] sm:$0xff]
      %v874 = vld [vmem:[#allocation2 + $0x79] sm:$0xff]
      %v875 = vld [vmem:[#allocation2 + $0x81] sm:$0xff]
      %v876 = vld [vmem:[#allocation2 + $0x89] sm:$0xff]
      %v877 = vld [vmem:[#allocation2 + $0x91] sm:$0xff]
      %v878 = vld [vmem:[#allocation2 + $0x99] sm:$0xff]
      %v879 = vld [vmem:[#allocation2 + $0xa1] sm:$0xff]
      %v880 = vld [vmem:[#allocation2 + $0xa9] sm:$0xff]
      %v881 = vld [vmem:[#allocation2 + $0xb1] sm:$0xff]
      %v882 = vld [vmem:[#allocation2 + $0xb9] sm:$0xff]
      %v883 = vld [vmem:[#allocation2 + $0xc1] sm:$0xff]
      %v884 = vld [vmem:[#allocation2 + $0xc9] sm:$0xff]
      %v885 = vld [vmem:[#allocation2 + $0xd1] sm:$0xff]
      %v886 = vld [vmem:[#allocation2 + $0xd9] sm:$0xff]
      %v887 = vld [vmem:[#allocation2 + $0xe1] sm:$0xff]
      %v888 = vld [vmem:[#allocation2 + $0xe9] sm:$0xff]
      %v889 = vld [vmem:[#allocation2 + $0xf1] sm:$0xff]
      %v890 = vld [vmem:[#allocation2 + $0xf9] sm:$0xff]
      %v891 = vld [vmem:[#allocation2 + $0x101] sm:$0xff]
      %v892 = vld [vmem:[#allocation2 + $0x109] sm:$0xff]
      %v893 = vld [vmem:[#allocation2 + $0x111] sm:$0xff]
      %v894 = vld [vmem:[#allocation2 + $0x119] sm:$0xff]
      %v895 = vld [vmem:[#allocation2 + $0x121] sm:$0xff]
      %v896 = vld [vmem:[#allocation2 + $0x129] sm:$0xff]
      %v897 = vld [vmem:[#allocation2 + $0x131] sm:$0xff]
      %v898 = vld [vmem:[#allocation2 + $0x139] sm:$0xff]
      %v899 = vld [vmem:[#allocation2 + $0x141] sm:$0xff]
      %v900 = vld [vmem:[#allocation2 + $0x149] sm:$0xff]
      %v901 = vld [vmem:[#allocation2 + $0x151] sm:$0xff]
      %v902 = vld [vmem:[#allocation2 + $0x159] sm:$0xff]
      %947 = vrot.lane.b32.xlu0 %v859, 4
      %v948 = vpop.permute.xlu0 %947
      %949 = vrot.lane.b32.xlu0 %v860, 4
      %v950 = vpop.permute.xlu0 %949
      %951 = vrot.lane.b32.xlu0 %v861, 4
      %v952 = vpop.permute.xlu0 %951
      %953 = vrot.lane.b32.xlu0 %v862, 4
      %v954 = vpop.permute.xlu0 %953
      %955 = vrot.lane.b32.xlu0 %v863, 4
      %v956 = vpop.permute.xlu0 %955
      %957 = vrot.lane.b32.xlu0 %v864, 4
      %v958 = vpop.permute.xlu0 %957
      %959 = vrot.lane.b32.xlu0 %v865, 4
      %v960 = vpop.permute.xlu0 %959
      %961 = vrot.lane.b32.xlu0 %v866, 4
      %v962 = vpop.permute.xlu0 %961
      %963 = vrot.lane.b32.xlu0 %v867, 4
      %v964 = vpop.permute.xlu0 %963
      %965 = vrot.lane.b32.xlu0 %v868, 4
      %v966 = vpop.permute.xlu0 %965
      %967 = vrot.lane.b32.xlu0 %v869, 4
      %v968 = vpop.permute.xlu0 %967
      %969 = vrot.lane.b32.xlu0 %v870, 4
      %v970 = vpop.permute.xlu0 %969
      %971 = vrot.lane.b32.xlu0 %v871, 4
      %v972 = vpop.permute.xlu0 %971
      %973 = vrot.lane.b32.xlu0 %v872, 4
      %v974 = vpop.permute.xlu0 %973
      %975 = vrot.lane.b32.xlu0 %v873, 4
      %v976 = vpop.permute.xlu0 %975
      %977 = vrot.lane.b32.xlu0 %v874, 4
      %v978 = vpop.permute.xlu0 %977
      %979 = vrot.lane.b32.xlu0 %v875, 4
      %v980 = vpop.permute.xlu0 %979
      %981 = vrot.lane.b32.xlu0 %v876, 4
      %v982 = vpop.permute.xlu0 %981
      %983 = vrot.lane.b32.xlu0 %v877, 4
      %v984 = vpop.permute.xlu0 %983
      %985 = vrot.lane.b32.xlu0 %v878, 4
      %v986 = vpop.permute.xlu0 %985
      %987 = vrot.lane.b32.xlu0 %v879, 4
      %v988 = vpop.permute.xlu0 %987
      %989 = vrot.lane.b32.xlu0 %v880, 4
      %v990 = vpop.permute.xlu0 %989
      %991 = vrot.lane.b32.xlu0 %v881, 4
      %v992 = vpop.permute.xlu0 %991
      %993 = vrot.lane.b32.xlu0 %v882, 4
      %v994 = vpop.permute.xlu0 %993
      %995 = vrot.lane.b32.xlu0 %v883, 4
      %v996 = vpop.permute.xlu0 %995
      %997 = vrot.lane.b32.xlu0 %v884, 4
      %v998 = vpop.permute.xlu0 %997
      %999 = vrot.lane.b32.xlu0 %v885, 4
      %v1000 = vpop.permute.xlu0 %999
      %1001 = vrot.lane.b32.xlu0 %v886, 4
      %v1002 = vpop.permute.xlu0 %1001
      %1003 = vrot.lane.b32.xlu0 %v887, 4
      %v1004 = vpop.permute.xlu0 %1003
      %1005 = vrot.lane.b32.xlu0 %v888, 4
      %v1006 = vpop.permute.xlu0 %1005
      %1007 = vrot.lane.b32.xlu0 %v889, 4
      %v1008 = vpop.permute.xlu0 %1007
      %1009 = vrot.lane.b32.xlu0 %v890, 4
      %v1010 = vpop.permute.xlu0 %1009
      %1011 = vrot.lane.b32.xlu0 %v891, 4
      %v1012 = vpop.permute.xlu0 %1011
      %1013 = vrot.lane.b32.xlu0 %v892, 4
      %v1014 = vpop.permute.xlu0 %1013
      %1015 = vrot.lane.b32.xlu0 %v893, 4
      %v1016 = vpop.permute.xlu0 %1015
      %1017 = vrot.lane.b32.xlu0 %v894, 4
      %v1018 = vpop.permute.xlu0 %1017
      %1019 = vrot.lane.b32.xlu0 %v895, 4
      %v1020 = vpop.permute.xlu0 %1019
      %1021 = vrot.lane.b32.xlu0 %v896, 4
      %v1022 = vpop.permute.xlu0 %1021
      %1023 = vrot.lane.b32.xlu0 %v897, 4
      %v1024 = vpop.permute.xlu0 %1023
      %1025 = vrot.lane.b32.xlu0 %v898, 4
      %v1026 = vpop.permute.xlu0 %1025
      %1027 = vrot.lane.b32.xlu0 %v899, 4
      %v1028 = vpop.permute.xlu0 %1027
      %1029 = vrot.lane.b32.xlu0 %v900, 4
      %v1030 = vpop.permute.xlu0 %1029
      %1031 = vrot.lane.b32.xlu0 %v901, 4
      %v1032 = vpop.permute.xlu0 %1031
      %1033 = vrot.lane.b32.xlu0 %v902, 4
      %v1034 = vpop.permute.xlu0 %1033
      %vm1079 = vcmask 64544
      %1080 = vst.msk [vmem:[#allocation3] sm:$0xff] %vm1079, %v948
      %1081 = vst.msk [vmem:[#allocation3 + $0x8] sm:$0xff] %vm1079, %v950
      %1082 = vst.msk [vmem:[#allocation3 + $0x10] sm:$0xff] %vm1079, %v952
      %1083 = vst.msk [vmem:[#allocation3 + $0x18] sm:$0xff] %vm1079, %v954
      %1084 = vst.msk [vmem:[#allocation3 + $0x20] sm:$0xff] %vm1079, %v956
      %1085 = vst.msk [vmem:[#allocation3 + $0x28] sm:$0xff] %vm1079, %v958
      %1086 = vst.msk [vmem:[#allocation3 + $0x30] sm:$0xff] %vm1079, %v960
      %1087 = vst.msk [vmem:[#allocation3 + $0x38] sm:$0xff] %vm1079, %v962
      %1088 = vst.msk [vmem:[#allocation3 + $0x40] sm:$0xff] %vm1079, %v964
      %1089 = vst.msk [vmem:[#allocation3 + $0x48] sm:$0xff] %vm1079, %v966
      %1090 = vst.msk [vmem:[#allocation3 + $0x50] sm:$0xff] %vm1079, %v968
      %1091 = vst.msk [vmem:[#allocation3 + $0x58] sm:$0xff] %vm1079, %v970
      %1092 = vst.msk [vmem:[#allocation3 + $0x60] sm:$0xff] %vm1079, %v972
      %1093 = vst.msk [vmem:[#allocation3 + $0x68] sm:$0xff] %vm1079, %v974
      %1094 = vst.msk [vmem:[#allocation3 + $0x70] sm:$0xff] %vm1079, %v976
      %1095 = vst.msk [vmem:[#allocation3 + $0x78] sm:$0xff] %vm1079, %v978
      %1096 = vst.msk [vmem:[#allocation3 + $0x80] sm:$0xff] %vm1079, %v980
      %1097 = vst.msk [vmem:[#allocation3 + $0x88] sm:$0xff] %vm1079, %v982
      %1098 = vst.msk [vmem:[#allocation3 + $0x90] sm:$0xff] %vm1079, %v984
      %1099 = vst.msk [vmem:[#allocation3 + $0x98] sm:$0xff] %vm1079, %v986
      %1100 = vst.msk [vmem:[#allocation3 + $0xa0] sm:$0xff] %vm1079, %v988
      %1101 = vst.msk [vmem:[#allocation3 + $0xa8] sm:$0xff] %vm1079, %v990
      %1102 = vst.msk [vmem:[#allocation3 + $0xb0] sm:$0xff] %vm1079, %v992
      %1103 = vst.msk [vmem:[#allocation3 + $0xb8] sm:$0xff] %vm1079, %v994
      %1104 = vst.msk [vmem:[#allocation3 + $0xc0] sm:$0xff] %vm1079, %v996
      %1105 = vst.msk [vmem:[#allocation3 + $0xc8] sm:$0xff] %vm1079, %v998
      %1106 = vst.msk [vmem:[#allocation3 + $0xd0] sm:$0xff] %vm1079, %v1000
      %1107 = vst.msk [vmem:[#allocation3 + $0xd8] sm:$0xff] %vm1079, %v1002
      %1108 = vst.msk [vmem:[#allocation3 + $0xe0] sm:$0xff] %vm1079, %v1004
      %1109 = vst.msk [vmem:[#allocation3 + $0xe8] sm:$0xff] %vm1079, %v1006
      %1110 = vst.msk [vmem:[#allocation3 + $0xf0] sm:$0xff] %vm1079, %v1008
      %1111 = vst.msk [vmem:[#allocation3 + $0xf8] sm:$0xff] %vm1079, %v1010
      %1112 = vst.msk [vmem:[#allocation3 + $0x100] sm:$0xff] %vm1079, %v1012
      %1113 = vst.msk [vmem:[#allocation3 + $0x108] sm:$0xff] %vm1079, %v1014
      %1114 = vst.msk [vmem:[#allocation3 + $0x110] sm:$0xff] %vm1079, %v1016
      %1115 = vst.msk [vmem:[#allocation3 + $0x118] sm:$0xff] %vm1079, %v1018
      %1116 = vst.msk [vmem:[#allocation3 + $0x120] sm:$0xff] %vm1079, %v1020
      %1117 = vst.msk [vmem:[#allocation3 + $0x128] sm:$0xff] %vm1079, %v1022
      %1118 = vst.msk [vmem:[#allocation3 + $0x130] sm:$0xff] %vm1079, %v1024
      %1119 = vst.msk [vmem:[#allocation3 + $0x138] sm:$0xff] %vm1079, %v1026
      %1120 = vst.msk [vmem:[#allocation3 + $0x140] sm:$0xff] %vm1079, %v1028
      %1121 = vst.msk [vmem:[#allocation3 + $0x148] sm:$0xff] %vm1079, %v1030
      %1122 = vst.msk [vmem:[#allocation3 + $0x150] sm:$0xff] %vm1079, %v1032
      %1123 = vst.msk [vmem:[#allocation3 + $0x158] sm:$0xff] %vm1079, %v1034
      %v1124 = vld [vmem:[#allocation2 + $0x2] sm:$0xff]
      %v1125 = vld [vmem:[#allocation2 + $0xa] sm:$0xff]
      %v1126 = vld [vmem:[#allocation2 + $0x12] sm:$0xff]
      %v1127 = vld [vmem:[#allocation2 + $0x1a] sm:$0xff]
      %v1128 = vld [vmem:[#allocation2 + $0x22] sm:$0xff]
      %v1129 = vld [vmem:[#allocation2 + $0x2a] sm:$0xff]
      %v1130 = vld [vmem:[#allocation2 + $0x32] sm:$0xff]
      %v1131 = vld [vmem:[#allocation2 + $0x3a] sm:$0xff]
      %v1132 = vld [vmem:[#allocation2 + $0x42] sm:$0xff]
      %v1133 = vld [vmem:[#allocation2 + $0x4a] sm:$0xff]
      %v1134 = vld [vmem:[#allocation2 + $0x52] sm:$0xff]
      %v1135 = vld [vmem:[#allocation2 + $0x5a] sm:$0xff]
      %v1136 = vld [vmem:[#allocation2 + $0x62] sm:$0xff]
      %v1137 = vld [vmem:[#allocation2 + $0x6a] sm:$0xff]
      %v1138 = vld [vmem:[#allocation2 + $0x72] sm:$0xff]
      %v1139 = vld [vmem:[#allocation2 + $0x7a] sm:$0xff]
      %v1140 = vld [vmem:[#allocation2 + $0x82] sm:$0xff]
      %v1141 = vld [vmem:[#allocation2 + $0x8a] sm:$0xff]
      %v1142 = vld [vmem:[#allocation2 + $0x92] sm:$0xff]
      %v1143 = vld [vmem:[#allocation2 + $0x9a] sm:$0xff]
      %v1144 = vld [vmem:[#allocation2 + $0xa2] sm:$0xff]
      %v1145 = vld [vmem:[#allocation2 + $0xaa] sm:$0xff]
      %v1146 = vld [vmem:[#allocation2 + $0xb2] sm:$0xff]
      %v1147 = vld [vmem:[#allocation2 + $0xba] sm:$0xff]
      %v1148 = vld [vmem:[#allocation2 + $0xc2] sm:$0xff]
      %v1149 = vld [vmem:[#allocation2 + $0xca] sm:$0xff]
      %v1150 = vld [vmem:[#allocation2 + $0xd2] sm:$0xff]
      %v1151 = vld [vmem:[#allocation2 + $0xda] sm:$0xff]
      %v1152 = vld [vmem:[#allocation2 + $0xe2] sm:$0xff]
      %v1153 = vld [vmem:[#allocation2 + $0xea] sm:$0xff]
      %v1154 = vld [vmem:[#allocation2 + $0xf2] sm:$0xff]
      %v1155 = vld [vmem:[#allocation2 + $0xfa] sm:$0xff]
      %v1156 = vld [vmem:[#allocation2 + $0x102] sm:$0xff]
      %v1157 = vld [vmem:[#allocation2 + $0x10a] sm:$0xff]
      %v1158 = vld [vmem:[#allocation2 + $0x112] sm:$0xff]
      %v1159 = vld [vmem:[#allocation2 + $0x11a] sm:$0xff]
      %v1160 = vld [vmem:[#allocation2 + $0x122] sm:$0xff]
      %v1161 = vld [vmem:[#allocation2 + $0x12a] sm:$0xff]
      %v1162 = vld [vmem:[#allocation2 + $0x132] sm:$0xff]
      %v1163 = vld [vmem:[#allocation2 + $0x13a] sm:$0xff]
      %v1164 = vld [vmem:[#allocation2 + $0x142] sm:$0xff]
      %v1165 = vld [vmem:[#allocation2 + $0x14a] sm:$0xff]
      %v1166 = vld [vmem:[#allocation2 + $0x152] sm:$0xff]
      %v1167 = vld [vmem:[#allocation2 + $0x15a] sm:$0xff]
      %1212 = vrot.lane.b32.xlu0 %v1124, 8
      %v1213 = vpop.permute.xlu0 %1212
      %1214 = vrot.lane.b32.xlu0 %v1125, 8
      %v1215 = vpop.permute.xlu0 %1214
      %1216 = vrot.lane.b32.xlu0 %v1126, 8
      %v1217 = vpop.permute.xlu0 %1216
      %1218 = vrot.lane.b32.xlu0 %v1127, 8
      %v1219 = vpop.permute.xlu0 %1218
      %1220 = vrot.lane.b32.xlu0 %v1128, 8
      %v1221 = vpop.permute.xlu0 %1220
      %1222 = vrot.lane.b32.xlu0 %v1129, 8
      %v1223 = vpop.permute.xlu0 %1222
      %1224 = vrot.lane.b32.xlu0 %v1130, 8
      %v1225 = vpop.permute.xlu0 %1224
      %1226 = vrot.lane.b32.xlu0 %v1131, 8
      %v1227 = vpop.permute.xlu0 %1226
      %1228 = vrot.lane.b32.xlu0 %v1132, 8
      %v1229 = vpop.permute.xlu0 %1228
      %1230 = vrot.lane.b32.xlu0 %v1133, 8
      %v1231 = vpop.permute.xlu0 %1230
      %1232 = vrot.lane.b32.xlu0 %v1134, 8
      %v1233 = vpop.permute.xlu0 %1232
      %1234 = vrot.lane.b32.xlu0 %v1135, 8
      %v1235 = vpop.permute.xlu0 %1234
      %1236 = vrot.lane.b32.xlu0 %v1136, 8
      %v1237 = vpop.permute.xlu0 %1236
      %1238 = vrot.lane.b32.xlu0 %v1137, 8
      %v1239 = vpop.permute.xlu0 %1238
      %1240 = vrot.lane.b32.xlu0 %v1138, 8
      %v1241 = vpop.permute.xlu0 %1240
      %1242 = vrot.lane.b32.xlu0 %v1139, 8
      %v1243 = vpop.permute.xlu0 %1242
      %1244 = vrot.lane.b32.xlu0 %v1140, 8
      %v1245 = vpop.permute.xlu0 %1244
      %1246 = vrot.lane.b32.xlu0 %v1141, 8
      %v1247 = vpop.permute.xlu0 %1246
      %1248 = vrot.lane.b32.xlu0 %v1142, 8
      %v1249 = vpop.permute.xlu0 %1248
      %1250 = vrot.lane.b32.xlu0 %v1143, 8
      %v1251 = vpop.permute.xlu0 %1250
      %1252 = vrot.lane.b32.xlu0 %v1144, 8
      %v1253 = vpop.permute.xlu0 %1252
      %1254 = vrot.lane.b32.xlu0 %v1145, 8
      %v1255 = vpop.permute.xlu0 %1254
      %1256 = vrot.lane.b32.xlu0 %v1146, 8
      %v1257 = vpop.permute.xlu0 %1256
      %1258 = vrot.lane.b32.xlu0 %v1147, 8
      %v1259 = vpop.permute.xlu0 %1258
      %1260 = vrot.lane.b32.xlu0 %v1148, 8
      %v1261 = vpop.permute.xlu0 %1260
      %1262 = vrot.lane.b32.xlu0 %v1149, 8
      %v1263 = vpop.permute.xlu0 %1262
      %1264 = vrot.lane.b32.xlu0 %v1150, 8
      %v1265 = vpop.permute.xlu0 %1264
      %1266 = vrot.lane.b32.xlu0 %v1151, 8
      %v1267 = vpop.permute.xlu0 %1266
      %1268 = vrot.lane.b32.xlu0 %v1152, 8
      %v1269 = vpop.permute.xlu0 %1268
      %1270 = vrot.lane.b32.xlu0 %v1153, 8
      %v1271 = vpop.permute.xlu0 %1270
      %1272 = vrot.lane.b32.xlu0 %v1154, 8
      %v1273 = vpop.permute.xlu0 %1272
      %1274 = vrot.lane.b32.xlu0 %v1155, 8
      %v1275 = vpop.permute.xlu0 %1274
      %1276 = vrot.lane.b32.xlu0 %v1156, 8
      %v1277 = vpop.permute.xlu0 %1276
      %1278 = vrot.lane.b32.xlu0 %v1157, 8
      %v1279 = vpop.permute.xlu0 %1278
      %1280 = vrot.lane.b32.xlu0 %v1158, 8
      %v1281 = vpop.permute.xlu0 %1280
      %1282 = vrot.lane.b32.xlu0 %v1159, 8
      %v1283 = vpop.permute.xlu0 %1282
      %1284 = vrot.lane.b32.xlu0 %v1160, 8
      %v1285 = vpop.permute.xlu0 %1284
      %1286 = vrot.lane.b32.xlu0 %v1161, 8
      %v1287 = vpop.permute.xlu0 %1286
      %1288 = vrot.lane.b32.xlu0 %v1162, 8
      %v1289 = vpop.permute.xlu0 %1288
      %1290 = vrot.lane.b32.xlu0 %v1163, 8
      %v1291 = vpop.permute.xlu0 %1290
      %1292 = vrot.lane.b32.xlu0 %v1164, 8
      %v1293 = vpop.permute.xlu0 %1292
      %1294 = vrot.lane.b32.xlu0 %v1165, 8
      %v1295 = vpop.permute.xlu0 %1294
      %1296 = vrot.lane.b32.xlu0 %v1166, 8
      %v1297 = vpop.permute.xlu0 %1296
      %1298 = vrot.lane.b32.xlu0 %v1167, 8
      %v1299 = vpop.permute.xlu0 %1298
      %vm1344 = vcmask 97344
      %1345 = vst.msk [vmem:[#allocation3] sm:$0xff] %vm1344, %v1213
      %1346 = vst.msk [vmem:[#allocation3 + $0x8] sm:$0xff] %vm1344, %v1215
      %1347 = vst.msk [vmem:[#allocation3 + $0x10] sm:$0xff] %vm1344, %v1217
      %1348 = vst.msk [vmem:[#allocation3 + $0x18] sm:$0xff] %vm1344, %v1219
      %1349 = vst.msk [vmem:[#allocation3 + $0x20] sm:$0xff] %vm1344, %v1221
      %1350 = vst.msk [vmem:[#allocation3 + $0x28] sm:$0xff] %vm1344, %v1223
      %1351 = vst.msk [vmem:[#allocation3 + $0x30] sm:$0xff] %vm1344, %v1225
      %1352 = vst.msk [vmem:[#allocation3 + $0x38] sm:$0xff] %vm1344, %v1227
      %1353 = vst.msk [vmem:[#allocation3 + $0x40] sm:$0xff] %vm1344, %v1229
      %1354 = vst.msk [vmem:[#allocation3 + $0x48] sm:$0xff] %vm1344, %v1231
      %1355 = vst.msk [vmem:[#allocation3 + $0x50] sm:$0xff] %vm1344, %v1233
      %1356 = vst.msk [vmem:[#allocation3 + $0x58] sm:$0xff] %vm1344, %v1235
      %1357 = vst.msk [vmem:[#allocation3 + $0x60] sm:$0xff] %vm1344, %v1237
      %1358 = vst.msk [vmem:[#allocation3 + $0x68] sm:$0xff] %vm1344, %v1239
      %1359 = vst.msk [vmem:[#allocation3 + $0x70] sm:$0xff] %vm1344, %v1241
      %1360 = vst.msk [vmem:[#allocation3 + $0x78] sm:$0xff] %vm1344, %v1243
      %1361 = vst.msk [vmem:[#allocation3 + $0x80] sm:$0xff] %vm1344, %v1245
      %1362 = vst.msk [vmem:[#allocation3 + $0x88] sm:$0xff] %vm1344, %v1247
      %1363 = vst.msk [vmem:[#allocation3 + $0x90] sm:$0xff] %vm1344, %v1249
      %1364 = vst.msk [vmem:[#allocation3 + $0x98] sm:$0xff] %vm1344, %v1251
      %1365 = vst.msk [vmem:[#allocation3 + $0xa0] sm:$0xff] %vm1344, %v1253
      %1366 = vst.msk [vmem:[#allocation3 + $0xa8] sm:$0xff] %vm1344, %v1255
      %1367 = vst.msk [vmem:[#allocation3 + $0xb0] sm:$0xff] %vm1344, %v1257
      %1368 = vst.msk [vmem:[#allocation3 + $0xb8] sm:$0xff] %vm1344, %v1259
      %1369 = vst.msk [vmem:[#allocation3 + $0xc0] sm:$0xff] %vm1344, %v1261
      %1370 = vst.msk [vmem:[#allocation3 + $0xc8] sm:$0xff] %vm1344, %v1263
      %1371 = vst.msk [vmem:[#allocation3 + $0xd0] sm:$0xff] %vm1344, %v1265
      %1372 = vst.msk [vmem:[#allocation3 + $0xd8] sm:$0xff] %vm1344, %v1267
      %1373 = vst.msk [vmem:[#allocation3 + $0xe0] sm:$0xff] %vm1344, %v1269
      %1374 = vst.msk [vmem:[#allocation3 + $0xe8] sm:$0xff] %vm1344, %v1271
      %1375 = vst.msk [vmem:[#allocation3 + $0xf0] sm:$0xff] %vm1344, %v1273
      %1376 = vst.msk [vmem:[#allocation3 + $0xf8] sm:$0xff] %vm1344, %v1275
      %1377 = vst.msk [vmem:[#allocation3 + $0x100] sm:$0xff] %vm1344, %v1277
      %1378 = vst.msk [vmem:[#allocation3 + $0x108] sm:$0xff] %vm1344, %v1279
      %1379 = vst.msk [vmem:[#allocation3 + $0x110] sm:$0xff] %vm1344, %v1281
      %1380 = vst.msk [vmem:[#allocation3 + $0x118] sm:$0xff] %vm1344, %v1283
      %1381 = vst.msk [vmem:[#allocation3 + $0x120] sm:$0xff] %vm1344, %v1285
      %1382 = vst.msk [vmem:[#allocation3 + $0x128] sm:$0xff] %vm1344, %v1287
      %1383 = vst.msk [vmem:[#allocation3 + $0x130] sm:$0xff] %vm1344, %v1289
      %1384 = vst.msk [vmem:[#allocation3 + $0x138] sm:$0xff] %vm1344, %v1291
      %1385 = vst.msk [vmem:[#allocation3 + $0x140] sm:$0xff] %vm1344, %v1293
      %1386 = vst.msk [vmem:[#allocation3 + $0x148] sm:$0xff] %vm1344, %v1295
      %1387 = vst.msk [vmem:[#allocation3 + $0x150] sm:$0xff] %vm1344, %v1297
      %1388 = vst.msk [vmem:[#allocation3 + $0x158] sm:$0xff] %vm1344, %v1299
      %v1389 = vld [vmem:[#allocation2 + $0x3] sm:$0xff]
      %v1390 = vld [vmem:[#allocation2 + $0xb] sm:$0xff]
      %v1391 = vld [vmem:[#allocation2 + $0x13] sm:$0xff]
      %v1392 = vld [vmem:[#allocation2 + $0x1b] sm:$0xff]
      %v1393 = vld [vmem:[#allocation2 + $0x23] sm:$0xff]
      %v1394 = vld [vmem:[#allocation2 + $0x2b] sm:$0xff]
      %v1395 = vld [vmem:[#allocation2 + $0x33] sm:$0xff]
      %v1396 = vld [vmem:[#allocation2 + $0x3b] sm:$0xff]
      %v1397 = vld [vmem:[#allocation2 + $0x43] sm:$0xff]
      %v1398 = vld [vmem:[#allocation2 + $0x4b] sm:$0xff]
      %v1399 = vld [vmem:[#allocation2 + $0x53] sm:$0xff]
      %v1400 = vld [vmem:[#allocation2 + $0x5b] sm:$0xff]
      %v1401 = vld [vmem:[#allocation2 + $0x63] sm:$0xff]
      %v1402 = vld [vmem:[#allocation2 + $0x6b] sm:$0xff]
      %v1403 = vld [vmem:[#allocation2 + $0x73] sm:$0xff]
      %v1404 = vld [vmem:[#allocation2 + $0x7b] sm:$0xff]
      %v1405 = vld [vmem:[#allocation2 + $0x83] sm:$0xff]
      %v1406 = vld [vmem:[#allocation2 + $0x8b] sm:$0xff]
      %v1407 = vld [vmem:[#allocation2 + $0x93] sm:$0xff]
      %v1408 = vld [vmem:[#allocation2 + $0x9b] sm:$0xff]
      %v1409 = vld [vmem:[#allocation2 + $0xa3] sm:$0xff]
      %v1410 = vld [vmem:[#allocation2 + $0xab] sm:$0xff]
      %v1411 = vld [vmem:[#allocation2 + $0xb3] sm:$0xff]
      %v1412 = vld [vmem:[#allocation2 + $0xbb] sm:$0xff]
      %v1413 = vld [vmem:[#allocation2 + $0xc3] sm:$0xff]
      %v1414 = vld [vmem:[#allocation2 + $0xcb] sm:$0xff]
      %v1415 = vld [vmem:[#allocation2 + $0xd3] sm:$0xff]
      %v1416 = vld [vmem:[#allocation2 + $0xdb] sm:$0xff]
      %v1417 = vld [vmem:[#allocation2 + $0xe3] sm:$0xff]
      %v1418 = vld [vmem:[#allocation2 + $0xeb] sm:$0xff]
      %v1419 = vld [vmem:[#allocation2 + $0xf3] sm:$0xff]
      %v1420 = vld [vmem:[#allocation2 + $0xfb] sm:$0xff]
      %v1421 = vld [vmem:[#allocation2 + $0x103] sm:$0xff]
      %v1422 = vld [vmem:[#allocation2 + $0x10b] sm:$0xff]
      %v1423 = vld [vmem:[#allocation2 + $0x113] sm:$0xff]
      %v1424 = vld [vmem:[#allocation2 + $0x11b] sm:$0xff]
      %v1425 = vld [vmem:[#allocation2 + $0x123] sm:$0xff]
      %v1426 = vld [vmem:[#allocation2 + $0x12b] sm:$0xff]
      %v1427 = vld [vmem:[#allocation2 + $0x133] sm:$0xff]
      %v1428 = vld [vmem:[#allocation2 + $0x13b] sm:$0xff]
      %v1429 = vld [vmem:[#allocation2 + $0x143] sm:$0xff]
      %v1430 = vld [vmem:[#allocation2 + $0x14b] sm:$0xff]
      %v1431 = vld [vmem:[#allocation2 + $0x153] sm:$0xff]
      %v1432 = vld [vmem:[#allocation2 + $0x15b] sm:$0xff]
      %1477 = vrot.lane.b32.xlu0 %v1389, 12
      %v1478 = vpop.permute.xlu0 %1477
      %1479 = vrot.lane.b32.xlu0 %v1390, 12
      %v1480 = vpop.permute.xlu0 %1479
      %1481 = vrot.lane.b32.xlu0 %v1391, 12
      %v1482 = vpop.permute.xlu0 %1481
      %1483 = vrot.lane.b32.xlu0 %v1392, 12
      %v1484 = vpop.permute.xlu0 %1483
      %1485 = vrot.lane.b32.xlu0 %v1393, 12
      %v1486 = vpop.permute.xlu0 %1485
      %1487 = vrot.lane.b32.xlu0 %v1394, 12
      %v1488 = vpop.permute.xlu0 %1487
      %1489 = vrot.lane.b32.xlu0 %v1395, 12
      %v1490 = vpop.permute.xlu0 %1489
      %1491 = vrot.lane.b32.xlu0 %v1396, 12
      %v1492 = vpop.permute.xlu0 %1491
      %1493 = vrot.lane.b32.xlu0 %v1397, 12
      %v1494 = vpop.permute.xlu0 %1493
      %1495 = vrot.lane.b32.xlu0 %v1398, 12
      %v1496 = vpop.permute.xlu0 %1495
      %1497 = vrot.lane.b32.xlu0 %v1399, 12
      %v1498 = vpop.permute.xlu0 %1497
      %1499 = vrot.lane.b32.xlu0 %v1400, 12
      %v1500 = vpop.permute.xlu0 %1499
      %1501 = vrot.lane.b32.xlu0 %v1401, 12
      %v1502 = vpop.permute.xlu0 %1501
      %1503 = vrot.lane.b32.xlu0 %v1402, 12
      %v1504 = vpop.permute.xlu0 %1503
      %1505 = vrot.lane.b32.xlu0 %v1403, 12
      %v1506 = vpop.permute.xlu0 %1505
      %1507 = vrot.lane.b32.xlu0 %v1404, 12
      %v1508 = vpop.permute.xlu0 %1507
      %1509 = vrot.lane.b32.xlu0 %v1405, 12
      %v1510 = vpop.permute.xlu0 %1509
      %1511 = vrot.lane.b32.xlu0 %v1406, 12
      %v1512 = vpop.permute.xlu0 %1511
      %1513 = vrot.lane.b32.xlu0 %v1407, 12
      %v1514 = vpop.permute.xlu0 %1513
      %1515 = vrot.lane.b32.xlu0 %v1408, 12
      %v1516 = vpop.permute.xlu0 %1515
      %1517 = vrot.lane.b32.xlu0 %v1409, 12
      %v1518 = vpop.permute.xlu0 %1517
      %1519 = vrot.lane.b32.xlu0 %v1410, 12
      %v1520 = vpop.permute.xlu0 %1519
      %1521 = vrot.lane.b32.xlu0 %v1411, 12
      %v1522 = vpop.permute.xlu0 %1521
      %1523 = vrot.lane.b32.xlu0 %v1412, 12
      %v1524 = vpop.permute.xlu0 %1523
      %1525 = vrot.lane.b32.xlu0 %v1413, 12
      %v1526 = vpop.permute.xlu0 %1525
      %1527 = vrot.lane.b32.xlu0 %v1414, 12
      %v1528 = vpop.permute.xlu0 %1527
      %1529 = vrot.lane.b32.xlu0 %v1415, 12
      %v1530 = vpop.permute.xlu0 %1529
      %1531 = vrot.lane.b32.xlu0 %v1416, 12
      %v1532 = vpop.permute.xlu0 %1531
      %1533 = vrot.lane.b32.xlu0 %v1417, 12
      %v1534 = vpop.permute.xlu0 %1533
      %1535 = vrot.lane.b32.xlu0 %v1418, 12
      %v1536 = vpop.permute.xlu0 %1535
      %1537 = vrot.lane.b32.xlu0 %v1419, 12
      %v1538 = vpop.permute.xlu0 %1537
      %1539 = vrot.lane.b32.xlu0 %v1420, 12
      %v1540 = vpop.permute.xlu0 %1539
      %1541 = vrot.lane.b32.xlu0 %v1421, 12
      %v1542 = vpop.permute.xlu0 %1541
      %1543 = vrot.lane.b32.xlu0 %v1422, 12
      %v1544 = vpop.permute.xlu0 %1543
      %1545 = vrot.lane.b32.xlu0 %v1423, 12
      %v1546 = vpop.permute.xlu0 %1545
      %1547 = vrot.lane.b32.xlu0 %v1424, 12
      %v1548 = vpop.permute.xlu0 %1547
      %1549 = vrot.lane.b32.xlu0 %v1425, 12
      %v1550 = vpop.permute.xlu0 %1549
      %1551 = vrot.lane.b32.xlu0 %v1426, 12
      %v1552 = vpop.permute.xlu0 %1551
      %1553 = vrot.lane.b32.xlu0 %v1427, 12
      %v1554 = vpop.permute.xlu0 %1553
      %1555 = vrot.lane.b32.xlu0 %v1428, 12
      %v1556 = vpop.permute.xlu0 %1555
      %1557 = vrot.lane.b32.xlu0 %v1429, 12
      %v1558 = vpop.permute.xlu0 %1557
      %1559 = vrot.lane.b32.xlu0 %v1430, 12
      %v1560 = vpop.permute.xlu0 %1559
      %1561 = vrot.lane.b32.xlu0 %v1431, 12
      %v1562 = vpop.permute.xlu0 %1561
      %1563 = vrot.lane.b32.xlu0 %v1432, 12
      %v1564 = vpop.permute.xlu0 %1563
      %vm1609 = vcmask 130144
      %1610 = vst.msk [vmem:[#allocation3] sm:$0xff] %vm1609, %v1478
      %1611 = vst.msk [vmem:[#allocation3 + $0x8] sm:$0xff] %vm1609, %v1480
      %1612 = vst.msk [vmem:[#allocation3 + $0x10] sm:$0xff] %vm1609, %v1482
      %1613 = vst.msk [vmem:[#allocation3 + $0x18] sm:$0xff] %vm1609, %v1484
      %1614 = vst.msk [vmem:[#allocation3 + $0x20] sm:$0xff] %vm1609, %v1486
      %1615 = vst.msk [vmem:[#allocation3 + $0x28] sm:$0xff] %vm1609, %v1488
      %1616 = vst.msk [vmem:[#allocation3 + $0x30] sm:$0xff] %vm1609, %v1490
      %1617 = vst.msk [vmem:[#allocation3 + $0x38] sm:$0xff] %vm1609, %v1492
      %1618 = vst.msk [vmem:[#allocation3 + $0x40] sm:$0xff] %vm1609, %v1494
      %1619 = vst.msk [vmem:[#allocation3 + $0x48] sm:$0xff] %vm1609, %v1496
      %1620 = vst.msk [vmem:[#allocation3 + $0x50] sm:$0xff] %vm1609, %v1498
      %1621 = vst.msk [vmem:[#allocation3 + $0x58] sm:$0xff] %vm1609, %v1500
      %1622 = vst.msk [vmem:[#allocation3 + $0x60] sm:$0xff] %vm1609, %v1502
      %1623 = vst.msk [vmem:[#allocation3 + $0x68] sm:$0xff] %vm1609, %v1504
      %1624 = vst.msk [vmem:[#allocation3 + $0x70] sm:$0xff] %vm1609, %v1506
      %1625 = vst.msk [vmem:[#allocation3 + $0x78] sm:$0xff] %vm1609, %v1508
      %1626 = vst.msk [vmem:[#allocation3 + $0x80] sm:$0xff] %vm1609, %v1510
      %1627 = vst.msk [vmem:[#allocation3 + $0x88] sm:$0xff] %vm1609, %v1512
      %1628 = vst.msk [vmem:[#allocation3 + $0x90] sm:$0xff] %vm1609, %v1514
      %1629 = vst.msk [vmem:[#allocation3 + $0x98] sm:$0xff] %vm1609, %v1516
      %1630 = vst.msk [vmem:[#allocation3 + $0xa0] sm:$0xff] %vm1609, %v1518
      %1631 = vst.msk [vmem:[#allocation3 + $0xa8] sm:$0xff] %vm1609, %v1520
      %1632 = vst.msk [vmem:[#allocation3 + $0xb0] sm:$0xff] %vm1609, %v1522
      %1633 = vst.msk [vmem:[#allocation3 + $0xb8] sm:$0xff] %vm1609, %v1524
      %1634 = vst.msk [vmem:[#allocation3 + $0xc0] sm:$0xff] %vm1609, %v1526
      %1635 = vst.msk [vmem:[#allocation3 + $0xc8] sm:$0xff] %vm1609, %v1528
      %1636 = vst.msk [vmem:[#allocation3 + $0xd0] sm:$0xff] %vm1609, %v1530
      %1637 = vst.msk [vmem:[#allocation3 + $0xd8] sm:$0xff] %vm1609, %v1532
      %1638 = vst.msk [vmem:[#allocation3 + $0xe0] sm:$0xff] %vm1609, %v1534
      %1639 = vst.msk [vmem:[#allocation3 + $0xe8] sm:$0xff] %vm1609, %v1536
      %1640 = vst.msk [vmem:[#allocation3 + $0xf0] sm:$0xff] %vm1609, %v1538
      %1641 = vst.msk [vmem:[#allocation3 + $0xf8] sm:$0xff] %vm1609, %v1540
      %1642 = vst.msk [vmem:[#allocation3 + $0x100] sm:$0xff] %vm1609, %v1542
      %1643 = vst.msk [vmem:[#allocation3 + $0x108] sm:$0xff] %vm1609, %v1544
      %1644 = vst.msk [vmem:[#allocation3 + $0x110] sm:$0xff] %vm1609, %v1546
      %1645 = vst.msk [vmem:[#allocation3 + $0x118] sm:$0xff] %vm1609, %v1548
      %1646 = vst.msk [vmem:[#allocation3 + $0x120] sm:$0xff] %vm1609, %v1550
      %1647 = vst.msk [vmem:[#allocation3 + $0x128] sm:$0xff] %vm1609, %v1552
      %1648 = vst.msk [vmem:[#allocation3 + $0x130] sm:$0xff] %vm1609, %v1554
      %1649 = vst.msk [vmem:[#allocation3 + $0x138] sm:$0xff] %vm1609, %v1556
      %1650 = vst.msk [vmem:[#allocation3 + $0x140] sm:$0xff] %vm1609, %v1558
      %1651 = vst.msk [vmem:[#allocation3 + $0x148] sm:$0xff] %vm1609, %v1560
      %1652 = vst.msk [vmem:[#allocation3 + $0x150] sm:$0xff] %vm1609, %v1562
      %1653 = vst.msk [vmem:[#allocation3 + $0x158] sm:$0xff] %vm1609, %v1564
      %v1654 = vld [vmem:[#allocation2 + $0x4] sm:$0xff]
      %v1655 = vld [vmem:[#allocation2 + $0xc] sm:$0xff]
      %v1656 = vld [vmem:[#allocation2 + $0x14] sm:$0xff]
      %v1657 = vld [vmem:[#allocation2 + $0x1c] sm:$0xff]
      %v1658 = vld [vmem:[#allocation2 + $0x24] sm:$0xff]
      %v1659 = vld [vmem:[#allocation2 + $0x2c] sm:$0xff]
      %v1660 = vld [vmem:[#allocation2 + $0x34] sm:$0xff]
      %v1661 = vld [vmem:[#allocation2 + $0x3c] sm:$0xff]
      %v1662 = vld [vmem:[#allocation2 + $0x44] sm:$0xff]
      %v1663 = vld [vmem:[#allocation2 + $0x4c] sm:$0xff]
      %v1664 = vld [vmem:[#allocation2 + $0x54] sm:$0xff]
      %v1665 = vld [vmem:[#allocation2 + $0x5c] sm:$0xff]
      %v1666 = vld [vmem:[#allocation2 + $0x64] sm:$0xff]
      %v1667 = vld [vmem:[#allocation2 + $0x6c] sm:$0xff]
      %v1668 = vld [vmem:[#allocation2 + $0x74] sm:$0xff]
      %v1669 = vld [vmem:[#allocation2 + $0x7c] sm:$0xff]
      %v1670 = vld [vmem:[#allocation2 + $0x84] sm:$0xff]
      %v1671 = vld [vmem:[#allocation2 + $0x8c] sm:$0xff]
      %v1672 = vld [vmem:[#allocation2 + $0x94] sm:$0xff]
      %v1673 = vld [vmem:[#allocation2 + $0x9c] sm:$0xff]
      %v1674 = vld [vmem:[#allocation2 + $0xa4] sm:$0xff]
      %v1675 = vld [vmem:[#allocation2 + $0xac] sm:$0xff]
      %v1676 = vld [vmem:[#allocation2 + $0xb4] sm:$0xff]
      %v1677 = vld [vmem:[#allocation2 + $0xbc] sm:$0xff]
      %v1678 = vld [vmem:[#allocation2 + $0xc4] sm:$0xff]
      %v1679 = vld [vmem:[#allocation2 + $0xcc] sm:$0xff]
      %v1680 = vld [vmem:[#allocation2 + $0xd4] sm:$0xff]
      %v1681 = vld [vmem:[#allocation2 + $0xdc] sm:$0xff]
      %v1682 = vld [vmem:[#allocation2 + $0xe4] sm:$0xff]
      %v1683 = vld [vmem:[#allocation2 + $0xec] sm:$0xff]
      %v1684 = vld [vmem:[#allocation2 + $0xf4] sm:$0xff]
      %v1685 = vld [vmem:[#allocation2 + $0xfc] sm:$0xff]
      %v1686 = vld [vmem:[#allocation2 + $0x104] sm:$0xff]
      %v1687 = vld [vmem:[#allocation2 + $0x10c] sm:$0xff]
      %v1688 = vld [vmem:[#allocation2 + $0x114] sm:$0xff]
      %v1689 = vld [vmem:[#allocation2 + $0x11c] sm:$0xff]
      %v1690 = vld [vmem:[#allocation2 + $0x124] sm:$0xff]
      %v1691 = vld [vmem:[#allocation2 + $0x12c] sm:$0xff]
      %v1692 = vld [vmem:[#allocation2 + $0x134] sm:$0xff]
      %v1693 = vld [vmem:[#allocation2 + $0x13c] sm:$0xff]
      %v1694 = vld [vmem:[#allocation2 + $0x144] sm:$0xff]
      %v1695 = vld [vmem:[#allocation2 + $0x14c] sm:$0xff]
      %v1696 = vld [vmem:[#allocation2 + $0x154] sm:$0xff]
      %v1697 = vld [vmem:[#allocation2 + $0x15c] sm:$0xff]
      %1742 = vrot.lane.b32.xlu0 %v1654, 16
      %v1743 = vpop.permute.xlu0 %1742
      %1744 = vrot.lane.b32.xlu0 %v1655, 16
      %v1745 = vpop.permute.xlu0 %1744
      %1746 = vrot.lane.b32.xlu0 %v1656, 16
      %v1747 = vpop.permute.xlu0 %1746
      %1748 = vrot.lane.b32.xlu0 %v1657, 16
      %v1749 = vpop.permute.xlu0 %1748
      %1750 = vrot.lane.b32.xlu0 %v1658, 16
      %v1751 = vpop.permute.xlu0 %1750
      %1752 = vrot.lane.b32.xlu0 %v1659, 16
      %v1753 = vpop.permute.xlu0 %1752
      %1754 = vrot.lane.b32.xlu0 %v1660, 16
      %v1755 = vpop.permute.xlu0 %1754
      %1756 = vrot.lane.b32.xlu0 %v1661, 16
      %v1757 = vpop.permute.xlu0 %1756
      %1758 = vrot.lane.b32.xlu0 %v1662, 16
      %v1759 = vpop.permute.xlu0 %1758
      %1760 = vrot.lane.b32.xlu0 %v1663, 16
      %v1761 = vpop.permute.xlu0 %1760
      %1762 = vrot.lane.b32.xlu0 %v1664, 16
      %v1763 = vpop.permute.xlu0 %1762
      %1764 = vrot.lane.b32.xlu0 %v1665, 16
      %v1765 = vpop.permute.xlu0 %1764
      %1766 = vrot.lane.b32.xlu0 %v1666, 16
      %v1767 = vpop.permute.xlu0 %1766
      %1768 = vrot.lane.b32.xlu0 %v1667, 16
      %v1769 = vpop.permute.xlu0 %1768
      %1770 = vrot.lane.b32.xlu0 %v1668, 16
      %v1771 = vpop.permute.xlu0 %1770
      %1772 = vrot.lane.b32.xlu0 %v1669, 16
      %v1773 = vpop.permute.xlu0 %1772
      %1774 = vrot.lane.b32.xlu0 %v1670, 16
      %v1775 = vpop.permute.xlu0 %1774
      %1776 = vrot.lane.b32.xlu0 %v1671, 16
      %v1777 = vpop.permute.xlu0 %1776
      %1778 = vrot.lane.b32.xlu0 %v1672, 16
      %v1779 = vpop.permute.xlu0 %1778
      %1780 = vrot.lane.b32.xlu0 %v1673, 16
      %v1781 = vpop.permute.xlu0 %1780
      %1782 = vrot.lane.b32.xlu0 %v1674, 16
      %v1783 = vpop.permute.xlu0 %1782
      %1784 = vrot.lane.b32.xlu0 %v1675, 16
      %v1785 = vpop.permute.xlu0 %1784
      %1786 = vrot.lane.b32.xlu0 %v1676, 16
      %v1787 = vpop.permute.xlu0 %1786
      %1788 = vrot.lane.b32.xlu0 %v1677, 16
      %v1789 = vpop.permute.xlu0 %1788
      %1790 = vrot.lane.b32.xlu0 %v1678, 16
      %v1791 = vpop.permute.xlu0 %1790
      %1792 = vrot.lane.b32.xlu0 %v1679, 16
      %v1793 = vpop.permute.xlu0 %1792
      %1794 = vrot.lane.b32.xlu0 %v1680, 16
      %v1795 = vpop.permute.xlu0 %1794
      %1796 = vrot.lane.b32.xlu0 %v1681, 16
      %v1797 = vpop.permute.xlu0 %1796
      %1798 = vrot.lane.b32.xlu0 %v1682, 16
      %v1799 = vpop.permute.xlu0 %1798
      %1800 = vrot.lane.b32.xlu0 %v1683, 16
      %v1801 = vpop.permute.xlu0 %1800
      %1802 = vrot.lane.b32.xlu0 %v1684, 16
      %v1803 = vpop.permute.xlu0 %1802
      %1804 = vrot.lane.b32.xlu0 %v1685, 16
      %v1805 = vpop.permute.xlu0 %1804
      %1806 = vrot.lane.b32.xlu0 %v1686, 16
      %v1807 = vpop.permute.xlu0 %1806
      %1808 = vrot.lane.b32.xlu0 %v1687, 16
      %v1809 = vpop.permute.xlu0 %1808
      %1810 = vrot.lane.b32.xlu0 %v1688, 16
      %v1811 = vpop.permute.xlu0 %1810
      %1812 = vrot.lane.b32.xlu0 %v1689, 16
      %v1813 = vpop.permute.xlu0 %1812
      %1814 = vrot.lane.b32.xlu0 %v1690, 16
      %v1815 = vpop.permute.xlu0 %1814
      %1816 = vrot.lane.b32.xlu0 %v1691, 16
      %v1817 = vpop.permute.xlu0 %1816
      %1818 = vrot.lane.b32.xlu0 %v1692, 16
      %v1819 = vpop.permute.xlu0 %1818
      %1820 = vrot.lane.b32.xlu0 %v1693, 16
      %v1821 = vpop.permute.xlu0 %1820
      %1822 = vrot.lane.b32.xlu0 %v1694, 16
      %v1823 = vpop.permute.xlu0 %1822
      %1824 = vrot.lane.b32.xlu0 %v1695, 16
      %v1825 = vpop.permute.xlu0 %1824
      %1826 = vrot.lane.b32.xlu0 %v1696, 16
      %v1827 = vpop.permute.xlu0 %1826
      %1828 = vrot.lane.b32.xlu0 %v1697, 16
      %v1829 = vpop.permute.xlu0 %1828
      %vm1874 = vcmask 162944
      %1875 = vst.msk [vmem:[#allocation3] sm:$0xff] %vm1874, %v1743
      %1876 = vst.msk [vmem:[#allocation3 + $0x8] sm:$0xff] %vm1874, %v1745
      %1877 = vst.msk [vmem:[#allocation3 + $0x10] sm:$0xff] %vm1874, %v1747
      %1878 = vst.msk [vmem:[#allocation3 + $0x18] sm:$0xff] %vm1874, %v1749
      %1879 = vst.msk [vmem:[#allocation3 + $0x20] sm:$0xff] %vm1874, %v1751
      %1880 = vst.msk [vmem:[#allocation3 + $0x28] sm:$0xff] %vm1874, %v1753
      %1881 = vst.msk [vmem:[#allocation3 + $0x30] sm:$0xff] %vm1874, %v1755
      %1882 = vst.msk [vmem:[#allocation3 + $0x38] sm:$0xff] %vm1874, %v1757
      %1883 = vst.msk [vmem:[#allocation3 + $0x40] sm:$0xff] %vm1874, %v1759
      %1884 = vst.msk [vmem:[#allocation3 + $0x48] sm:$0xff] %vm1874, %v1761
      %1885 = vst.msk [vmem:[#allocation3 + $0x50] sm:$0xff] %vm1874, %v1763
      %1886 = vst.msk [vmem:[#allocation3 + $0x58] sm:$0xff] %vm1874, %v1765
      %1887 = vst.msk [vmem:[#allocation3 + $0x60] sm:$0xff] %vm1874, %v1767
      %1888 = vst.msk [vmem:[#allocation3 + $0x68] sm:$0xff] %vm1874, %v1769
      %1889 = vst.msk [vmem:[#allocation3 + $0x70] sm:$0xff] %vm1874, %v1771
      %1890 = vst.msk [vmem:[#allocation3 + $0x78] sm:$0xff] %vm1874, %v1773
      %1891 = vst.msk [vmem:[#allocation3 + $0x80] sm:$0xff] %vm1874, %v1775
      %1892 = vst.msk [vmem:[#allocation3 + $0x88] sm:$0xff] %vm1874, %v1777
      %1893 = vst.msk [vmem:[#allocation3 + $0x90] sm:$0xff] %vm1874, %v1779
      %1894 = vst.msk [vmem:[#allocation3 + $0x98] sm:$0xff] %vm1874, %v1781
      %1895 = vst.msk [vmem:[#allocation3 + $0xa0] sm:$0xff] %vm1874, %v1783
      %1896 = vst.msk [vmem:[#allocation3 + $0xa8] sm:$0xff] %vm1874, %v1785
      %1897 = vst.msk [vmem:[#allocation3 + $0xb0] sm:$0xff] %vm1874, %v1787
      %1898 = vst.msk [vmem:[#allocation3 + $0xb8] sm:$0xff] %vm1874, %v1789
      %1899 = vst.msk [vmem:[#allocation3 + $0xc0] sm:$0xff] %vm1874, %v1791
      %1900 = vst.msk [vmem:[#allocation3 + $0xc8] sm:$0xff] %vm1874, %v1793
      %1901 = vst.msk [vmem:[#allocation3 + $0xd0] sm:$0xff] %vm1874, %v1795
      %1902 = vst.msk [vmem:[#allocation3 + $0xd8] sm:$0xff] %vm1874, %v1797
      %1903 = vst.msk [vmem:[#allocation3 + $0xe0] sm:$0xff] %vm1874, %v1799
      %1904 = vst.msk [vmem:[#allocation3 + $0xe8] sm:$0xff] %vm1874, %v1801
      %1905 = vst.msk [vmem:[#allocation3 + $0xf0] sm:$0xff] %vm1874, %v1803
      %1906 = vst.msk [vmem:[#allocation3 + $0xf8] sm:$0xff] %vm1874, %v1805
      %1907 = vst.msk [vmem:[#allocation3 + $0x100] sm:$0xff] %vm1874, %v1807
      %1908 = vst.msk [vmem:[#allocation3 + $0x108] sm:$0xff] %vm1874, %v1809
      %1909 = vst.msk [vmem:[#allocation3 + $0x110] sm:$0xff] %vm1874, %v1811
      %1910 = vst.msk [vmem:[#allocation3 + $0x118] sm:$0xff] %vm1874, %v1813
      %1911 = vst.msk [vmem:[#allocation3 + $0x120] sm:$0xff] %vm1874, %v1815
      %1912 = vst.msk [vmem:[#allocation3 + $0x128] sm:$0xff] %vm1874, %v1817
      %1913 = vst.msk [vmem:[#allocation3 + $0x130] sm:$0xff] %vm1874, %v1819
      %1914 = vst.msk [vmem:[#allocation3 + $0x138] sm:$0xff] %vm1874, %v1821
      %1915 = vst.msk [vmem:[#allocation3 + $0x140] sm:$0xff] %vm1874, %v1823
      %1916 = vst.msk [vmem:[#allocation3 + $0x148] sm:$0xff] %vm1874, %v1825
      %1917 = vst.msk [vmem:[#allocation3 + $0x150] sm:$0xff] %vm1874, %v1827
      %1918 = vst.msk [vmem:[#allocation3 + $0x158] sm:$0xff] %vm1874, %v1829
      %v1919 = vld [vmem:[#allocation2 + $0x5] sm:$0xff]
      %v1920 = vld [vmem:[#allocation2 + $0xd] sm:$0xff]
      %v1921 = vld [vmem:[#allocation2 + $0x15] sm:$0xff]
      %v1922 = vld [vmem:[#allocation2 + $0x1d] sm:$0xff]
      %v1923 = vld [vmem:[#allocation2 + $0x25] sm:$0xff]
      %v1924 = vld [vmem:[#allocation2 + $0x2d] sm:$0xff]
      %v1925 = vld [vmem:[#allocation2 + $0x35] sm:$0xff]
      %v1926 = vld [vmem:[#allocation2 + $0x3d] sm:$0xff]
      %v1927 = vld [vmem:[#allocation2 + $0x45] sm:$0xff]
      %v1928 = vld [vmem:[#allocation2 + $0x4d] sm:$0xff]
      %v1929 = vld [vmem:[#allocation2 + $0x55] sm:$0xff]
      %v1930 = vld [vmem:[#allocation2 + $0x5d] sm:$0xff]
      %v1931 = vld [vmem:[#allocation2 + $0x65] sm:$0xff]
      %v1932 = vld [vmem:[#allocation2 + $0x6d] sm:$0xff]
      %v1933 = vld [vmem:[#allocation2 + $0x75] sm:$0xff]
      %v1934 = vld [vmem:[#allocation2 + $0x7d] sm:$0xff]
      %v1935 = vld [vmem:[#allocation2 + $0x85] sm:$0xff]
      %v1936 = vld [vmem:[#allocation2 + $0x8d] sm:$0xff]
      %v1937 = vld [vmem:[#allocation2 + $0x95] sm:$0xff]
      %v1938 = vld [vmem:[#allocation2 + $0x9d] sm:$0xff]
      %v1939 = vld [vmem:[#allocation2 + $0xa5] sm:$0xff]
      %v1940 = vld [vmem:[#allocation2 + $0xad] sm:$0xff]
      %v1941 = vld [vmem:[#allocation2 + $0xb5] sm:$0xff]
      %v1942 = vld [vmem:[#allocation2 + $0xbd] sm:$0xff]
      %v1943 = vld [vmem:[#allocation2 + $0xc5] sm:$0xff]
      %v1944 = vld [vmem:[#allocation2 + $0xcd] sm:$0xff]
      %v1945 = vld [vmem:[#allocation2 + $0xd5] sm:$0xff]
      %v1946 = vld [vmem:[#allocation2 + $0xdd] sm:$0xff]
      %v1947 = vld [vmem:[#allocation2 + $0xe5] sm:$0xff]
      %v1948 = vld [vmem:[#allocation2 + $0xed] sm:$0xff]
      %v1949 = vld [vmem:[#allocation2 + $0xf5] sm:$0xff]
      %v1950 = vld [vmem:[#allocation2 + $0xfd] sm:$0xff]
      %v1951 = vld [vmem:[#allocation2 + $0x105] sm:$0xff]
      %v1952 = vld [vmem:[#allocation2 + $0x10d] sm:$0xff]
      %v1953 = vld [vmem:[#allocation2 + $0x115] sm:$0xff]
      %v1954 = vld [vmem:[#allocation2 + $0x11d] sm:$0xff]
      %v1955 = vld [vmem:[#allocation2 + $0x125] sm:$0xff]
      %v1956 = vld [vmem:[#allocation2 + $0x12d] sm:$0xff]
      %v1957 = vld [vmem:[#allocation2 + $0x135] sm:$0xff]
      %v1958 = vld [vmem:[#allocation2 + $0x13d] sm:$0xff]
      %v1959 = vld [vmem:[#allocation2 + $0x145] sm:$0xff]
      %v1960 = vld [vmem:[#allocation2 + $0x14d] sm:$0xff]
      %v1961 = vld [vmem:[#allocation2 + $0x155] sm:$0xff]
      %v1962 = vld [vmem:[#allocation2 + $0x15d] sm:$0xff]
      %2007 = vrot.lane.b32.xlu0 %v1919, 20
      %v2008 = vpop.permute.xlu0 %2007
      %2009 = vrot.lane.b32.xlu0 %v1920, 20
      %v2010 = vpop.permute.xlu0 %2009
      %2011 = vrot.lane.b32.xlu0 %v1921, 20
      %v2012 = vpop.permute.xlu0 %2011
      %2013 = vrot.lane.b32.xlu0 %v1922, 20
      %v2014 = vpop.permute.xlu0 %2013
      %2015 = vrot.lane.b32.xlu0 %v1923, 20
      %v2016 = vpop.permute.xlu0 %2015
      %2017 = vrot.lane.b32.xlu0 %v1924, 20
      %v2018 = vpop.permute.xlu0 %2017
      %2019 = vrot.lane.b32.xlu0 %v1925, 20
      %v2020 = vpop.permute.xlu0 %2019
      %2021 = vrot.lane.b32.xlu0 %v1926, 20
      %v2022 = vpop.permute.xlu0 %2021
      %2023 = vrot.lane.b32.xlu0 %v1927, 20
      %v2024 = vpop.permute.xlu0 %2023
      %2025 = vrot.lane.b32.xlu0 %v1928, 20
      %v2026 = vpop.permute.xlu0 %2025
      %2027 = vrot.lane.b32.xlu0 %v1929, 20
      %v2028 = vpop.permute.xlu0 %2027
      %2029 = vrot.lane.b32.xlu0 %v1930, 20
      %v2030 = vpop.permute.xlu0 %2029
      %2031 = vrot.lane.b32.xlu0 %v1931, 20
      %v2032 = vpop.permute.xlu0 %2031
      %2033 = vrot.lane.b32.xlu0 %v1932, 20
      %v2034 = vpop.permute.xlu0 %2033
      %2035 = vrot.lane.b32.xlu0 %v1933, 20
      %v2036 = vpop.permute.xlu0 %2035
      %2037 = vrot.lane.b32.xlu0 %v1934, 20
      %v2038 = vpop.permute.xlu0 %2037
      %2039 = vrot.lane.b32.xlu0 %v1935, 20
      %v2040 = vpop.permute.xlu0 %2039
      %2041 = vrot.lane.b32.xlu0 %v1936, 20
      %v2042 = vpop.permute.xlu0 %2041
      %2043 = vrot.lane.b32.xlu0 %v1937, 20
      %v2044 = vpop.permute.xlu0 %2043
      %2045 = vrot.lane.b32.xlu0 %v1938, 20
      %v2046 = vpop.permute.xlu0 %2045
      %2047 = vrot.lane.b32.xlu0 %v1939, 20
      %v2048 = vpop.permute.xlu0 %2047
      %2049 = vrot.lane.b32.xlu0 %v1940, 20
      %v2050 = vpop.permute.xlu0 %2049
      %2051 = vrot.lane.b32.xlu0 %v1941, 20
      %v2052 = vpop.permute.xlu0 %2051
      %2053 = vrot.lane.b32.xlu0 %v1942, 20
      %v2054 = vpop.permute.xlu0 %2053
      %2055 = vrot.lane.b32.xlu0 %v1943, 20
      %v2056 = vpop.permute.xlu0 %2055
      %2057 = vrot.lane.b32.xlu0 %v1944, 20
      %v2058 = vpop.permute.xlu0 %2057
      %2059 = vrot.lane.b32.xlu0 %v1945, 20
      %v2060 = vpop.permute.xlu0 %2059
      %2061 = vrot.lane.b32.xlu0 %v1946, 20
      %v2062 = vpop.permute.xlu0 %2061
      %2063 = vrot.lane.b32.xlu0 %v1947, 20
      %v2064 = vpop.permute.xlu0 %2063
      %2065 = vrot.lane.b32.xlu0 %v1948, 20
      %v2066 = vpop.permute.xlu0 %2065
      %2067 = vrot.lane.b32.xlu0 %v1949, 20
      %v2068 = vpop.permute.xlu0 %2067
      %2069 = vrot.lane.b32.xlu0 %v1950, 20
      %v2070 = vpop.permute.xlu0 %2069
      %2071 = vrot.lane.b32.xlu0 %v1951, 20
      %v2072 = vpop.permute.xlu0 %2071
      %2073 = vrot.lane.b32.xlu0 %v1952, 20
      %v2074 = vpop.permute.xlu0 %2073
      %2075 = vrot.lane.b32.xlu0 %v1953, 20
      %v2076 = vpop.permute.xlu0 %2075
      %2077 = vrot.lane.b32.xlu0 %v1954, 20
      %v2078 = vpop.permute.xlu0 %2077
      %2079 = vrot.lane.b32.xlu0 %v1955, 20
      %v2080 = vpop.permute.xlu0 %2079
      %2081 = vrot.lane.b32.xlu0 %v1956, 20
      %v2082 = vpop.permute.xlu0 %2081
      %2083 = vrot.lane.b32.xlu0 %v1957, 20
      %v2084 = vpop.permute.xlu0 %2083
      %2085 = vrot.lane.b32.xlu0 %v1958, 20
      %v2086 = vpop.permute.xlu0 %2085
      %2087 = vrot.lane.b32.xlu0 %v1959, 20
      %v2088 = vpop.permute.xlu0 %2087
      %2089 = vrot.lane.b32.xlu0 %v1960, 20
      %v2090 = vpop.permute.xlu0 %2089
      %2091 = vrot.lane.b32.xlu0 %v1961, 20
      %v2092 = vpop.permute.xlu0 %2091
      %2093 = vrot.lane.b32.xlu0 %v1962, 20
      %v2094 = vpop.permute.xlu0 %2093
      %vm2139 = vcmask 195744
      %2140 = vst.msk [vmem:[#allocation3] sm:$0xff] %vm2139, %v2008
      %2141 = vst.msk [vmem:[#allocation3 + $0x8] sm:$0xff] %vm2139, %v2010
      %2142 = vst.msk [vmem:[#allocation3 + $0x10] sm:$0xff] %vm2139, %v2012
      %2143 = vst.msk [vmem:[#allocation3 + $0x18] sm:$0xff] %vm2139, %v2014
      %2144 = vst.msk [vmem:[#allocation3 + $0x20] sm:$0xff] %vm2139, %v2016
      %2145 = vst.msk [vmem:[#allocation3 + $0x28] sm:$0xff] %vm2139, %v2018
      %2146 = vst.msk [vmem:[#allocation3 + $0x30] sm:$0xff] %vm2139, %v2020
      %2147 = vst.msk [vmem:[#allocation3 + $0x38] sm:$0xff] %vm2139, %v2022
      %2148 = vst.msk [vmem:[#allocation3 + $0x40] sm:$0xff] %vm2139, %v2024
      %2149 = vst.msk [vmem:[#allocation3 + $0x48] sm:$0xff] %vm2139, %v2026
      %2150 = vst.msk [vmem:[#allocation3 + $0x50] sm:$0xff] %vm2139, %v2028
      %2151 = vst.msk [vmem:[#allocation3 + $0x58] sm:$0xff] %vm2139, %v2030
      %2152 = vst.msk [vmem:[#allocation3 + $0x60] sm:$0xff] %vm2139, %v2032
      %2153 = vst.msk [vmem:[#allocation3 + $0x68] sm:$0xff] %vm2139, %v2034
      %2154 = vst.msk [vmem:[#allocation3 + $0x70] sm:$0xff] %vm2139, %v2036
      %2155 = vst.msk [vmem:[#allocation3 + $0x78] sm:$0xff] %vm2139, %v2038
      %2156 = vst.msk [vmem:[#allocation3 + $0x80] sm:$0xff] %vm2139, %v2040
      %2157 = vst.msk [vmem:[#allocation3 + $0x88] sm:$0xff] %vm2139, %v2042
      %2158 = vst.msk [vmem:[#allocation3 + $0x90] sm:$0xff] %vm2139, %v2044
      %2159 = vst.msk [vmem:[#allocation3 + $0x98] sm:$0xff] %vm2139, %v2046
      %2160 = vst.msk [vmem:[#allocation3 + $0xa0] sm:$0xff] %vm2139, %v2048
      %2161 = vst.msk [vmem:[#allocation3 + $0xa8] sm:$0xff] %vm2139, %v2050
      %2162 = vst.msk [vmem:[#allocation3 + $0xb0] sm:$0xff] %vm2139, %v2052
      %2163 = vst.msk [vmem:[#allocation3 + $0xb8] sm:$0xff] %vm2139, %v2054
      %2164 = vst.msk [vmem:[#allocation3 + $0xc0] sm:$0xff] %vm2139, %v2056
      %2165 = vst.msk [vmem:[#allocation3 + $0xc8] sm:$0xff] %vm2139, %v2058
      %2166 = vst.msk [vmem:[#allocation3 + $0xd0] sm:$0xff] %vm2139, %v2060
      %2167 = vst.msk [vmem:[#allocation3 + $0xd8] sm:$0xff] %vm2139, %v2062
      %2168 = vst.msk [vmem:[#allocation3 + $0xe0] sm:$0xff] %vm2139, %v2064
      %2169 = vst.msk [vmem:[#allocation3 + $0xe8] sm:$0xff] %vm2139, %v2066
      %2170 = vst.msk [vmem:[#allocation3 + $0xf0] sm:$0xff] %vm2139, %v2068
      %2171 = vst.msk [vmem:[#allocation3 + $0xf8] sm:$0xff] %vm2139, %v2070
      %2172 = vst.msk [vmem:[#allocation3 + $0x100] sm:$0xff] %vm2139, %v2072
      %2173 = vst.msk [vmem:[#allocation3 + $0x108] sm:$0xff] %vm2139, %v2074
      %2174 = vst.msk [vmem:[#allocation3 + $0x110] sm:$0xff] %vm2139, %v2076
      %2175 = vst.msk [vmem:[#allocation3 + $0x118] sm:$0xff] %vm2139, %v2078
      %2176 = vst.msk [vmem:[#allocation3 + $0x120] sm:$0xff] %vm2139, %v2080
      %2177 = vst.msk [vmem:[#allocation3 + $0x128] sm:$0xff] %vm2139, %v2082
      %2178 = vst.msk [vmem:[#allocation3 + $0x130] sm:$0xff] %vm2139, %v2084
      %2179 = vst.msk [vmem:[#allocation3 + $0x138] sm:$0xff] %vm2139, %v2086
      %2180 = vst.msk [vmem:[#allocation3 + $0x140] sm:$0xff] %vm2139, %v2088
      %2181 = vst.msk [vmem:[#allocation3 + $0x148] sm:$0xff] %vm2139, %v2090
      %2182 = vst.msk [vmem:[#allocation3 + $0x150] sm:$0xff] %vm2139, %v2092
      %2183 = vst.msk [vmem:[#allocation3 + $0x158] sm:$0xff] %vm2139, %v2094
      %v2184 = vld [vmem:[#allocation2 + $0x6] sm:$0xff]
      %v2185 = vld [vmem:[#allocation2 + $0xe] sm:$0xff]
      %v2186 = vld [vmem:[#allocation2 + $0x16] sm:$0xff]
      %v2187 = vld [vmem:[#allocation2 + $0x1e] sm:$0xff]
      %v2188 = vld [vmem:[#allocation2 + $0x26] sm:$0xff]
      %v2189 = vld [vmem:[#allocation2 + $0x2e] sm:$0xff]
      %v2190 = vld [vmem:[#allocation2 + $0x36] sm:$0xff]
      %v2191 = vld [vmem:[#allocation2 + $0x3e] sm:$0xff]
      %v2192 = vld [vmem:[#allocation2 + $0x46] sm:$0xff]
      %v2193 = vld [vmem:[#allocation2 + $0x4e] sm:$0xff]
      %v2194 = vld [vmem:[#allocation2 + $0x56] sm:$0xff]
      %v2195 = vld [vmem:[#allocation2 + $0x5e] sm:$0xff]
      %v2196 = vld [vmem:[#allocation2 + $0x66] sm:$0xff]
      %v2197 = vld [vmem:[#allocation2 + $0x6e] sm:$0xff]
      %v2198 = vld [vmem:[#allocation2 + $0x76] sm:$0xff]
      %v2199 = vld [vmem:[#allocation2 + $0x7e] sm:$0xff]
      %v2200 = vld [vmem:[#allocation2 + $0x86] sm:$0xff]
      %v2201 = vld [vmem:[#allocation2 + $0x8e] sm:$0xff]
      %v2202 = vld [vmem:[#allocation2 + $0x96] sm:$0xff]
      %v2203 = vld [vmem:[#allocation2 + $0x9e] sm:$0xff]
      %v2204 = vld [vmem:[#allocation2 + $0xa6] sm:$0xff]
      %v2205 = vld [vmem:[#allocation2 + $0xae] sm:$0xff]
      %v2206 = vld [vmem:[#allocation2 + $0xb6] sm:$0xff]
      %v2207 = vld [vmem:[#allocation2 + $0xbe] sm:$0xff]
      %v2208 = vld [vmem:[#allocation2 + $0xc6] sm:$0xff]
      %v2209 = vld [vmem:[#allocation2 + $0xce] sm:$0xff]
      %v2210 = vld [vmem:[#allocation2 + $0xd6] sm:$0xff]
      %v2211 = vld [vmem:[#allocation2 + $0xde] sm:$0xff]
      %v2212 = vld [vmem:[#allocation2 + $0xe6] sm:$0xff]
      %v2213 = vld [vmem:[#allocation2 + $0xee] sm:$0xff]
      %v2214 = vld [vmem:[#allocation2 + $0xf6] sm:$0xff]
      %v2215 = vld [vmem:[#allocation2 + $0xfe] sm:$0xff]
      %v2216 = vld [vmem:[#allocation2 + $0x106] sm:$0xff]
      %v2217 = vld [vmem:[#allocation2 + $0x10e] sm:$0xff]
      %v2218 = vld [vmem:[#allocation2 + $0x116] sm:$0xff]
      %v2219 = vld [vmem:[#allocation2 + $0x11e] sm:$0xff]
      %v2220 = vld [vmem:[#allocation2 + $0x126] sm:$0xff]
      %v2221 = vld [vmem:[#allocation2 + $0x12e] sm:$0xff]
      %v2222 = vld [vmem:[#allocation2 + $0x136] sm:$0xff]
      %v2223 = vld [vmem:[#allocation2 + $0x13e] sm:$0xff]
      %v2224 = vld [vmem:[#allocation2 + $0x146] sm:$0xff]
      %v2225 = vld [vmem:[#allocation2 + $0x14e] sm:$0xff]
      %v2226 = vld [vmem:[#allocation2 + $0x156] sm:$0xff]
      %v2227 = vld [vmem:[#allocation2 + $0x15e] sm:$0xff]
      %2272 = vrot.lane.b32.xlu0 %v2184, 24
      %v2273 = vpop.permute.xlu0 %2272
      %2274 = vrot.lane.b32.xlu0 %v2185, 24
      %v2275 = vpop.permute.xlu0 %2274
      %2276 = vrot.lane.b32.xlu0 %v2186, 24
      %v2277 = vpop.permute.xlu0 %2276
      %2278 = vrot.lane.b32.xlu0 %v2187, 24
      %v2279 = vpop.permute.xlu0 %2278
      %2280 = vrot.lane.b32.xlu0 %v2188, 24
      %v2281 = vpop.permute.xlu0 %2280
      %2282 = vrot.lane.b32.xlu0 %v2189, 24
      %v2283 = vpop.permute.xlu0 %2282
      %2284 = vrot.lane.b32.xlu0 %v2190, 24
      %v2285 = vpop.permute.xlu0 %2284
      %2286 = vrot.lane.b32.xlu0 %v2191, 24
      %v2287 = vpop.permute.xlu0 %2286
      %2288 = vrot.lane.b32.xlu0 %v2192, 24
      %v2289 = vpop.permute.xlu0 %2288
      %2290 = vrot.lane.b32.xlu0 %v2193, 24
      %v2291 = vpop.permute.xlu0 %2290
      %2292 = vrot.lane.b32.xlu0 %v2194, 24
      %v2293 = vpop.permute.xlu0 %2292
      %2294 = vrot.lane.b32.xlu0 %v2195, 24
      %v2295 = vpop.permute.xlu0 %2294
      %2296 = vrot.lane.b32.xlu0 %v2196, 24
      %v2297 = vpop.permute.xlu0 %2296
      %2298 = vrot.lane.b32.xlu0 %v2197, 24
      %v2299 = vpop.permute.xlu0 %2298
      %2300 = vrot.lane.b32.xlu0 %v2198, 24
      %v2301 = vpop.permute.xlu0 %2300
      %2302 = vrot.lane.b32.xlu0 %v2199, 24
      %v2303 = vpop.permute.xlu0 %2302
      %2304 = vrot.lane.b32.xlu0 %v2200, 24
      %v2305 = vpop.permute.xlu0 %2304
      %2306 = vrot.lane.b32.xlu0 %v2201, 24
      %v2307 = vpop.permute.xlu0 %2306
      %2308 = vrot.lane.b32.xlu0 %v2202, 24
      %v2309 = vpop.permute.xlu0 %2308
      %2310 = vrot.lane.b32.xlu0 %v2203, 24
      %v2311 = vpop.permute.xlu0 %2310
      %2312 = vrot.lane.b32.xlu0 %v2204, 24
      %v2313 = vpop.permute.xlu0 %2312
      %2314 = vrot.lane.b32.xlu0 %v2205, 24
      %v2315 = vpop.permute.xlu0 %2314
      %2316 = vrot.lane.b32.xlu0 %v2206, 24
      %v2317 = vpop.permute.xlu0 %2316
      %2318 = vrot.lane.b32.xlu0 %v2207, 24
      %v2319 = vpop.permute.xlu0 %2318
      %2320 = vrot.lane.b32.xlu0 %v2208, 24
      %v2321 = vpop.permute.xlu0 %2320
      %2322 = vrot.lane.b32.xlu0 %v2209, 24
      %v2323 = vpop.permute.xlu0 %2322
      %2324 = vrot.lane.b32.xlu0 %v2210, 24
      %v2325 = vpop.permute.xlu0 %2324
      %2326 = vrot.lane.b32.xlu0 %v2211, 24
      %v2327 = vpop.permute.xlu0 %2326
      %2328 = vrot.lane.b32.xlu0 %v2212, 24
      %v2329 = vpop.permute.xlu0 %2328
      %2330 = vrot.lane.b32.xlu0 %v2213, 24
      %v2331 = vpop.permute.xlu0 %2330
      %2332 = vrot.lane.b32.xlu0 %v2214, 24
      %v2333 = vpop.permute.xlu0 %2332
      %2334 = vrot.lane.b32.xlu0 %v2215, 24
      %v2335 = vpop.permute.xlu0 %2334
      %2336 = vrot.lane.b32.xlu0 %v2216, 24
      %v2337 = vpop.permute.xlu0 %2336
      %2338 = vrot.lane.b32.xlu0 %v2217, 24
      %v2339 = vpop.permute.xlu0 %2338
      %2340 = vrot.lane.b32.xlu0 %v2218, 24
      %v2341 = vpop.permute.xlu0 %2340
      %2342 = vrot.lane.b32.xlu0 %v2219, 24
      %v2343 = vpop.permute.xlu0 %2342
      %2344 = vrot.lane.b32.xlu0 %v2220, 24
      %v2345 = vpop.permute.xlu0 %2344
      %2346 = vrot.lane.b32.xlu0 %v2221, 24
      %v2347 = vpop.permute.xlu0 %2346
      %2348 = vrot.lane.b32.xlu0 %v2222, 24
      %v2349 = vpop.permute.xlu0 %2348
      %2350 = vrot.lane.b32.xlu0 %v2223, 24
      %v2351 = vpop.permute.xlu0 %2350
      %2352 = vrot.lane.b32.xlu0 %v2224, 24
      %v2353 = vpop.permute.xlu0 %2352
      %2354 = vrot.lane.b32.xlu0 %v2225, 24
      %v2355 = vpop.permute.xlu0 %2354
      %2356 = vrot.lane.b32.xlu0 %v2226, 24
      %v2357 = vpop.permute.xlu0 %2356
      %2358 = vrot.lane.b32.xlu0 %v2227, 24
      %v2359 = vpop.permute.xlu0 %2358
      %vm2404 = vcmask 228544
      %2405 = vst.msk [vmem:[#allocation3] sm:$0xff] %vm2404, %v2273
      %2406 = vst.msk [vmem:[#allocation3 + $0x8] sm:$0xff] %vm2404, %v2275
      %2407 = vst.msk [vmem:[#allocation3 + $0x10] sm:$0xff] %vm2404, %v2277
      %2408 = vst.msk [vmem:[#allocation3 + $0x18] sm:$0xff] %vm2404, %v2279
      %2409 = vst.msk [vmem:[#allocation3 + $0x20] sm:$0xff] %vm2404, %v2281
      %2410 = vst.msk [vmem:[#allocation3 + $0x28] sm:$0xff] %vm2404, %v2283
      %2411 = vst.msk [vmem:[#allocation3 + $0x30] sm:$0xff] %vm2404, %v2285
      %2412 = vst.msk [vmem:[#allocation3 + $0x38] sm:$0xff] %vm2404, %v2287
      %2413 = vst.msk [vmem:[#allocation3 + $0x40] sm:$0xff] %vm2404, %v2289
      %2414 = vst.msk [vmem:[#allocation3 + $0x48] sm:$0xff] %vm2404, %v2291
      %2415 = vst.msk [vmem:[#allocation3 + $0x50] sm:$0xff] %vm2404, %v2293
      %2416 = vst.msk [vmem:[#allocation3 + $0x58] sm:$0xff] %vm2404, %v2295
      %2417 = vst.msk [vmem:[#allocation3 + $0x60] sm:$0xff] %vm2404, %v2297
      %2418 = vst.msk [vmem:[#allocation3 + $0x68] sm:$0xff] %vm2404, %v2299
      %2419 = vst.msk [vmem:[#allocation3 + $0x70] sm:$0xff] %vm2404, %v2301
      %2420 = vst.msk [vmem:[#allocation3 + $0x78] sm:$0xff] %vm2404, %v2303
      %2421 = vst.msk [vmem:[#allocation3 + $0x80] sm:$0xff] %vm2404, %v2305
      %2422 = vst.msk [vmem:[#allocation3 + $0x88] sm:$0xff] %vm2404, %v2307
      %2423 = vst.msk [vmem:[#allocation3 + $0x90] sm:$0xff] %vm2404, %v2309
      %2424 = vst.msk [vmem:[#allocation3 + $0x98] sm:$0xff] %vm2404, %v2311
      %2425 = vst.msk [vmem:[#allocation3 + $0xa0] sm:$0xff] %vm2404, %v2313
      %2426 = vst.msk [vmem:[#allocation3 + $0xa8] sm:$0xff] %vm2404, %v2315
      %2427 = vst.msk [vmem:[#allocation3 + $0xb0] sm:$0xff] %vm2404, %v2317
      %2428 = vst.msk [vmem:[#allocation3 + $0xb8] sm:$0xff] %vm2404, %v2319
      %2429 = vst.msk [vmem:[#allocation3 + $0xc0] sm:$0xff] %vm2404, %v2321
      %2430 = vst.msk [vmem:[#allocation3 + $0xc8] sm:$0xff] %vm2404, %v2323
      %2431 = vst.msk [vmem:[#allocation3 + $0xd0] sm:$0xff] %vm2404, %v2325
      %2432 = vst.msk [vmem:[#allocation3 + $0xd8] sm:$0xff] %vm2404, %v2327
      %2433 = vst.msk [vmem:[#allocation3 + $0xe0] sm:$0xff] %vm2404, %v2329
      %2434 = vst.msk [vmem:[#allocation3 + $0xe8] sm:$0xff] %vm2404, %v2331
      %2435 = vst.msk [vmem:[#allocation3 + $0xf0] sm:$0xff] %vm2404, %v2333
      %2436 = vst.msk [vmem:[#allocation3 + $0xf8] sm:$0xff] %vm2404, %v2335
      %2437 = vst.msk [vmem:[#allocation3 + $0x100] sm:$0xff] %vm2404, %v2337
      %2438 = vst.msk [vmem:[#allocation3 + $0x108] sm:$0xff] %vm2404, %v2339
      %2439 = vst.msk [vmem:[#allocation3 + $0x110] sm:$0xff] %vm2404, %v2341
      %2440 = vst.msk [vmem:[#allocation3 + $0x118] sm:$0xff] %vm2404, %v2343
      %2441 = vst.msk [vmem:[#allocation3 + $0x120] sm:$0xff] %vm2404, %v2345
      %2442 = vst.msk [vmem:[#allocation3 + $0x128] sm:$0xff] %vm2404, %v2347
      %2443 = vst.msk [vmem:[#allocation3 + $0x130] sm:$0xff] %vm2404, %v2349
      %2444 = vst.msk [vmem:[#allocation3 + $0x138] sm:$0xff] %vm2404, %v2351
      %2445 = vst.msk [vmem:[#allocation3 + $0x140] sm:$0xff] %vm2404, %v2353
      %2446 = vst.msk [vmem:[#allocation3 + $0x148] sm:$0xff] %vm2404, %v2355
      %2447 = vst.msk [vmem:[#allocation3 + $0x150] sm:$0xff] %vm2404, %v2357
      %2448 = vst.msk [vmem:[#allocation3 + $0x158] sm:$0xff] %vm2404, %v2359
      %v2449 = vld [vmem:[#allocation3] sm:$0xff]
      %v2450 = vld [vmem:[#allocation3 + $0x8] sm:$0xff]
      %v2451 = vld [vmem:[#allocation3 + $0x10] sm:$0xff]
      %v2452 = vld [vmem:[#allocation3 + $0x18] sm:$0xff]
      %v2453 = vld [vmem:[#allocation3 + $0x20] sm:$0xff]
      %v2454 = vld [vmem:[#allocation3 + $0x28] sm:$0xff]
      %v2455 = vld [vmem:[#allocation3 + $0x30] sm:$0xff]
      %v2456 = vld [vmem:[#allocation3 + $0x38] sm:$0xff]
      %v2457 = vld [vmem:[#allocation3 + $0x40] sm:$0xff]
      %v2458 = vld [vmem:[#allocation3 + $0x48] sm:$0xff]
      %v2459 = vld [vmem:[#allocation3 + $0x50] sm:$0xff]
      %v2460 = vld [vmem:[#allocation3 + $0x58] sm:$0xff]
      %v2461 = vld [vmem:[#allocation3 + $0x60] sm:$0xff]
      %v2462 = vld [vmem:[#allocation3 + $0x68] sm:$0xff]
      %v2463 = vld [vmem:[#allocation3 + $0x70] sm:$0xff]
      %v2464 = vld [vmem:[#allocation3 + $0x78] sm:$0xff]
      %v2465 = vld [vmem:[#allocation3 + $0x80] sm:$0xff]
      %v2466 = vld [vmem:[#allocation3 + $0x88] sm:$0xff]
      %v2467 = vld [vmem:[#allocation3 + $0x90] sm:$0xff]
      %v2468 = vld [vmem:[#allocation3 + $0x98] sm:$0xff]
      %v2469 = vld [vmem:[#allocation3 + $0xa0] sm:$0xff]
      %v2470 = vld [vmem:[#allocation3 + $0xa8] sm:$0xff]
      %v2471 = vld [vmem:[#allocation3 + $0xb0] sm:$0xff]
      %v2472 = vld [vmem:[#allocation3 + $0xb8] sm:$0xff]
      %v2473 = vld [vmem:[#allocation3 + $0xc0] sm:$0xff]
      %v2474 = vld [vmem:[#allocation3 + $0xc8] sm:$0xff]
      %v2475 = vld [vmem:[#allocation3 + $0xd0] sm:$0xff]
      %v2476 = vld [vmem:[#allocation3 + $0xd8] sm:$0xff]
      %v2477 = vld [vmem:[#allocation3 + $0xe0] sm:$0xff]
      %v2478 = vld [vmem:[#allocation3 + $0xe8] sm:$0xff]
      %v2479 = vld [vmem:[#allocation3 + $0xf0] sm:$0xff]
      %v2480 = vld [vmem:[#allocation3 + $0xf8] sm:$0xff]
      %vm2481 = vcmask 228352
      %2482 = vst.msk [vmem:[#allocation4] sm:$0xff] %vm2481, %v2449
      %2483 = vst.msk [vmem:[#allocation4 + $0x10] sm:$0xff] %vm2481, %v2450
      %2484 = vst.msk [vmem:[#allocation4 + $0x20] sm:$0xff] %vm2481, %v2451
      %2485 = vst.msk [vmem:[#allocation4 + $0x30] sm:$0xff] %vm2481, %v2452
      %2486 = vst.msk [vmem:[#allocation4 + $0x40] sm:$0xff] %vm2481, %v2453
      %2487 = vst.msk [vmem:[#allocation4 + $0x50] sm:$0xff] %vm2481, %v2454
      %2488 = vst.msk [vmem:[#allocation4 + $0x60] sm:$0xff] %vm2481, %v2455
      %2489 = vst.msk [vmem:[#allocation4 + $0x70] sm:$0xff] %vm2481, %v2456
      %2490 = vst.msk [vmem:[#allocation4 + $0x80] sm:$0xff] %vm2481, %v2457
      %2491 = vst.msk [vmem:[#allocation4 + $0x90] sm:$0xff] %vm2481, %v2458
      %2492 = vst.msk [vmem:[#allocation4 + $0xa0] sm:$0xff] %vm2481, %v2459
      %2493 = vst.msk [vmem:[#allocation4 + $0xb0] sm:$0xff] %vm2481, %v2460
      %2494 = vst.msk [vmem:[#allocation4 + $0xc0] sm:$0xff] %vm2481, %v2461
      %2495 = vst.msk [vmem:[#allocation4 + $0xd0] sm:$0xff] %vm2481, %v2462
      %2496 = vst.msk [vmem:[#allocation4 + $0xe0] sm:$0xff] %vm2481, %v2463
      %2497 = vst.msk [vmem:[#allocation4 + $0xf0] sm:$0xff] %vm2481, %v2464
      %2498 = vst.msk [vmem:[#allocation4 + $0x100] sm:$0xff] %vm2481, %v2465
      %2499 = vst.msk [vmem:[#allocation4 + $0x110] sm:$0xff] %vm2481, %v2466
      %2500 = vst.msk [vmem:[#allocation4 + $0x120] sm:$0xff] %vm2481, %v2467
      %2501 = vst.msk [vmem:[#allocation4 + $0x130] sm:$0xff] %vm2481, %v2468
      %2502 = vst.msk [vmem:[#allocation4 + $0x140] sm:$0xff] %vm2481, %v2469
      %2503 = vst.msk [vmem:[#allocation4 + $0x150] sm:$0xff] %vm2481, %v2470
      %2504 = vst.msk [vmem:[#allocation4 + $0x160] sm:$0xff] %vm2481, %v2471
      %2505 = vst.msk [vmem:[#allocation4 + $0x170] sm:$0xff] %vm2481, %v2472
      %2506 = vst.msk [vmem:[#allocation4 + $0x180] sm:$0xff] %vm2481, %v2473
      %2507 = vst.msk [vmem:[#allocation4 + $0x190] sm:$0xff] %vm2481, %v2474
      %2508 = vst.msk [vmem:[#allocation4 + $0x1a0] sm:$0xff] %vm2481, %v2475
      %2509 = vst.msk [vmem:[#allocation4 + $0x1b0] sm:$0xff] %vm2481, %v2476
      %2510 = vst.msk [vmem:[#allocation4 + $0x1c0] sm:$0xff] %vm2481, %v2477
      %2511 = vst.msk [vmem:[#allocation4 + $0x1d0] sm:$0xff] %vm2481, %v2478
      %2512 = vst.msk [vmem:[#allocation4 + $0x1e0] sm:$0xff] %vm2481, %v2479
      %2513 = vst.msk [vmem:[#allocation4 + $0x1f0] sm:$0xff] %vm2481, %v2480
      %v2514 = vld [vmem:[#allocation3 + $0x10] sm:$0xff]
      %v2515 = vld [vmem:[#allocation3 + $0x18] sm:$0xff]
      %v2516 = vld [vmem:[#allocation3 + $0x20] sm:$0xff]
      %v2517 = vld [vmem:[#allocation3 + $0x28] sm:$0xff]
      %v2518 = vld [vmem:[#allocation3 + $0x30] sm:$0xff]
      %v2519 = vld [vmem:[#allocation3 + $0x38] sm:$0xff]
      %v2520 = vld [vmem:[#allocation3 + $0x40] sm:$0xff]
      %v2521 = vld [vmem:[#allocation3 + $0x48] sm:$0xff]
      %v2522 = vld [vmem:[#allocation3 + $0x50] sm:$0xff]
      %v2523 = vld [vmem:[#allocation3 + $0x58] sm:$0xff]
      %v2524 = vld [vmem:[#allocation3 + $0x60] sm:$0xff]
      %v2525 = vld [vmem:[#allocation3 + $0x68] sm:$0xff]
      %v2526 = vld [vmem:[#allocation3 + $0x70] sm:$0xff]
      %v2527 = vld [vmem:[#allocation3 + $0x78] sm:$0xff]
      %v2528 = vld [vmem:[#allocation3 + $0x80] sm:$0xff]
      %v2529 = vld [vmem:[#allocation3 + $0x88] sm:$0xff]
      %v2530 = vld [vmem:[#allocation3 + $0x90] sm:$0xff]
      %v2531 = vld [vmem:[#allocation3 + $0x98] sm:$0xff]
      %v2532 = vld [vmem:[#allocation3 + $0xa0] sm:$0xff]
      %v2533 = vld [vmem:[#allocation3 + $0xa8] sm:$0xff]
      %v2534 = vld [vmem:[#allocation3 + $0xb0] sm:$0xff]
      %v2535 = vld [vmem:[#allocation3 + $0xb8] sm:$0xff]
      %v2536 = vld [vmem:[#allocation3 + $0xc0] sm:$0xff]
      %v2537 = vld [vmem:[#allocation3 + $0xc8] sm:$0xff]
      %v2538 = vld [vmem:[#allocation3 + $0xd0] sm:$0xff]
      %v2539 = vld [vmem:[#allocation3 + $0xd8] sm:$0xff]
      %v2540 = vld [vmem:[#allocation3 + $0xe0] sm:$0xff]
      %v2541 = vld [vmem:[#allocation3 + $0xe8] sm:$0xff]
      %v2542 = vld [vmem:[#allocation3 + $0xf0] sm:$0xff]
      %v2543 = vld [vmem:[#allocation3 + $0xf8] sm:$0xff]
      %v2544 = vld [vmem:[#allocation3 + $0x100] sm:$0xff]
      %v2545 = vld [vmem:[#allocation3 + $0x108] sm:$0xff]
      %2578 = vrot.lane.b32.xlu0 %v2514, 28
      %v2579 = vpop.permute.xlu0 %2578
      %2580 = vrot.lane.b32.xlu0 %v2515, 28
      %v2581 = vpop.permute.xlu0 %2580
      %2582 = vrot.lane.b32.xlu0 %v2516, 28
      %v2583 = vpop.permute.xlu0 %2582
      %2584 = vrot.lane.b32.xlu0 %v2517, 28
      %v2585 = vpop.permute.xlu0 %2584
      %2586 = vrot.lane.b32.xlu0 %v2518, 28
      %v2587 = vpop.permute.xlu0 %2586
      %2588 = vrot.lane.b32.xlu0 %v2519, 28
      %v2589 = vpop.permute.xlu0 %2588
      %2590 = vrot.lane.b32.xlu0 %v2520, 28
      %v2591 = vpop.permute.xlu0 %2590
      %2592 = vrot.lane.b32.xlu0 %v2521, 28
      %v2593 = vpop.permute.xlu0 %2592
      %2594 = vrot.lane.b32.xlu0 %v2522, 28
      %v2595 = vpop.permute.xlu0 %2594
      %2596 = vrot.lane.b32.xlu0 %v2523, 28
      %v2597 = vpop.permute.xlu0 %2596
      %2598 = vrot.lane.b32.xlu0 %v2524, 28
      %v2599 = vpop.permute.xlu0 %2598
      %2600 = vrot.lane.b32.xlu0 %v2525, 28
      %v2601 = vpop.permute.xlu0 %2600
      %2602 = vrot.lane.b32.xlu0 %v2526, 28
      %v2603 = vpop.permute.xlu0 %2602
      %2604 = vrot.lane.b32.xlu0 %v2527, 28
      %v2605 = vpop.permute.xlu0 %2604
      %2606 = vrot.lane.b32.xlu0 %v2528, 28
      %v2607 = vpop.permute.xlu0 %2606
      %2608 = vrot.lane.b32.xlu0 %v2529, 28
      %v2609 = vpop.permute.xlu0 %2608
      %2610 = vrot.lane.b32.xlu0 %v2530, 28
      %v2611 = vpop.permute.xlu0 %2610
      %2612 = vrot.lane.b32.xlu0 %v2531, 28
      %v2613 = vpop.permute.xlu0 %2612
      %2614 = vrot.lane.b32.xlu0 %v2532, 28
      %v2615 = vpop.permute.xlu0 %2614
      %2616 = vrot.lane.b32.xlu0 %v2533, 28
      %v2617 = vpop.permute.xlu0 %2616
      %2618 = vrot.lane.b32.xlu0 %v2534, 28
      %v2619 = vpop.permute.xlu0 %2618
      %2620 = vrot.lane.b32.xlu0 %v2535, 28
      %v2621 = vpop.permute.xlu0 %2620
      %2622 = vrot.lane.b32.xlu0 %v2536, 28
      %v2623 = vpop.permute.xlu0 %2622
      %2624 = vrot.lane.b32.xlu0 %v2537, 28
      %v2625 = vpop.permute.xlu0 %2624
      %2626 = vrot.lane.b32.xlu0 %v2538, 28
      %v2627 = vpop.permute.xlu0 %2626
      %2628 = vrot.lane.b32.xlu0 %v2539, 28
      %v2629 = vpop.permute.xlu0 %2628
      %2630 = vrot.lane.b32.xlu0 %v2540, 28
      %v2631 = vpop.permute.xlu0 %2630
      %2632 = vrot.lane.b32.xlu0 %v2541, 28
      %v2633 = vpop.permute.xlu0 %2632
      %2634 = vrot.lane.b32.xlu0 %v2542, 28
      %v2635 = vpop.permute.xlu0 %2634
      %2636 = vrot.lane.b32.xlu0 %v2543, 28
      %v2637 = vpop.permute.xlu0 %2636
      %2638 = vrot.lane.b32.xlu0 %v2544, 28
      %v2639 = vpop.permute.xlu0 %2638
      %2640 = vrot.lane.b32.xlu0 %v2545, 28
      %v2641 = vpop.permute.xlu0 %2640
      %vm2674 = vcmask 457952
      %2675 = vst.msk [vmem:[#allocation4] sm:$0xff] %vm2674, %v2579
      %2676 = vst.msk [vmem:[#allocation4 + $0x10] sm:$0xff] %vm2674, %v2581
      %2677 = vst.msk [vmem:[#allocation4 + $0x20] sm:$0xff] %vm2674, %v2583
      %2678 = vst.msk [vmem:[#allocation4 + $0x30] sm:$0xff] %vm2674, %v2585
      %2679 = vst.msk [vmem:[#allocation4 + $0x40] sm:$0xff] %vm2674, %v2587
      %2680 = vst.msk [vmem:[#allocation4 + $0x50] sm:$0xff] %vm2674, %v2589
      %2681 = vst.msk [vmem:[#allocation4 + $0x60] sm:$0xff] %vm2674, %v2591
      %2682 = vst.msk [vmem:[#allocation4 + $0x70] sm:$0xff] %vm2674, %v2593
      %2683 = vst.msk [vmem:[#allocation4 + $0x80] sm:$0xff] %vm2674, %v2595
      %2684 = vst.msk [vmem:[#allocation4 + $0x90] sm:$0xff] %vm2674, %v2597
      %2685 = vst.msk [vmem:[#allocation4 + $0xa0] sm:$0xff] %vm2674, %v2599
      %2686 = vst.msk [vmem:[#allocation4 + $0xb0] sm:$0xff] %vm2674, %v2601
      %2687 = vst.msk [vmem:[#allocation4 + $0xc0] sm:$0xff] %vm2674, %v2603
      %2688 = vst.msk [vmem:[#allocation4 + $0xd0] sm:$0xff] %vm2674, %v2605
      %2689 = vst.msk [vmem:[#allocation4 + $0xe0] sm:$0xff] %vm2674, %v2607
      %2690 = vst.msk [vmem:[#allocation4 + $0xf0] sm:$0xff] %vm2674, %v2609
      %2691 = vst.msk [vmem:[#allocation4 + $0x100] sm:$0xff] %vm2674, %v2611
      %2692 = vst.msk [vmem:[#allocation4 + $0x110] sm:$0xff] %vm2674, %v2613
      %2693 = vst.msk [vmem:[#allocation4 + $0x120] sm:$0xff] %vm2674, %v2615
      %2694 = vst.msk [vmem:[#allocation4 + $0x130] sm:$0xff] %vm2674, %v2617
      %2695 = vst.msk [vmem:[#allocation4 + $0x140] sm:$0xff] %vm2674, %v2619
      %2696 = vst.msk [vmem:[#allocation4 + $0x150] sm:$0xff] %vm2674, %v2621
      %2697 = vst.msk [vmem:[#allocation4 + $0x160] sm:$0xff] %vm2674, %v2623
      %2698 = vst.msk [vmem:[#allocation4 + $0x170] sm:$0xff] %vm2674, %v2625
      %2699 = vst.msk [vmem:[#allocation4 + $0x180] sm:$0xff] %vm2674, %v2627
      %2700 = vst.msk [vmem:[#allocation4 + $0x190] sm:$0xff] %vm2674, %v2629
      %2701 = vst.msk [vmem:[#allocation4 + $0x1a0] sm:$0xff] %vm2674, %v2631
      %2702 = vst.msk [vmem:[#allocation4 + $0x1b0] sm:$0xff] %vm2674, %v2633
      %2703 = vst.msk [vmem:[#allocation4 + $0x1c0] sm:$0xff] %vm2674, %v2635
      %2704 = vst.msk [vmem:[#allocation4 + $0x1d0] sm:$0xff] %vm2674, %v2637
      %2705 = vst.msk [vmem:[#allocation4 + $0x1e0] sm:$0xff] %vm2674, %v2639
      %2706 = vst.msk [vmem:[#allocation4 + $0x1f0] sm:$0xff] %vm2674, %v2641
      %v2707 = vld [vmem:[#allocation3 + $0x20] sm:$0xff]
      %v2708 = vld [vmem:[#allocation3 + $0x28] sm:$0xff]
      %v2709 = vld [vmem:[#allocation3 + $0x30] sm:$0xff]
      %v2710 = vld [vmem:[#allocation3 + $0x38] sm:$0xff]
      %v2711 = vld [vmem:[#allocation3 + $0x40] sm:$0xff]
      %v2712 = vld [vmem:[#allocation3 + $0x48] sm:$0xff]
      %v2713 = vld [vmem:[#allocation3 + $0x50] sm:$0xff]
      %v2714 = vld [vmem:[#allocation3 + $0x58] sm:$0xff]
      %v2715 = vld [vmem:[#allocation3 + $0x60] sm:$0xff]
      %v2716 = vld [vmem:[#allocation3 + $0x68] sm:$0xff]
      %v2717 = vld [vmem:[#allocation3 + $0x70] sm:$0xff]
      %v2718 = vld [vmem:[#allocation3 + $0x78] sm:$0xff]
      %v2719 = vld [vmem:[#allocation3 + $0x80] sm:$0xff]
      %v2720 = vld [vmem:[#allocation3 + $0x88] sm:$0xff]
      %v2721 = vld [vmem:[#allocation3 + $0x90] sm:$0xff]
      %v2722 = vld [vmem:[#allocation3 + $0x98] sm:$0xff]
      %v2723 = vld [vmem:[#allocation3 + $0xa0] sm:$0xff]
      %v2724 = vld [vmem:[#allocation3 + $0xa8] sm:$0xff]
      %v2725 = vld [vmem:[#allocation3 + $0xb0] sm:$0xff]
      %v2726 = vld [vmem:[#allocation3 + $0xb8] sm:$0xff]
      %v2727 = vld [vmem:[#allocation3 + $0xc0] sm:$0xff]
      %v2728 = vld [vmem:[#allocation3 + $0xc8] sm:$0xff]
      %v2729 = vld [vmem:[#allocation3 + $0xd0] sm:$0xff]
      %v2730 = vld [vmem:[#allocation3 + $0xd8] sm:$0xff]
      %v2731 = vld [vmem:[#allocation3 + $0xe0] sm:$0xff]
      %v2732 = vld [vmem:[#allocation3 + $0xe8] sm:$0xff]
      %v2733 = vld [vmem:[#allocation3 + $0xf0] sm:$0xff]
      %v2734 = vld [vmem:[#allocation3 + $0xf8] sm:$0xff]
      %v2735 = vld [vmem:[#allocation3 + $0x100] sm:$0xff]
      %v2736 = vld [vmem:[#allocation3 + $0x108] sm:$0xff]
      %v2737 = vld [vmem:[#allocation3 + $0x110] sm:$0xff]
      %v2738 = vld [vmem:[#allocation3 + $0x118] sm:$0xff]
      %2771 = vrot.lane.b32.xlu0 %v2707, 56
      %v2772 = vpop.permute.xlu0 %2771
      %2773 = vrot.lane.b32.xlu0 %v2708, 56
      %v2774 = vpop.permute.xlu0 %2773
      %2775 = vrot.lane.b32.xlu0 %v2709, 56
      %v2776 = vpop.permute.xlu0 %2775
      %2777 = vrot.lane.b32.xlu0 %v2710, 56
      %v2778 = vpop.permute.xlu0 %2777
      %2779 = vrot.lane.b32.xlu0 %v2711, 56
      %v2780 = vpop.permute.xlu0 %2779
      %2781 = vrot.lane.b32.xlu0 %v2712, 56
      %v2782 = vpop.permute.xlu0 %2781
      %2783 = vrot.lane.b32.xlu0 %v2713, 56
      %v2784 = vpop.permute.xlu0 %2783
      %2785 = vrot.lane.b32.xlu0 %v2714, 56
      %v2786 = vpop.permute.xlu0 %2785
      %2787 = vrot.lane.b32.xlu0 %v2715, 56
      %v2788 = vpop.permute.xlu0 %2787
      %2789 = vrot.lane.b32.xlu0 %v2716, 56
      %v2790 = vpop.permute.xlu0 %2789
      %2791 = vrot.lane.b32.xlu0 %v2717, 56
      %v2792 = vpop.permute.xlu0 %2791
      %2793 = vrot.lane.b32.xlu0 %v2718, 56
      %v2794 = vpop.permute.xlu0 %2793
      %2795 = vrot.lane.b32.xlu0 %v2719, 56
      %v2796 = vpop.permute.xlu0 %2795
      %2797 = vrot.lane.b32.xlu0 %v2720, 56
      %v2798 = vpop.permute.xlu0 %2797
      %2799 = vrot.lane.b32.xlu0 %v2721, 56
      %v2800 = vpop.permute.xlu0 %2799
      %2801 = vrot.lane.b32.xlu0 %v2722, 56
      %v2802 = vpop.permute.xlu0 %2801
      %2803 = vrot.lane.b32.xlu0 %v2723, 56
      %v2804 = vpop.permute.xlu0 %2803
      %2805 = vrot.lane.b32.xlu0 %v2724, 56
      %v2806 = vpop.permute.xlu0 %2805
      %2807 = vrot.lane.b32.xlu0 %v2725, 56
      %v2808 = vpop.permute.xlu0 %2807
      %2809 = vrot.lane.b32.xlu0 %v2726, 56
      %v2810 = vpop.permute.xlu0 %2809
      %2811 = vrot.lane.b32.xlu0 %v2727, 56
      %v2812 = vpop.permute.xlu0 %2811
      %2813 = vrot.lane.b32.xlu0 %v2728, 56
      %v2814 = vpop.permute.xlu0 %2813
      %2815 = vrot.lane.b32.xlu0 %v2729, 56
      %v2816 = vpop.permute.xlu0 %2815
      %2817 = vrot.lane.b32.xlu0 %v2730, 56
      %v2818 = vpop.permute.xlu0 %2817
      %2819 = vrot.lane.b32.xlu0 %v2731, 56
      %v2820 = vpop.permute.xlu0 %2819
      %2821 = vrot.lane.b32.xlu0 %v2732, 56
      %v2822 = vpop.permute.xlu0 %2821
      %2823 = vrot.lane.b32.xlu0 %v2733, 56
      %v2824 = vpop.permute.xlu0 %2823
      %2825 = vrot.lane.b32.xlu0 %v2734, 56
      %v2826 = vpop.permute.xlu0 %2825
      %2827 = vrot.lane.b32.xlu0 %v2735, 56
      %v2828 = vpop.permute.xlu0 %2827
      %2829 = vrot.lane.b32.xlu0 %v2736, 56
      %v2830 = vpop.permute.xlu0 %2829
      %2831 = vrot.lane.b32.xlu0 %v2737, 56
      %v2832 = vpop.permute.xlu0 %2831
      %2833 = vrot.lane.b32.xlu0 %v2738, 56
      %v2834 = vpop.permute.xlu0 %2833
      %vm2867 = vcmask 687552
      %2868 = vst.msk [vmem:[#allocation4] sm:$0xff] %vm2867, %v2772
      %2869 = vst.msk [vmem:[#allocation4 + $0x10] sm:$0xff] %vm2867, %v2774
      %2870 = vst.msk [vmem:[#allocation4 + $0x20] sm:$0xff] %vm2867, %v2776
      %2871 = vst.msk [vmem:[#allocation4 + $0x30] sm:$0xff] %vm2867, %v2778
      %2872 = vst.msk [vmem:[#allocation4 + $0x40] sm:$0xff] %vm2867, %v2780
      %2873 = vst.msk [vmem:[#allocation4 + $0x50] sm:$0xff] %vm2867, %v2782
      %2874 = vst.msk [vmem:[#allocation4 + $0x60] sm:$0xff] %vm2867, %v2784
      %2875 = vst.msk [vmem:[#allocation4 + $0x70] sm:$0xff] %vm2867, %v2786
      %2876 = vst.msk [vmem:[#allocation4 + $0x80] sm:$0xff] %vm2867, %v2788
      %2877 = vst.msk [vmem:[#allocation4 + $0x90] sm:$0xff] %vm2867, %v2790
      %2878 = vst.msk [vmem:[#allocation4 + $0xa0] sm:$0xff] %vm2867, %v2792
      %2879 = vst.msk [vmem:[#allocation4 + $0xb0] sm:$0xff] %vm2867, %v2794
      %2880 = vst.msk [vmem:[#allocation4 + $0xc0] sm:$0xff] %vm2867, %v2796
      %2881 = vst.msk [vmem:[#allocation4 + $0xd0] sm:$0xff] %vm2867, %v2798
      %2882 = vst.msk [vmem:[#allocation4 + $0xe0] sm:$0xff] %vm2867, %v2800
      %2883 = vst.msk [vmem:[#allocation4 + $0xf0] sm:$0xff] %vm2867, %v2802
      %2884 = vst.msk [vmem:[#allocation4 + $0x100] sm:$0xff] %vm2867, %v2804
      %2885 = vst.msk [vmem:[#allocation4 + $0x110] sm:$0xff] %vm2867, %v2806
      %2886 = vst.msk [vmem:[#allocation4 + $0x120] sm:$0xff] %vm2867, %v2808
      %2887 = vst.msk [vmem:[#allocation4 + $0x130] sm:$0xff] %vm2867, %v2810
      %2888 = vst.msk [vmem:[#allocation4 + $0x140] sm:$0xff] %vm2867, %v2812
      %2889 = vst.msk [vmem:[#allocation4 + $0x150] sm:$0xff] %vm2867, %v2814
      %2890 = vst.msk [vmem:[#allocation4 + $0x160] sm:$0xff] %vm2867, %v2816
      %2891 = vst.msk [vmem:[#allocation4 + $0x170] sm:$0xff] %vm2867, %v2818
      %2892 = vst.msk [vmem:[#allocation4 + $0x180] sm:$0xff] %vm2867, %v2820
      %2893 = vst.msk [vmem:[#allocation4 + $0x190] sm:$0xff] %vm2867, %v2822
      %2894 = vst.msk [vmem:[#allocation4 + $0x1a0] sm:$0xff] %vm2867, %v2824
      %2895 = vst.msk [vmem:[#allocation4 + $0x1b0] sm:$0xff] %vm2867, %v2826
      %2896 = vst.msk [vmem:[#allocation4 + $0x1c0] sm:$0xff] %vm2867, %v2828
      %2897 = vst.msk [vmem:[#allocation4 + $0x1d0] sm:$0xff] %vm2867, %v2830
      %2898 = vst.msk [vmem:[#allocation4 + $0x1e0] sm:$0xff] %vm2867, %v2832
      %2899 = vst.msk [vmem:[#allocation4 + $0x1f0] sm:$0xff] %vm2867, %v2834
      %v2900 = vld [vmem:[#allocation3 + $0x30] sm:$0xff]
      %v2901 = vld [vmem:[#allocation3 + $0x38] sm:$0xff]
      %v2902 = vld [vmem:[#allocation3 + $0x40] sm:$0xff]
      %v2903 = vld [vmem:[#allocation3 + $0x48] sm:$0xff]
      %v2904 = vld [vmem:[#allocation3 + $0x50] sm:$0xff]
      %v2905 = vld [vmem:[#allocation3 + $0x58] sm:$0xff]
      %v2906 = vld [vmem:[#allocation3 + $0x60] sm:$0xff]
      %v2907 = vld [vmem:[#allocation3 + $0x68] sm:$0xff]
      %v2908 = vld [vmem:[#allocation3 + $0x70] sm:$0xff]
      %v2909 = vld [vmem:[#allocation3 + $0x78] sm:$0xff]
      %v2910 = vld [vmem:[#allocation3 + $0x80] sm:$0xff]
      %v2911 = vld [vmem:[#allocation3 + $0x88] sm:$0xff]
      %v2912 = vld [vmem:[#allocation3 + $0x90] sm:$0xff]
      %v2913 = vld [vmem:[#allocation3 + $0x98] sm:$0xff]
      %v2914 = vld [vmem:[#allocation3 + $0xa0] sm:$0xff]
      %v2915 = vld [vmem:[#allocation3 + $0xa8] sm:$0xff]
      %v2916 = vld [vmem:[#allocation3 + $0xb0] sm:$0xff]
      %v2917 = vld [vmem:[#allocation3 + $0xb8] sm:$0xff]
      %v2918 = vld [vmem:[#allocation3 + $0xc0] sm:$0xff]
      %v2919 = vld [vmem:[#allocation3 + $0xc8] sm:$0xff]
      %v2920 = vld [vmem:[#allocation3 + $0xd0] sm:$0xff]
      %v2921 = vld [vmem:[#allocation3 + $0xd8] sm:$0xff]
      %v2922 = vld [vmem:[#allocation3 + $0xe0] sm:$0xff]
      %v2923 = vld [vmem:[#allocation3 + $0xe8] sm:$0xff]
      %v2924 = vld [vmem:[#allocation3 + $0xf0] sm:$0xff]
      %v2925 = vld [vmem:[#allocation3 + $0xf8] sm:$0xff]
      %v2926 = vld [vmem:[#allocation3 + $0x100] sm:$0xff]
      %v2927 = vld [vmem:[#allocation3 + $0x108] sm:$0xff]
      %v2928 = vld [vmem:[#allocation3 + $0x110] sm:$0xff]
      %v2929 = vld [vmem:[#allocation3 + $0x118] sm:$0xff]
      %v2930 = vld [vmem:[#allocation3 + $0x120] sm:$0xff]
      %v2931 = vld [vmem:[#allocation3 + $0x128] sm:$0xff]
      %2964 = vrot.lane.b32.xlu0 %v2900, 84
      %v2965 = vpop.permute.xlu0 %2964
      %2966 = vrot.lane.b32.xlu0 %v2901, 84
      %v2967 = vpop.permute.xlu0 %2966
      %2968 = vrot.lane.b32.xlu0 %v2902, 84
      %v2969 = vpop.permute.xlu0 %2968
      %2970 = vrot.lane.b32.xlu0 %v2903, 84
      %v2971 = vpop.permute.xlu0 %2970
      %2972 = vrot.lane.b32.xlu0 %v2904, 84
      %v2973 = vpop.permute.xlu0 %2972
      %2974 = vrot.lane.b32.xlu0 %v2905, 84
      %v2975 = vpop.permute.xlu0 %2974
      %2976 = vrot.lane.b32.xlu0 %v2906, 84
      %v2977 = vpop.permute.xlu0 %2976
      %2978 = vrot.lane.b32.xlu0 %v2907, 84
      %v2979 = vpop.permute.xlu0 %2978
      %2980 = vrot.lane.b32.xlu0 %v2908, 84
      %v2981 = vpop.permute.xlu0 %2980
      %2982 = vrot.lane.b32.xlu0 %v2909, 84
      %v2983 = vpop.permute.xlu0 %2982
      %2984 = vrot.lane.b32.xlu0 %v2910, 84
      %v2985 = vpop.permute.xlu0 %2984
      %2986 = vrot.lane.b32.xlu0 %v2911, 84
      %v2987 = vpop.permute.xlu0 %2986
      %2988 = vrot.lane.b32.xlu0 %v2912, 84
      %v2989 = vpop.permute.xlu0 %2988
      %2990 = vrot.lane.b32.xlu0 %v2913, 84
      %v2991 = vpop.permute.xlu0 %2990
      %2992 = vrot.lane.b32.xlu0 %v2914, 84
      %v2993 = vpop.permute.xlu0 %2992
      %2994 = vrot.lane.b32.xlu0 %v2915, 84
      %v2995 = vpop.permute.xlu0 %2994
      %2996 = vrot.lane.b32.xlu0 %v2916, 84
      %v2997 = vpop.permute.xlu0 %2996
      %2998 = vrot.lane.b32.xlu0 %v2917, 84
      %v2999 = vpop.permute.xlu0 %2998
      %3000 = vrot.lane.b32.xlu0 %v2918, 84
      %v3001 = vpop.permute.xlu0 %3000
      %3002 = vrot.lane.b32.xlu0 %v2919, 84
      %v3003 = vpop.permute.xlu0 %3002
      %3004 = vrot.lane.b32.xlu0 %v2920, 84
      %v3005 = vpop.permute.xlu0 %3004
      %3006 = vrot.lane.b32.xlu0 %v2921, 84
      %v3007 = vpop.permute.xlu0 %3006
      %3008 = vrot.lane.b32.xlu0 %v2922, 84
      %v3009 = vpop.permute.xlu0 %3008
      %3010 = vrot.lane.b32.xlu0 %v2923, 84
      %v3011 = vpop.permute.xlu0 %3010
      %3012 = vrot.lane.b32.xlu0 %v2924, 84
      %v3013 = vpop.permute.xlu0 %3012
      %3014 = vrot.lane.b32.xlu0 %v2925, 84
      %v3015 = vpop.permute.xlu0 %3014
      %3016 = vrot.lane.b32.xlu0 %v2926, 84
      %v3017 = vpop.permute.xlu0 %3016
      %3018 = vrot.lane.b32.xlu0 %v2927, 84
      %v3019 = vpop.permute.xlu0 %3018
      %3020 = vrot.lane.b32.xlu0 %v2928, 84
      %v3021 = vpop.permute.xlu0 %3020
      %3022 = vrot.lane.b32.xlu0 %v2929, 84
      %v3023 = vpop.permute.xlu0 %3022
      %3024 = vrot.lane.b32.xlu0 %v2930, 84
      %v3025 = vpop.permute.xlu0 %3024
      %3026 = vrot.lane.b32.xlu0 %v2931, 84
      %v3027 = vpop.permute.xlu0 %3026
      %vm3060 = vcmask 917152
      %3061 = vst.msk [vmem:[#allocation4] sm:$0xff] %vm3060, %v2965
      %3062 = vst.msk [vmem:[#allocation4 + $0x10] sm:$0xff] %vm3060, %v2967
      %3063 = vst.msk [vmem:[#allocation4 + $0x20] sm:$0xff] %vm3060, %v2969
      %3064 = vst.msk [vmem:[#allocation4 + $0x30] sm:$0xff] %vm3060, %v2971
      %3065 = vst.msk [vmem:[#allocation4 + $0x40] sm:$0xff] %vm3060, %v2973
      %3066 = vst.msk [vmem:[#allocation4 + $0x50] sm:$0xff] %vm3060, %v2975
      %3067 = vst.msk [vmem:[#allocation4 + $0x60] sm:$0xff] %vm3060, %v2977
      %3068 = vst.msk [vmem:[#allocation4 + $0x70] sm:$0xff] %vm3060, %v2979
      %3069 = vst.msk [vmem:[#allocation4 + $0x80] sm:$0xff] %vm3060, %v2981
      %3070 = vst.msk [vmem:[#allocation4 + $0x90] sm:$0xff] %vm3060, %v2983
      %3071 = vst.msk [vmem:[#allocation4 + $0xa0] sm:$0xff] %vm3060, %v2985
      %3072 = vst.msk [vmem:[#allocation4 + $0xb0] sm:$0xff] %vm3060, %v2987
      %3073 = vst.msk [vmem:[#allocation4 + $0xc0] sm:$0xff] %vm3060, %v2989
      %3074 = vst.msk [vmem:[#allocation4 + $0xd0] sm:$0xff] %vm3060, %v2991
      %3075 = vst.msk [vmem:[#allocation4 + $0xe0] sm:$0xff] %vm3060, %v2993
      %3076 = vst.msk [vmem:[#allocation4 + $0xf0] sm:$0xff] %vm3060, %v2995
      %3077 = vst.msk [vmem:[#allocation4 + $0x100] sm:$0xff] %vm3060, %v2997
      %3078 = vst.msk [vmem:[#allocation4 + $0x110] sm:$0xff] %vm3060, %v2999
      %3079 = vst.msk [vmem:[#allocation4 + $0x120] sm:$0xff] %vm3060, %v3001
      %3080 = vst.msk [vmem:[#allocation4 + $0x130] sm:$0xff] %vm3060, %v3003
      %3081 = vst.msk [vmem:[#allocation4 + $0x140] sm:$0xff] %vm3060, %v3005
      %3082 = vst.msk [vmem:[#allocation4 + $0x150] sm:$0xff] %vm3060, %v3007
      %3083 = vst.msk [vmem:[#allocation4 + $0x160] sm:$0xff] %vm3060, %v3009
      %3084 = vst.msk [vmem:[#allocation4 + $0x170] sm:$0xff] %vm3060, %v3011
      %3085 = vst.msk [vmem:[#allocation4 + $0x180] sm:$0xff] %vm3060, %v3013
      %3086 = vst.msk [vmem:[#allocation4 + $0x190] sm:$0xff] %vm3060, %v3015
      %3087 = vst.msk [vmem:[#allocation4 + $0x1a0] sm:$0xff] %vm3060, %v3017
      %3088 = vst.msk [vmem:[#allocation4 + $0x1b0] sm:$0xff] %vm3060, %v3019
      %3089 = vst.msk [vmem:[#allocation4 + $0x1c0] sm:$0xff] %vm3060, %v3021
      %3090 = vst.msk [vmem:[#allocation4 + $0x1d0] sm:$0xff] %vm3060, %v3023
      %3091 = vst.msk [vmem:[#allocation4 + $0x1e0] sm:$0xff] %vm3060, %v3025
      %3092 = vst.msk [vmem:[#allocation4 + $0x1f0] sm:$0xff] %vm3060, %v3027
      %v3093 = vld [vmem:[#allocation3 + $0x40] sm:$0xff]
      %v3094 = vld [vmem:[#allocation3 + $0x48] sm:$0xff]
      %v3095 = vld [vmem:[#allocation3 + $0x50] sm:$0xff]
      %v3096 = vld [vmem:[#allocation3 + $0x58] sm:$0xff]
      %v3097 = vld [vmem:[#allocation3 + $0x60] sm:$0xff]
      %v3098 = vld [vmem:[#allocation3 + $0x68] sm:$0xff]
      %v3099 = vld [vmem:[#allocation3 + $0x70] sm:$0xff]
      %v3100 = vld [vmem:[#allocation3 + $0x78] sm:$0xff]
      %v3101 = vld [vmem:[#allocation3 + $0x80] sm:$0xff]
      %v3102 = vld [vmem:[#allocation3 + $0x88] sm:$0xff]
      %v3103 = vld [vmem:[#allocation3 + $0x90] sm:$0xff]
      %v3104 = vld [vmem:[#allocation3 + $0x98] sm:$0xff]
      %v3105 = vld [vmem:[#allocation3 + $0xa0] sm:$0xff]
      %v3106 = vld [vmem:[#allocation3 + $0xa8] sm:$0xff]
      %v3107 = vld [vmem:[#allocation3 + $0xb0] sm:$0xff]
      %v3108 = vld [vmem:[#allocation3 + $0xb8] sm:$0xff]
      %v3109 = vld [vmem:[#allocation3 + $0xc0] sm:$0xff]
      %v3110 = vld [vmem:[#allocation3 + $0xc8] sm:$0xff]
      %v3111 = vld [vmem:[#allocation3 + $0xd0] sm:$0xff]
      %v3112 = vld [vmem:[#allocation3 + $0xd8] sm:$0xff]
      %v3113 = vld [vmem:[#allocation3 + $0xe0] sm:$0xff]
      %v3114 = vld [vmem:[#allocation3 + $0xe8] sm:$0xff]
      %v3115 = vld [vmem:[#allocation3 + $0xf0] sm:$0xff]
      %v3116 = vld [vmem:[#allocation3 + $0xf8] sm:$0xff]
      %v3117 = vld [vmem:[#allocation3 + $0x100] sm:$0xff]
      %v3118 = vld [vmem:[#allocation3 + $0x108] sm:$0xff]
      %v3119 = vld [vmem:[#allocation3 + $0x110] sm:$0xff]
      %v3120 = vld [vmem:[#allocation3 + $0x118] sm:$0xff]
      %v3121 = vld [vmem:[#allocation3 + $0x120] sm:$0xff]
      %v3122 = vld [vmem:[#allocation3 + $0x128] sm:$0xff]
      %v3123 = vld [vmem:[#allocation3 + $0x130] sm:$0xff]
      %v3124 = vld [vmem:[#allocation3 + $0x138] sm:$0xff]
      %3157 = vrot.lane.b32.xlu0 %v3093, 112
      %v3158 = vpop.permute.xlu0 %3157
      %3159 = vrot.lane.b32.xlu0 %v3094, 112
      %v3160 = vpop.permute.xlu0 %3159
      %3161 = vrot.lane.b32.xlu0 %v3095, 112
      %v3162 = vpop.permute.xlu0 %3161
      %3163 = vrot.lane.b32.xlu0 %v3096, 112
      %v3164 = vpop.permute.xlu0 %3163
      %3165 = vrot.lane.b32.xlu0 %v3097, 112
      %v3166 = vpop.permute.xlu0 %3165
      %3167 = vrot.lane.b32.xlu0 %v3098, 112
      %v3168 = vpop.permute.xlu0 %3167
      %3169 = vrot.lane.b32.xlu0 %v3099, 112
      %v3170 = vpop.permute.xlu0 %3169
      %3171 = vrot.lane.b32.xlu0 %v3100, 112
      %v3172 = vpop.permute.xlu0 %3171
      %3173 = vrot.lane.b32.xlu0 %v3101, 112
      %v3174 = vpop.permute.xlu0 %3173
      %3175 = vrot.lane.b32.xlu0 %v3102, 112
      %v3176 = vpop.permute.xlu0 %3175
      %3177 = vrot.lane.b32.xlu0 %v3103, 112
      %v3178 = vpop.permute.xlu0 %3177
      %3179 = vrot.lane.b32.xlu0 %v3104, 112
      %v3180 = vpop.permute.xlu0 %3179
      %3181 = vrot.lane.b32.xlu0 %v3105, 112
      %v3182 = vpop.permute.xlu0 %3181
      %3183 = vrot.lane.b32.xlu0 %v3106, 112
      %v3184 = vpop.permute.xlu0 %3183
      %3185 = vrot.lane.b32.xlu0 %v3107, 112
      %v3186 = vpop.permute.xlu0 %3185
      %3187 = vrot.lane.b32.xlu0 %v3108, 112
      %v3188 = vpop.permute.xlu0 %3187
      %3189 = vrot.lane.b32.xlu0 %v3109, 112
      %v3190 = vpop.permute.xlu0 %3189
      %3191 = vrot.lane.b32.xlu0 %v3110, 112
      %v3192 = vpop.permute.xlu0 %3191
      %3193 = vrot.lane.b32.xlu0 %v3111, 112
      %v3194 = vpop.permute.xlu0 %3193
      %3195 = vrot.lane.b32.xlu0 %v3112, 112
      %v3196 = vpop.permute.xlu0 %3195
      %3197 = vrot.lane.b32.xlu0 %v3113, 112
      %v3198 = vpop.permute.xlu0 %3197
      %3199 = vrot.lane.b32.xlu0 %v3114, 112
      %v3200 = vpop.permute.xlu0 %3199
      %3201 = vrot.lane.b32.xlu0 %v3115, 112
      %v3202 = vpop.permute.xlu0 %3201
      %3203 = vrot.lane.b32.xlu0 %v3116, 112
      %v3204 = vpop.permute.xlu0 %3203
      %3205 = vrot.lane.b32.xlu0 %v3117, 112
      %v3206 = vpop.permute.xlu0 %3205
      %3207 = vrot.lane.b32.xlu0 %v3118, 112
      %v3208 = vpop.permute.xlu0 %3207
      %3209 = vrot.lane.b32.xlu0 %v3119, 112
      %v3210 = vpop.permute.xlu0 %3209
      %3211 = vrot.lane.b32.xlu0 %v3120, 112
      %v3212 = vpop.permute.xlu0 %3211
      %3213 = vrot.lane.b32.xlu0 %v3121, 112
      %v3214 = vpop.permute.xlu0 %3213
      %3215 = vrot.lane.b32.xlu0 %v3122, 112
      %v3216 = vpop.permute.xlu0 %3215
      %3217 = vrot.lane.b32.xlu0 %v3123, 112
      %v3218 = vpop.permute.xlu0 %3217
      %3219 = vrot.lane.b32.xlu0 %v3124, 112
      %v3220 = vpop.permute.xlu0 %3219
      %vm3253 = vcmask 1048448
      %3254 = vst.msk [vmem:[#allocation4] sm:$0xff] %vm3253, %v3158
      %vm3255 = vcmask 97280
      %3256 = vst.msk [vmem:[#allocation4 + $0x8] sm:$0xff] %vm3255, %v3158
      %3257 = vst.msk [vmem:[#allocation4 + $0x10] sm:$0xff] %vm3253, %v3160
      %3258 = vst.msk [vmem:[#allocation4 + $0x18] sm:$0xff] %vm3255, %v3160
      %3259 = vst.msk [vmem:[#allocation4 + $0x20] sm:$0xff] %vm3253, %v3162
      %3260 = vst.msk [vmem:[#allocation4 + $0x28] sm:$0xff] %vm3255, %v3162
      %3261 = vst.msk [vmem:[#allocation4 + $0x30] sm:$0xff] %vm3253, %v3164
      %3262 = vst.msk [vmem:[#allocation4 + $0x38] sm:$0xff] %vm3255, %v3164
      %3263 = vst.msk [vmem:[#allocation4 + $0x40] sm:$0xff] %vm3253, %v3166
      %3264 = vst.msk [vmem:[#allocation4 + $0x48] sm:$0xff] %vm3255, %v3166
      %3265 = vst.msk [vmem:[#allocation4 + $0x50] sm:$0xff] %vm3253, %v3168
      %3266 = vst.msk [vmem:[#allocation4 + $0x58] sm:$0xff] %vm3255, %v3168
      %3267 = vst.msk [vmem:[#allocation4 + $0x60] sm:$0xff] %vm3253, %v3170
      %3268 = vst.msk [vmem:[#allocation4 + $0x68] sm:$0xff] %vm3255, %v3170
      %3269 = vst.msk [vmem:[#allocation4 + $0x70] sm:$0xff] %vm3253, %v3172
      %3270 = vst.msk [vmem:[#allocation4 + $0x78] sm:$0xff] %vm3255, %v3172
      %3271 = vst.msk [vmem:[#allocation4 + $0x80] sm:$0xff] %vm3253, %v3174
      %3272 = vst.msk [vmem:[#allocation4 + $0x88] sm:$0xff] %vm3255, %v3174
      %3273 = vst.msk [vmem:[#allocation4 + $0x90] sm:$0xff] %vm3253, %v3176
      %3274 = vst.msk [vmem:[#allocation4 + $0x98] sm:$0xff] %vm3255, %v3176
      %3275 = vst.msk [vmem:[#allocation4 + $0xa0] sm:$0xff] %vm3253, %v3178
      %3276 = vst.msk [vmem:[#allocation4 + $0xa8] sm:$0xff] %vm3255, %v3178
      %3277 = vst.msk [vmem:[#allocation4 + $0xb0] sm:$0xff] %vm3253, %v3180
      %3278 = vst.msk [vmem:[#allocation4 + $0xb8] sm:$0xff] %vm3255, %v3180
      %3279 = vst.msk [vmem:[#allocation4 + $0xc0] sm:$0xff] %vm3253, %v3182
      %3280 = vst.msk [vmem:[#allocation4 + $0xc8] sm:$0xff] %vm3255, %v3182
      %3281 = vst.msk [vmem:[#allocation4 + $0xd0] sm:$0xff] %vm3253, %v3184
      %3282 = vst.msk [vmem:[#allocation4 + $0xd8] sm:$0xff] %vm3255, %v3184
      %3283 = vst.msk [vmem:[#allocation4 + $0xe0] sm:$0xff] %vm3253, %v3186
      %3284 = vst.msk [vmem:[#allocation4 + $0xe8] sm:$0xff] %vm3255, %v3186
      %3285 = vst.msk [vmem:[#allocation4 + $0xf0] sm:$0xff] %vm3253, %v3188
      %3286 = vst.msk [vmem:[#allocation4 + $0xf8] sm:$0xff] %vm3255, %v3188
      %3287 = vst.msk [vmem:[#allocation4 + $0x100] sm:$0xff] %vm3253, %v3190
      %3288 = vst.msk [vmem:[#allocation4 + $0x108] sm:$0xff] %vm3255, %v3190
      %3289 = vst.msk [vmem:[#allocation4 + $0x110] sm:$0xff] %vm3253, %v3192
      %3290 = vst.msk [vmem:[#allocation4 + $0x118] sm:$0xff] %vm3255, %v3192
      %3291 = vst.msk [vmem:[#allocation4 + $0x120] sm:$0xff] %vm3253, %v3194
      %3292 = vst.msk [vmem:[#allocation4 + $0x128] sm:$0xff] %vm3255, %v3194
      %3293 = vst.msk [vmem:[#allocation4 + $0x130] sm:$0xff] %vm3253, %v3196
      %3294 = vst.msk [vmem:[#allocation4 + $0x138] sm:$0xff] %vm3255, %v3196
      %3295 = vst.msk [vmem:[#allocation4 + $0x140] sm:$0xff] %vm3253, %v3198
      %3296 = vst.msk [vmem:[#allocation4 + $0x148] sm:$0xff] %vm3255, %v3198
      %3297 = vst.msk [vmem:[#allocation4 + $0x150] sm:$0xff] %vm3253, %v3200
      %3298 = vst.msk [vmem:[#allocation4 + $0x158] sm:$0xff] %vm3255, %v3200
      %3299 = vst.msk [vmem:[#allocation4 + $0x160] sm:$0xff] %vm3253, %v3202
      %3300 = vst.msk [vmem:[#allocation4 + $0x168] sm:$0xff] %vm3255, %v3202
      %3301 = vst.msk [vmem:[#allocation4 + $0x170] sm:$0xff] %vm3253, %v3204
      %3302 = vst.msk [vmem:[#allocation4 + $0x178] sm:$0xff] %vm3255, %v3204
      %3303 = vst.msk [vmem:[#allocation4 + $0x180] sm:$0xff] %vm3253, %v3206
      %3304 = vst.msk [vmem:[#allocation4 + $0x188] sm:$0xff] %vm3255, %v3206
      %3305 = vst.msk [vmem:[#allocation4 + $0x190] sm:$0xff] %vm3253, %v3208
      %3306 = vst.msk [vmem:[#allocation4 + $0x198] sm:$0xff] %vm3255, %v3208
      %3307 = vst.msk [vmem:[#allocation4 + $0x1a0] sm:$0xff] %vm3253, %v3210
      %3308 = vst.msk [vmem:[#allocation4 + $0x1a8] sm:$0xff] %vm3255, %v3210
      %3309 = vst.msk [vmem:[#allocation4 + $0x1b0] sm:$0xff] %vm3253, %v3212
      %3310 = vst.msk [vmem:[#allocation4 + $0x1b8] sm:$0xff] %vm3255, %v3212
      %3311 = vst.msk [vmem:[#allocation4 + $0x1c0] sm:$0xff] %vm3253, %v3214
      %3312 = vst.msk [vmem:[#allocation4 + $0x1c8] sm:$0xff] %vm3255, %v3214
      %3313 = vst.msk [vmem:[#allocation4 + $0x1d0] sm:$0xff] %vm3253, %v3216
      %3314 = vst.msk [vmem:[#allocation4 + $0x1d8] sm:$0xff] %vm3255, %v3216
      %3315 = vst.msk [vmem:[#allocation4 + $0x1e0] sm:$0xff] %vm3253, %v3218
      %3316 = vst.msk [vmem:[#allocation4 + $0x1e8] sm:$0xff] %vm3255, %v3218
      %3317 = vst.msk [vmem:[#allocation4 + $0x1f0] sm:$0xff] %vm3253, %v3220
      %3318 = vst.msk [vmem:[#allocation4 + $0x1f8] sm:$0xff] %vm3255, %v3220
      %v3319 = vld [vmem:[#allocation3 + $0x50] sm:$0xff]
      %v3320 = vld [vmem:[#allocation3 + $0x58] sm:$0xff]
      %v3321 = vld [vmem:[#allocation3 + $0x60] sm:$0xff]
      %v3322 = vld [vmem:[#allocation3 + $0x68] sm:$0xff]
      %v3323 = vld [vmem:[#allocation3 + $0x70] sm:$0xff]
      %v3324 = vld [vmem:[#allocation3 + $0x78] sm:$0xff]
      %v3325 = vld [vmem:[#allocation3 + $0x80] sm:$0xff]
      %v3326 = vld [vmem:[#allocation3 + $0x88] sm:$0xff]
      %v3327 = vld [vmem:[#allocation3 + $0x90] sm:$0xff]
      %v3328 = vld [vmem:[#allocation3 + $0x98] sm:$0xff]
      %v3329 = vld [vmem:[#allocation3 + $0xa0] sm:$0xff]
      %v3330 = vld [vmem:[#allocation3 + $0xa8] sm:$0xff]
      %v3331 = vld [vmem:[#allocation3 + $0xb0] sm:$0xff]
      %v3332 = vld [vmem:[#allocation3 + $0xb8] sm:$0xff]
      %v3333 = vld [vmem:[#allocation3 + $0xc0] sm:$0xff]
      %v3334 = vld [vmem:[#allocation3 + $0xc8] sm:$0xff]
      %v3335 = vld [vmem:[#allocation3 + $0xd0] sm:$0xff]
      %v3336 = vld [vmem:[#allocation3 + $0xd8] sm:$0xff]
      %v3337 = vld [vmem:[#allocation3 + $0xe0] sm:$0xff]
      %v3338 = vld [vmem:[#allocation3 + $0xe8] sm:$0xff]
      %v3339 = vld [vmem:[#allocation3 + $0xf0] sm:$0xff]
      %v3340 = vld [vmem:[#allocation3 + $0xf8] sm:$0xff]
      %v3341 = vld [vmem:[#allocation3 + $0x100] sm:$0xff]
      %v3342 = vld [vmem:[#allocation3 + $0x108] sm:$0xff]
      %v3343 = vld [vmem:[#allocation3 + $0x110] sm:$0xff]
      %v3344 = vld [vmem:[#allocation3 + $0x118] sm:$0xff]
      %v3345 = vld [vmem:[#allocation3 + $0x120] sm:$0xff]
      %v3346 = vld [vmem:[#allocation3 + $0x128] sm:$0xff]
      %v3347 = vld [vmem:[#allocation3 + $0x130] sm:$0xff]
      %v3348 = vld [vmem:[#allocation3 + $0x138] sm:$0xff]
      %v3349 = vld [vmem:[#allocation3 + $0x140] sm:$0xff]
      %v3350 = vld [vmem:[#allocation3 + $0x148] sm:$0xff]
      %3383 = vrot.lane.b32.xlu0 %v3319, 12
      %v3384 = vpop.permute.xlu0 %3383
      %3385 = vrot.lane.b32.xlu0 %v3320, 12
      %v3386 = vpop.permute.xlu0 %3385
      %3387 = vrot.lane.b32.xlu0 %v3321, 12
      %v3388 = vpop.permute.xlu0 %3387
      %3389 = vrot.lane.b32.xlu0 %v3322, 12
      %v3390 = vpop.permute.xlu0 %3389
      %3391 = vrot.lane.b32.xlu0 %v3323, 12
      %v3392 = vpop.permute.xlu0 %3391
      %3393 = vrot.lane.b32.xlu0 %v3324, 12
      %v3394 = vpop.permute.xlu0 %3393
      %3395 = vrot.lane.b32.xlu0 %v3325, 12
      %v3396 = vpop.permute.xlu0 %3395
      %3397 = vrot.lane.b32.xlu0 %v3326, 12
      %v3398 = vpop.permute.xlu0 %3397
      %3399 = vrot.lane.b32.xlu0 %v3327, 12
      %v3400 = vpop.permute.xlu0 %3399
      %3401 = vrot.lane.b32.xlu0 %v3328, 12
      %v3402 = vpop.permute.xlu0 %3401
      %3403 = vrot.lane.b32.xlu0 %v3329, 12
      %v3404 = vpop.permute.xlu0 %3403
      %3405 = vrot.lane.b32.xlu0 %v3330, 12
      %v3406 = vpop.permute.xlu0 %3405
      %3407 = vrot.lane.b32.xlu0 %v3331, 12
      %v3408 = vpop.permute.xlu0 %3407
      %3409 = vrot.lane.b32.xlu0 %v3332, 12
      %v3410 = vpop.permute.xlu0 %3409
      %3411 = vrot.lane.b32.xlu0 %v3333, 12
      %v3412 = vpop.permute.xlu0 %3411
      %3413 = vrot.lane.b32.xlu0 %v3334, 12
      %v3414 = vpop.permute.xlu0 %3413
      %3415 = vrot.lane.b32.xlu0 %v3335, 12
      %v3416 = vpop.permute.xlu0 %3415
      %3417 = vrot.lane.b32.xlu0 %v3336, 12
      %v3418 = vpop.permute.xlu0 %3417
      %3419 = vrot.lane.b32.xlu0 %v3337, 12
      %v3420 = vpop.permute.xlu0 %3419
      %3421 = vrot.lane.b32.xlu0 %v3338, 12
      %v3422 = vpop.permute.xlu0 %3421
      %3423 = vrot.lane.b32.xlu0 %v3339, 12
      %v3424 = vpop.permute.xlu0 %3423
      %3425 = vrot.lane.b32.xlu0 %v3340, 12
      %v3426 = vpop.permute.xlu0 %3425
      %3427 = vrot.lane.b32.xlu0 %v3341, 12
      %v3428 = vpop.permute.xlu0 %3427
      %3429 = vrot.lane.b32.xlu0 %v3342, 12
      %v3430 = vpop.permute.xlu0 %3429
      %3431 = vrot.lane.b32.xlu0 %v3343, 12
      %v3432 = vpop.permute.xlu0 %3431
      %3433 = vrot.lane.b32.xlu0 %v3344, 12
      %v3434 = vpop.permute.xlu0 %3433
      %3435 = vrot.lane.b32.xlu0 %v3345, 12
      %v3436 = vpop.permute.xlu0 %3435
      %3437 = vrot.lane.b32.xlu0 %v3346, 12
      %v3438 = vpop.permute.xlu0 %3437
      %3439 = vrot.lane.b32.xlu0 %v3347, 12
      %v3440 = vpop.permute.xlu0 %3439
      %3441 = vrot.lane.b32.xlu0 %v3348, 12
      %v3442 = vpop.permute.xlu0 %3441
      %3443 = vrot.lane.b32.xlu0 %v3349, 12
      %v3444 = vpop.permute.xlu0 %3443
      %3445 = vrot.lane.b32.xlu0 %v3350, 12
      %v3446 = vpop.permute.xlu0 %3445
      %vm3479 = vcmask 326752
      %3480 = vst.msk [vmem:[#allocation4 + $0x8] sm:$0xff] %vm3479, %v3384
      %3481 = vst.msk [vmem:[#allocation4 + $0x18] sm:$0xff] %vm3479, %v3386
      %3482 = vst.msk [vmem:[#allocation4 + $0x28] sm:$0xff] %vm3479, %v3388
      %3483 = vst.msk [vmem:[#allocation4 + $0x38] sm:$0xff] %vm3479, %v3390
      %3484 = vst.msk [vmem:[#allocation4 + $0x48] sm:$0xff] %vm3479, %v3392
      %3485 = vst.msk [vmem:[#allocation4 + $0x58] sm:$0xff] %vm3479, %v3394
      %3486 = vst.msk [vmem:[#allocation4 + $0x68] sm:$0xff] %vm3479, %v3396
      %3487 = vst.msk [vmem:[#allocation4 + $0x78] sm:$0xff] %vm3479, %v3398
      %3488 = vst.msk [vmem:[#allocation4 + $0x88] sm:$0xff] %vm3479, %v3400
      %3489 = vst.msk [vmem:[#allocation4 + $0x98] sm:$0xff] %vm3479, %v3402
      %3490 = vst.msk [vmem:[#allocation4 + $0xa8] sm:$0xff] %vm3479, %v3404
      %3491 = vst.msk [vmem:[#allocation4 + $0xb8] sm:$0xff] %vm3479, %v3406
      %3492 = vst.msk [vmem:[#allocation4 + $0xc8] sm:$0xff] %vm3479, %v3408
      %3493 = vst.msk [vmem:[#allocation4 + $0xd8] sm:$0xff] %vm3479, %v3410
      %3494 = vst.msk [vmem:[#allocation4 + $0xe8] sm:$0xff] %vm3479, %v3412
      %3495 = vst.msk [vmem:[#allocation4 + $0xf8] sm:$0xff] %vm3479, %v3414
      %3496 = vst.msk [vmem:[#allocation4 + $0x108] sm:$0xff] %vm3479, %v3416
      %3497 = vst.msk [vmem:[#allocation4 + $0x118] sm:$0xff] %vm3479, %v3418
      %3498 = vst.msk [vmem:[#allocation4 + $0x128] sm:$0xff] %vm3479, %v3420
      %3499 = vst.msk [vmem:[#allocation4 + $0x138] sm:$0xff] %vm3479, %v3422
      %3500 = vst.msk [vmem:[#allocation4 + $0x148] sm:$0xff] %vm3479, %v3424
      %3501 = vst.msk [vmem:[#allocation4 + $0x158] sm:$0xff] %vm3479, %v3426
      %3502 = vst.msk [vmem:[#allocation4 + $0x168] sm:$0xff] %vm3479, %v3428
      %3503 = vst.msk [vmem:[#allocation4 + $0x178] sm:$0xff] %vm3479, %v3430
      %3504 = vst.msk [vmem:[#allocation4 + $0x188] sm:$0xff] %vm3479, %v3432
      %3505 = vst.msk [vmem:[#allocation4 + $0x198] sm:$0xff] %vm3479, %v3434
      %3506 = vst.msk [vmem:[#allocation4 + $0x1a8] sm:$0xff] %vm3479, %v3436
      %3507 = vst.msk [vmem:[#allocation4 + $0x1b8] sm:$0xff] %vm3479, %v3438
      %3508 = vst.msk [vmem:[#allocation4 + $0x1c8] sm:$0xff] %vm3479, %v3440
      %3509 = vst.msk [vmem:[#allocation4 + $0x1d8] sm:$0xff] %vm3479, %v3442
      %3510 = vst.msk [vmem:[#allocation4 + $0x1e8] sm:$0xff] %vm3479, %v3444
      %3511 = vst.msk [vmem:[#allocation4 + $0x1f8] sm:$0xff] %vm3479, %v3446
      %v3512 = vld [vmem:[#allocation3 + $0x60] sm:$0xff]
      %v3513 = vld [vmem:[#allocation3 + $0x68] sm:$0xff]
      %v3514 = vld [vmem:[#allocation3 + $0x70] sm:$0xff]
      %v3515 = vld [vmem:[#allocation3 + $0x78] sm:$0xff]
      %v3516 = vld [vmem:[#allocation3 + $0x80] sm:$0xff]
      %v3517 = vld [vmem:[#allocation3 + $0x88] sm:$0xff]
      %v3518 = vld [vmem:[#allocation3 + $0x90] sm:$0xff]
      %v3519 = vld [vmem:[#allocation3 + $0x98] sm:$0xff]
      %v3520 = vld [vmem:[#allocation3 + $0xa0] sm:$0xff]
      %v3521 = vld [vmem:[#allocation3 + $0xa8] sm:$0xff]
      %v3522 = vld [vmem:[#allocation3 + $0xb0] sm:$0xff]
      %v3523 = vld [vmem:[#allocation3 + $0xb8] sm:$0xff]
      %v3524 = vld [vmem:[#allocation3 + $0xc0] sm:$0xff]
      %v3525 = vld [vmem:[#allocation3 + $0xc8] sm:$0xff]
      %v3526 = vld [vmem:[#allocation3 + $0xd0] sm:$0xff]
      %v3527 = vld [vmem:[#allocation3 + $0xd8] sm:$0xff]
      %v3528 = vld [vmem:[#allocation3 + $0xe0] sm:$0xff]
      %v3529 = vld [vmem:[#allocation3 + $0xe8] sm:$0xff]
      %v3530 = vld [vmem:[#allocation3 + $0xf0] sm:$0xff]
      %v3531 = vld [vmem:[#allocation3 + $0xf8] sm:$0xff]
      %v3532 = vld [vmem:[#allocation3 + $0x100] sm:$0xff]
      %v3533 = vld [vmem:[#allocation3 + $0x108] sm:$0xff]
      %v3534 = vld [vmem:[#allocation3 + $0x110] sm:$0xff]
      %v3535 = vld [vmem:[#allocation3 + $0x118] sm:$0xff]
      %v3536 = vld [vmem:[#allocation3 + $0x120] sm:$0xff]
      %v3537 = vld [vmem:[#allocation3 + $0x128] sm:$0xff]
      %v3538 = vld [vmem:[#allocation3 + $0x130] sm:$0xff]
      %v3539 = vld [vmem:[#allocation3 + $0x138] sm:$0xff]
      %v3540 = vld [vmem:[#allocation3 + $0x140] sm:$0xff]
      %v3541 = vld [vmem:[#allocation3 + $0x148] sm:$0xff]
      %v3542 = vld [vmem:[#allocation3 + $0x150] sm:$0xff]
      %v3543 = vld [vmem:[#allocation3 + $0x158] sm:$0xff]
      %3576 = vrot.lane.b32.xlu0 %v3512, 40
      %v3577 = vpop.permute.xlu0 %3576
      %3578 = vrot.lane.b32.xlu0 %v3513, 40
      %v3579 = vpop.permute.xlu0 %3578
      %3580 = vrot.lane.b32.xlu0 %v3514, 40
      %v3581 = vpop.permute.xlu0 %3580
      %3582 = vrot.lane.b32.xlu0 %v3515, 40
      %v3583 = vpop.permute.xlu0 %3582
      %3584 = vrot.lane.b32.xlu0 %v3516, 40
      %v3585 = vpop.permute.xlu0 %3584
      %3586 = vrot.lane.b32.xlu0 %v3517, 40
      %v3587 = vpop.permute.xlu0 %3586
      %3588 = vrot.lane.b32.xlu0 %v3518, 40
      %v3589 = vpop.permute.xlu0 %3588
      %3590 = vrot.lane.b32.xlu0 %v3519, 40
      %v3591 = vpop.permute.xlu0 %3590
      %3592 = vrot.lane.b32.xlu0 %v3520, 40
      %v3593 = vpop.permute.xlu0 %3592
      %3594 = vrot.lane.b32.xlu0 %v3521, 40
      %v3595 = vpop.permute.xlu0 %3594
      %3596 = vrot.lane.b32.xlu0 %v3522, 40
      %v3597 = vpop.permute.xlu0 %3596
      %3598 = vrot.lane.b32.xlu0 %v3523, 40
      %v3599 = vpop.permute.xlu0 %3598
      %3600 = vrot.lane.b32.xlu0 %v3524, 40
      %v3601 = vpop.permute.xlu0 %3600
      %3602 = vrot.lane.b32.xlu0 %v3525, 40
      %v3603 = vpop.permute.xlu0 %3602
      %3604 = vrot.lane.b32.xlu0 %v3526, 40
      %v3605 = vpop.permute.xlu0 %3604
      %3606 = vrot.lane.b32.xlu0 %v3527, 40
      %v3607 = vpop.permute.xlu0 %3606
      %3608 = vrot.lane.b32.xlu0 %v3528, 40
      %v3609 = vpop.permute.xlu0 %3608
      %3610 = vrot.lane.b32.xlu0 %v3529, 40
      %v3611 = vpop.permute.xlu0 %3610
      %3612 = vrot.lane.b32.xlu0 %v3530, 40
      %v3613 = vpop.permute.xlu0 %3612
      %3614 = vrot.lane.b32.xlu0 %v3531, 40
      %v3615 = vpop.permute.xlu0 %3614
      %3616 = vrot.lane.b32.xlu0 %v3532, 40
      %v3617 = vpop.permute.xlu0 %3616
      %3618 = vrot.lane.b32.xlu0 %v3533, 40
      %v3619 = vpop.permute.xlu0 %3618
      %3620 = vrot.lane.b32.xlu0 %v3534, 40
      %v3621 = vpop.permute.xlu0 %3620
      %3622 = vrot.lane.b32.xlu0 %v3535, 40
      %v3623 = vpop.permute.xlu0 %3622
      %3624 = vrot.lane.b32.xlu0 %v3536, 40
      %v3625 = vpop.permute.xlu0 %3624
      %3626 = vrot.lane.b32.xlu0 %v3537, 40
      %v3627 = vpop.permute.xlu0 %3626
      %3628 = vrot.lane.b32.xlu0 %v3538, 40
      %v3629 = vpop.permute.xlu0 %3628
      %3630 = vrot.lane.b32.xlu0 %v3539, 40
      %v3631 = vpop.permute.xlu0 %3630
      %3632 = vrot.lane.b32.xlu0 %v3540, 40
      %v3633 = vpop.permute.xlu0 %3632
      %3634 = vrot.lane.b32.xlu0 %v3541, 40
      %v3635 = vpop.permute.xlu0 %3634
      %3636 = vrot.lane.b32.xlu0 %v3542, 40
      %v3637 = vpop.permute.xlu0 %3636
      %3638 = vrot.lane.b32.xlu0 %v3543, 40
      %v3639 = vpop.permute.xlu0 %3638
      %vm3672 = vcmask 556352
      %3673 = vst.msk [vmem:[#allocation4 + $0x8] sm:$0xff] %vm3672, %v3577
      %3674 = vst.msk [vmem:[#allocation4 + $0x18] sm:$0xff] %vm3672, %v3579
      %3675 = vst.msk [vmem:[#allocation4 + $0x28] sm:$0xff] %vm3672, %v3581
      %3676 = vst.msk [vmem:[#allocation4 + $0x38] sm:$0xff] %vm3672, %v3583
      %3677 = vst.msk [vmem:[#allocation4 + $0x48] sm:$0xff] %vm3672, %v3585
      %3678 = vst.msk [vmem:[#allocation4 + $0x58] sm:$0xff] %vm3672, %v3587
      %3679 = vst.msk [vmem:[#allocation4 + $0x68] sm:$0xff] %vm3672, %v3589
      %3680 = vst.msk [vmem:[#allocation4 + $0x78] sm:$0xff] %vm3672, %v3591
      %3681 = vst.msk [vmem:[#allocation4 + $0x88] sm:$0xff] %vm3672, %v3593
      %3682 = vst.msk [vmem:[#allocation4 + $0x98] sm:$0xff] %vm3672, %v3595
      %3683 = vst.msk [vmem:[#allocation4 + $0xa8] sm:$0xff] %vm3672, %v3597
      %3684 = vst.msk [vmem:[#allocation4 + $0xb8] sm:$0xff] %vm3672, %v3599
      %3685 = vst.msk [vmem:[#allocation4 + $0xc8] sm:$0xff] %vm3672, %v3601
      %3686 = vst.msk [vmem:[#allocation4 + $0xd8] sm:$0xff] %vm3672, %v3603
      %3687 = vst.msk [vmem:[#allocation4 + $0xe8] sm:$0xff] %vm3672, %v3605
      %3688 = vst.msk [vmem:[#allocation4 + $0xf8] sm:$0xff] %vm3672, %v3607
      %3689 = vst.msk [vmem:[#allocation4 + $0x108] sm:$0xff] %vm3672, %v3609
      %3690 = vst.msk [vmem:[#allocation4 + $0x118] sm:$0xff] %vm3672, %v3611
      %3691 = vst.msk [vmem:[#allocation4 + $0x128] sm:$0xff] %vm3672, %v3613
      %3692 = vst.msk [vmem:[#allocation4 + $0x138] sm:$0xff] %vm3672, %v3615
      %3693 = vst.msk [vmem:[#allocation4 + $0x148] sm:$0xff] %vm3672, %v3617
      %3694 = vst.msk [vmem:[#allocation4 + $0x158] sm:$0xff] %vm3672, %v3619
      %3695 = vst.msk [vmem:[#allocation4 + $0x168] sm:$0xff] %vm3672, %v3621
      %3696 = vst.msk [vmem:[#allocation4 + $0x178] sm:$0xff] %vm3672, %v3623
      %3697 = vst.msk [vmem:[#allocation4 + $0x188] sm:$0xff] %vm3672, %v3625
      %3698 = vst.msk [vmem:[#allocation4 + $0x198] sm:$0xff] %vm3672, %v3627
      %3699 = vst.msk [vmem:[#allocation4 + $0x1a8] sm:$0xff] %vm3672, %v3629
      %3700 = vst.msk [vmem:[#allocation4 + $0x1b8] sm:$0xff] %vm3672, %v3631
      %3701 = vst.msk [vmem:[#allocation4 + $0x1c8] sm:$0xff] %vm3672, %v3633
      %3702 = vst.msk [vmem:[#allocation4 + $0x1d8] sm:$0xff] %vm3672, %v3635
      %3703 = vst.msk [vmem:[#allocation4 + $0x1e8] sm:$0xff] %vm3672, %v3637
      %3704 = vst.msk [vmem:[#allocation4 + $0x1f8] sm:$0xff] %vm3672, %v3639
      %v3705 = vld [vmem:[#allocation4] sm:$0xff]
      %v3706 = vld [vmem:[#allocation4 + $0x8] sm:$0xff]
      %v3707 = vld [vmem:[#allocation4 + $0x10] sm:$0xff]
      %v3708 = vld [vmem:[#allocation4 + $0x18] sm:$0xff]
      %v3709 = vld [vmem:[#allocation4 + $0x20] sm:$0xff]
      %v3710 = vld [vmem:[#allocation4 + $0x28] sm:$0xff]
      %v3711 = vld [vmem:[#allocation4 + $0x30] sm:$0xff]
      %v3712 = vld [vmem:[#allocation4 + $0x38] sm:$0xff]
      %v3713 = vld [vmem:[#allocation4 + $0x40] sm:$0xff]
      %v3714 = vld [vmem:[#allocation4 + $0x48] sm:$0xff]
      %v3715 = vld [vmem:[#allocation4 + $0x50] sm:$0xff]
      %v3716 = vld [vmem:[#allocation4 + $0x58] sm:$0xff]
      %v3717 = vld [vmem:[#allocation4 + $0x60] sm:$0xff]
      %v3718 = vld [vmem:[#allocation4 + $0x68] sm:$0xff]
      %v3719 = vld [vmem:[#allocation4 + $0x70] sm:$0xff]
      %v3720 = vld [vmem:[#allocation4 + $0x78] sm:$0xff]
      %v3721 = vld [vmem:[#allocation4 + $0x80] sm:$0xff]
      %v3722 = vld [vmem:[#allocation4 + $0x88] sm:$0xff]
      %v3723 = vld [vmem:[#allocation4 + $0x90] sm:$0xff]
      %v3724 = vld [vmem:[#allocation4 + $0x98] sm:$0xff]
      %v3725 = vld [vmem:[#allocation4 + $0xa0] sm:$0xff]
      %v3726 = vld [vmem:[#allocation4 + $0xa8] sm:$0xff]
      %v3727 = vld [vmem:[#allocation4 + $0xb0] sm:$0xff]
      %v3728 = vld [vmem:[#allocation4 + $0xb8] sm:$0xff]
      %v3729 = vld [vmem:[#allocation4 + $0xc0] sm:$0xff]
      %v3730 = vld [vmem:[#allocation4 + $0xc8] sm:$0xff]
      %v3731 = vld [vmem:[#allocation4 + $0xd0] sm:$0xff]
      %v3732 = vld [vmem:[#allocation4 + $0xd8] sm:$0xff]
      %v3733 = vld [vmem:[#allocation4 + $0xe0] sm:$0xff]
      %v3734 = vld [vmem:[#allocation4 + $0xe8] sm:$0xff]
      %v3735 = vld [vmem:[#allocation4 + $0xf0] sm:$0xff]
      %v3736 = vld [vmem:[#allocation4 + $0xf8] sm:$0xff]
      %v3737 = vld [vmem:[#allocation4 + $0x100] sm:$0xff]
      %v3738 = vld [vmem:[#allocation4 + $0x108] sm:$0xff]
      %v3739 = vld [vmem:[#allocation4 + $0x110] sm:$0xff]
      %v3740 = vld [vmem:[#allocation4 + $0x118] sm:$0xff]
      %v3741 = vld [vmem:[#allocation4 + $0x120] sm:$0xff]
      %v3742 = vld [vmem:[#allocation4 + $0x128] sm:$0xff]
      %v3743 = vld [vmem:[#allocation4 + $0x130] sm:$0xff]
      %v3744 = vld [vmem:[#allocation4 + $0x138] sm:$0xff]
      %v3745 = vld [vmem:[#allocation4 + $0x140] sm:$0xff]
      %v3746 = vld [vmem:[#allocation4 + $0x148] sm:$0xff]
      %v3747 = vld [vmem:[#allocation4 + $0x150] sm:$0xff]
      %v3748 = vld [vmem:[#allocation4 + $0x158] sm:$0xff]
      %v3749 = vld [vmem:[#allocation4 + $0x160] sm:$0xff]
      %v3750 = vld [vmem:[#allocation4 + $0x168] sm:$0xff]
      %v3751 = vld [vmem:[#allocation4 + $0x170] sm:$0xff]
      %v3752 = vld [vmem:[#allocation4 + $0x178] sm:$0xff]
      %v3753 = vld [vmem:[#allocation4 + $0x180] sm:$0xff]
      %v3754 = vld [vmem:[#allocation4 + $0x188] sm:$0xff]
      %v3755 = vld [vmem:[#allocation4 + $0x190] sm:$0xff]
      %v3756 = vld [vmem:[#allocation4 + $0x198] sm:$0xff]
      %v3757 = vld [vmem:[#allocation4 + $0x1a0] sm:$0xff]
      %v3758 = vld [vmem:[#allocation4 + $0x1a8] sm:$0xff]
      %v3759 = vld [vmem:[#allocation4 + $0x1b0] sm:$0xff]
      %v3760 = vld [vmem:[#allocation4 + $0x1b8] sm:$0xff]
      %v3761 = vld [vmem:[#allocation4 + $0x1c0] sm:$0xff]
      %v3762 = vld [vmem:[#allocation4 + $0x1c8] sm:$0xff]
      %v3763 = vld [vmem:[#allocation4 + $0x1d0] sm:$0xff]
      %v3764 = vld [vmem:[#allocation4 + $0x1d8] sm:$0xff]
      %v3765 = vld [vmem:[#allocation4 + $0x1e0] sm:$0xff]
      %v3766 = vld [vmem:[#allocation4 + $0x1e8] sm:$0xff]
      %v3767 = vld [vmem:[#allocation4 + $0x1f0] sm:$0xff]
      %v3768 = vld [vmem:[#allocation4 + $0x1f8] sm:$0xff]
      %v3769 = vld [vmem:[%s2] sm:$0xff]
      %v3770 = vld [vmem:[%s2 + $0x8] sm:$0xff]
      %v3771 = vld [vmem:[%s2 + $0x10] sm:$0xff]
      %v3772 = vld [vmem:[%s2 + $0x18] sm:$0xff]
      %v3773 = vld [vmem:[%s2 + $0x20] sm:$0xff]
      %v3774 = vld [vmem:[%s2 + $0x28] sm:$0xff]
      %v3775 = vld [vmem:[%s2 + $0x30] sm:$0xff]
      %v3776 = vld [vmem:[%s2 + $0x38] sm:$0xff]
      %v3777 = vld [vmem:[%s2 + $0x40] sm:$0xff]
      %v3778 = vld [vmem:[%s2 + $0x48] sm:$0xff]
      %v3779 = vld [vmem:[%s2 + $0x50] sm:$0xff]
      %v3780 = vld [vmem:[%s2 + $0x58] sm:$0xff]
      %v3781 = vld [vmem:[%s2 + $0x60] sm:$0xff]
      %v3782 = vld [vmem:[%s2 + $0x68] sm:$0xff]
      %v3783 = vld [vmem:[%s2 + $0x70] sm:$0xff]
      %v3784 = vld [vmem:[%s2 + $0x78] sm:$0xff]
      %v3785 = vld [vmem:[%s2 + $0x80] sm:$0xff]
      %v3786 = vld [vmem:[%s2 + $0x88] sm:$0xff]
      %v3787 = vld [vmem:[%s2 + $0x90] sm:$0xff]
      %v3788 = vld [vmem:[%s2 + $0x98] sm:$0xff]
      %v3789 = vld [vmem:[%s2 + $0xa0] sm:$0xff]
      %v3790 = vld [vmem:[%s2 + $0xa8] sm:$0xff]
      %v3791 = vld [vmem:[%s2 + $0xb0] sm:$0xff]
      %v3792 = vld [vmem:[%s2 + $0xb8] sm:$0xff]
      %v3793 = vld [vmem:[%s2 + $0xc0] sm:$0xf]
      %vm3794 = vcmask 556032
      %v3796 = vsel %vm3794, %v3706, 0
      %v3799 = vsel %vm3794, %v3708, 0
      %v3802 = vsel %vm3794, %v3710, 0
      %v3805 = vsel %vm3794, %v3712, 0
      %v3808 = vsel %vm3794, %v3714, 0
      %v3811 = vsel %vm3794, %v3716, 0
      %v3814 = vsel %vm3794, %v3718, 0
      %v3817 = vsel %vm3794, %v3720, 0
      %v3820 = vsel %vm3794, %v3722, 0
      %v3823 = vsel %vm3794, %v3724, 0
      %v3826 = vsel %vm3794, %v3726, 0
      %v3829 = vsel %vm3794, %v3728, 0
      %v3832 = vsel %vm3794, %v3730, 0
      %v3835 = vsel %vm3794, %v3732, 0
      %v3838 = vsel %vm3794, %v3734, 0
      %v3841 = vsel %vm3794, %v3736, 0
      %v3844 = vsel %vm3794, %v3738, 0
      %v3847 = vsel %vm3794, %v3740, 0
      %v3850 = vsel %vm3794, %v3742, 0
      %v3853 = vsel %vm3794, %v3744, 0
      %v3856 = vsel %vm3794, %v3746, 0
      %v3859 = vsel %vm3794, %v3748, 0
      %v3862 = vsel %vm3794, %v3750, 0
      %v3865 = vsel %vm3794, %v3752, 0
      %v3868 = vsel %vm3794, %v3754, 0
      %v3871 = vsel %vm3794, %v3756, 0
      %v3874 = vsel %vm3794, %v3758, 0
      %v3877 = vsel %vm3794, %v3760, 0
      %v3880 = vsel %vm3794, %v3762, 0
      %v3883 = vsel %vm3794, %v3764, 0
      %v3886 = vsel %vm3794, %v3766, 0
      %v3889 = vsel %vm3794, %v3768, 0
      %vm3891 = vcmask 1043456
      %v3893 = vsel %vm3891, %v3793, 0
      %3895 = vmatprep.subr.mxu0 0.0
      %3896 = vmatpush1.msra.mxu0 %v3769
      %3897 = vmatprep.subr.mxu0 0.0
      %3898 = vmatpush1.msra.mxu0 %v3770
      %3899 = vmatprep.subr.mxu0 0.0
      %3900 = vmatpush1.msra.mxu0 %v3771
      %3901 = vmatprep.subr.mxu0 0.0
      %3902 = vmatpush1.msra.mxu0 %v3772
      %3903 = vmatprep.subr.mxu0 0.0
      %3904 = vmatpush1.msra.mxu0 %v3773
      %3905 = vmatprep.subr.mxu0 0.0
      %3906 = vmatpush1.msra.mxu0 %v3774
      %3907 = vmatprep.subr.mxu0 0.0
      %3908 = vmatpush1.msra.mxu0 %v3775
      %3909 = vmatprep.subr.mxu0 0.0
      %3910 = vmatpush1.msra.mxu0 %v3776
      %3911 = vmatprep.subr.mxu0 0.0
      %3912 = vmatpush1.msra.mxu0 %v3777
      %3913 = vmatprep.subr.mxu0 0.0
      %3914 = vmatpush1.msra.mxu0 %v3778
      %3915 = vmatprep.subr.mxu0 0.0
      %3916 = vmatpush1.msra.mxu0 %v3779
      %3917 = vmatprep.subr.mxu0 0.0
      %3918 = vmatpush1.msra.mxu0 %v3780
      %3919 = vmatprep.subr.mxu0 0.0
      %3920 = vmatpush1.msra.mxu0 %v3781
      %3921 = vmatprep.subr.mxu0 0.0
      %3922 = vmatpush1.msra.mxu0 %v3782
      %3923 = vmatprep.subr.mxu0 0.0
      %3924 = vmatpush1.msra.mxu0 %v3783
      %3925 = vmatprep.subr.mxu0 0.0
      %3926 = vmatpush1.msra.mxu0 %v3784
      %3927 = vmatprep.subr.mxu0 0.0
      %3928 = vmatpush1.msra.mxu0 %v3785
      %3929 = vmatprep.subr.mxu0 0.0
      %3930 = vmatpush1.msra.mxu0 %v3786
      %3931 = vmatprep.subr.mxu0 0.0
      %3932 = vmatpush1.msra.mxu0 %v3787
      %3933 = vmatprep.subr.mxu0 0.0
      %3934 = vmatpush1.msra.mxu0 %v3788
      %3935 = vmatprep.subr.mxu0 0.0
      %3936 = vmatpush1.msra.mxu0 %v3789
      %3937 = vmatprep.subr.mxu0 0.0
      %3938 = vmatpush1.msra.mxu0 %v3790
      %3939 = vmatprep.subr.mxu0 0.0
      %3940 = vmatpush1.msra.mxu0 %v3791
      %3941 = vmatprep.subr.mxu0 0.0
      %3942 = vmatpush1.msra.mxu0 %v3792
      %3943 = vmatprep.subr.mxu0 0.0
      %3944 = vmatpush1.msra.mxu0 %v3893
      %3945 = vmatprep.subr.mxu0 0.0
      %3946 = vmatpush1.msra.mxu0 0.0
      %3947 = vmatprep.subr.mxu0 0.0
      %3948 = vmatpush1.msra.mxu0 0.0
      %3949 = vmatprep.subr.mxu0 0.0
      %3950 = vmatpush1.msra.mxu0 0.0
      %3951 = vmatprep.subr.mxu0 0.0
      %3952 = vmatpush1.msra.mxu0 0.0
      %3953 = vmatprep.subr.mxu0 0.0
      %3954 = vmatpush1.msra.mxu0 0.0
      %3955 = vmatprep.subr.mxu0 0.0
      %3956 = vmatpush1.msra.mxu0 0.0
      %3957 = vmatprep.subr.mxu0 0.0
      %3958 = vmatpush1.msra.mxu0 0.0
      %3959 = vmatprep.mubr.f32.mxu0 %v3796
      %3960 = vmatmul.mubr.f32.gmra.mrb[0].mxu0 %v3705
      %v3961 = vpop.f32.mrb[0].mxu0
      %v3962 = vadd.f32 0.0, %v3961
      %v3963 = vpop.f32.mrb[0].mxu0
      %3964 = vmatprep.mubr.f32.mxu0 %v3799
      %3965 = vmatmul.mubr.f32.gmra.mrb[0].mxu0 %v3707
      %v3966 = vpop.f32.mrb[0].mxu0
      %v3967 = vadd.f32 0.0, %v3966
      %v3968 = vpop.f32.mrb[0].mxu0
      %3969 = vmatprep.mubr.f32.mxu0 %v3802
      %3970 = vmatmul.mubr.f32.gmra.mrb[0].mxu0 %v3709
      %v3971 = vpop.f32.mrb[0].mxu0
      %v3972 = vadd.f32 0.0, %v3971
      %v3973 = vpop.f32.mrb[0].mxu0
      %3974 = vmatprep.mubr.f32.mxu0 %v3805
      %3975 = vmatmul.mubr.f32.gmra.mrb[0].mxu0 %v3711
      %v3976 = vpop.f32.mrb[0].mxu0
      %v3977 = vadd.f32 0.0, %v3976
      %v3978 = vpop.f32.mrb[0].mxu0
      %3979 = vmatprep.mubr.f32.mxu0 %v3808
      %3980 = vmatmul.mubr.f32.gmra.mrb[0].mxu0 %v3713
      %v3981 = vpop.f32.mrb[0].mxu0
      %v3982 = vadd.f32 0.0, %v3981
      %v3983 = vpop.f32.mrb[0].mxu0
      %3984 = vmatprep.mubr.f32.mxu0 %v3811
      %3985 = vmatmul.mubr.f32.gmra.mrb[0].mxu0 %v3715
      %v3986 = vpop.f32.mrb[0].mxu0
      %v3987 = vadd.f32 0.0, %v3986
      %v3988 = vpop.f32.mrb[0].mxu0
      %3989 = vmatprep.mubr.f32.mxu0 %v3814
      %3990 = vmatmul.mubr.f32.gmra.mrb[0].mxu0 %v3717
      %v3991 = vpop.f32.mrb[0].mxu0
      %v3992 = vadd.f32 0.0, %v3991
      %v3993 = vpop.f32.mrb[0].mxu0
      %3994 = vmatprep.mubr.f32.mxu0 %v3817
      %3995 = vmatmul.mubr.f32.gmra.mrb[0].mxu0 %v3719
      %v3996 = vpop.f32.mrb[0].mxu0
      %v3997 = vadd.f32 0.0, %v3996
      %v3998 = vpop.f32.mrb[0].mxu0
      %3999 = vmatprep.mubr.f32.mxu0 %v3820
      %4000 = vmatmul.mubr.f32.gmra.mrb[0].mxu0 %v3721
      %v4001 = vpop.f32.mrb[0].mxu0
      %v4002 = vadd.f32 0.0, %v4001
      %v4003 = vpop.f32.mrb[0].mxu0
      %4004 = vmatprep.mubr.f32.mxu0 %v3823
      %4005 = vmatmul.mubr.f32.gmra.mrb[0].mxu0 %v3723
      %v4006 = vpop.f32.mrb[0].mxu0
      %v4007 = vadd.f32 0.0, %v4006
      %v4008 = vpop.f32.mrb[0].mxu0
      %4009 = vmatprep.mubr.f32.mxu0 %v3826
      %4010 = vmatmul.mubr.f32.gmra.mrb[0].mxu0 %v3725
      %v4011 = vpop.f32.mrb[0].mxu0
      %v4012 = vadd.f32 0.0, %v4011
      %v4013 = vpop.f32.mrb[0].mxu0
      %4014 = vmatprep.mubr.f32.mxu0 %v3829
      %4015 = vmatmul.mubr.f32.gmra.mrb[0].mxu0 %v3727
      %v4016 = vpop.f32.mrb[0].mxu0
      %v4017 = vadd.f32 0.0, %v4016
      %v4018 = vpop.f32.mrb[0].mxu0
      %4019 = vmatprep.mubr.f32.mxu0 %v3832
      %4020 = vmatmul.mubr.f32.gmra.mrb[0].mxu0 %v3729
      %v4021 = vpop.f32.mrb[0].mxu0
      %v4022 = vadd.f32 0.0, %v4021
      %v4023 = vpop.f32.mrb[0].mxu0
      %4024 = vmatprep.mubr.f32.mxu0 %v3835
      %4025 = vmatmul.mubr.f32.gmra.mrb[0].mxu0 %v3731
      %v4026 = vpop.f32.mrb[0].mxu0
      %v4027 = vadd.f32 0.0, %v4026
      %v4028 = vpop.f32.mrb[0].mxu0
      %4029 = vmatprep.mubr.f32.mxu0 %v3838
      %4030 = vmatmul.mubr.f32.gmra.mrb[0].mxu0 %v3733
      %v4031 = vpop.f32.mrb[0].mxu0
      %v4032 = vadd.f32 0.0, %v4031
      %v4033 = vpop.f32.mrb[0].mxu0
      %4034 = vmatprep.mubr.f32.mxu0 %v3841
      %4035 = vmatmul.mubr.f32.gmra.mrb[0].mxu0 %v3735
      %v4036 = vpop.f32.mrb[0].mxu0
      %v4037 = vadd.f32 0.0, %v4036
      %v4038 = vpop.f32.mrb[0].mxu0
      %4039 = vmatprep.mubr.f32.mxu0 %v3844
      %4040 = vmatmul.mubr.f32.gmra.mrb[0].mxu0 %v3737
      %v4041 = vpop.f32.mrb[0].mxu0
      %v4042 = vadd.f32 0.0, %v4041
      %v4043 = vpop.f32.mrb[0].mxu0
      %4044 = vmatprep.mubr.f32.mxu0 %v3847
      %4045 = vmatmul.mubr.f32.gmra.mrb[0].mxu0 %v3739
      %v4046 = vpop.f32.mrb[0].mxu0
      %v4047 = vadd.f32 0.0, %v4046
      %v4048 = vpop.f32.mrb[0].mxu0
      %4049 = vmatprep.mubr.f32.mxu0 %v3850
      %4050 = vmatmul.mubr.f32.gmra.mrb[0].mxu0 %v3741
      %v4051 = vpop.f32.mrb[0].mxu0
      %v4052 = vadd.f32 0.0, %v4051
      %v4053 = vpop.f32.mrb[0].mxu0
      %4054 = vmatprep.mubr.f32.mxu0 %v3853
      %4055 = vmatmul.mubr.f32.gmra.mrb[0].mxu0 %v3743
      %v4056 = vpop.f32.mrb[0].mxu0
      %v4057 = vadd.f32 0.0, %v4056
      %v4058 = vpop.f32.mrb[0].mxu0
      %4059 = vmatprep.mubr.f32.mxu0 %v3856
      %4060 = vmatmul.mubr.f32.gmra.mrb[0].mxu0 %v3745
      %v4061 = vpop.f32.mrb[0].mxu0
      %v4062 = vadd.f32 0.0, %v4061
      %v4063 = vpop.f32.mrb[0].mxu0
      %4064 = vmatprep.mubr.f32.mxu0 %v3859
      %4065 = vmatmul.mubr.f32.gmra.mrb[0].mxu0 %v3747
      %v4066 = vpop.f32.mrb[0].mxu0
      %v4067 = vadd.f32 0.0, %v4066
      %v4068 = vpop.f32.mrb[0].mxu0
      %4069 = vmatprep.mubr.f32.mxu0 %v3862
      %4070 = vmatmul.mubr.f32.gmra.mrb[0].mxu0 %v3749
      %v4071 = vpop.f32.mrb[0].mxu0
      %v4072 = vadd.f32 0.0, %v4071
      %v4073 = vpop.f32.mrb[0].mxu0
      %4074 = vmatprep.mubr.f32.mxu0 %v3865
      %4075 = vmatmul.mubr.f32.gmra.mrb[0].mxu0 %v3751
      %v4076 = vpop.f32.mrb[0].mxu0
      %v4077 = vadd.f32 0.0, %v4076
      %v4078 = vpop.f32.mrb[0].mxu0
      %4079 = vmatprep.mubr.f32.mxu0 %v3868
      %4080 = vmatmul.mubr.f32.gmra.mrb[0].mxu0 %v3753
      %v4081 = vpop.f32.mrb[0].mxu0
      %v4082 = vadd.f32 0.0, %v4081
      %v4083 = vpop.f32.mrb[0].mxu0
      %4084 = vmatprep.mubr.f32.mxu0 %v3871
      %4085 = vmatmul.mubr.f32.gmra.mrb[0].mxu0 %v3755
      %v4086 = vpop.f32.mrb[0].mxu0
      %v4087 = vadd.f32 0.0, %v4086
      %v4088 = vpop.f32.mrb[0].mxu0
      %4089 = vmatprep.mubr.f32.mxu0 %v3874
      %4090 = vmatmul.mubr.f32.gmra.mrb[0].mxu0 %v3757
      %v4091 = vpop.f32.mrb[0].mxu0
      %v4092 = vadd.f32 0.0, %v4091
      %v4093 = vpop.f32.mrb[0].mxu0
      %4094 = vmatprep.mubr.f32.mxu0 %v3877
      %4095 = vmatmul.mubr.f32.gmra.mrb[0].mxu0 %v3759
      %v4096 = vpop.f32.mrb[0].mxu0
      %v4097 = vadd.f32 0.0, %v4096
      %v4098 = vpop.f32.mrb[0].mxu0
      %4099 = vmatprep.mubr.f32.mxu0 %v3880
      %4100 = vmatmul.mubr.f32.gmra.mrb[0].mxu0 %v3761
      %v4101 = vpop.f32.mrb[0].mxu0
      %v4102 = vadd.f32 0.0, %v4101
      %v4103 = vpop.f32.mrb[0].mxu0
      %4104 = vmatprep.mubr.f32.mxu0 %v3883
      %4105 = vmatmul.mubr.f32.gmra.mrb[0].mxu0 %v3763
      %v4106 = vpop.f32.mrb[0].mxu0
      %v4107 = vadd.f32 0.0, %v4106
      %v4108 = vpop.f32.mrb[0].mxu0
      %4109 = vmatprep.mubr.f32.mxu0 %v3886
      %4110 = vmatmul.mubr.f32.gmra.mrb[0].mxu0 %v3765
      %v4111 = vpop.f32.mrb[0].mxu0
      %v4112 = vadd.f32 0.0, %v4111
      %v4113 = vpop.f32.mrb[0].mxu0
      %4114 = vmatprep.mubr.f32.mxu0 %v3889
      %4115 = vmatmul.mubr.f32.gmra.mrb[0].mxu0 %v3767
      %v4116 = vpop.f32.mrb[0].mxu0
      %v4117 = vadd.f32 0.0, %v4116
      %v4118 = vpop.f32.mrb[0].mxu0
      %4119 = vdwg.mxu0
      %4120 = vxpose.xlu0.b32.start [1/16] %v3962, 128
      %4121 = vxpose.xlu0.b32.cont [2/16] %v3967, 128
      %4122 = vxpose.xlu0.b32.cont [3/16] %v3972, 128
      %4123 = vxpose.xlu0.b32.cont [4/16] %v3977, 128
      %4124 = vxpose.xlu0.b32.cont [5/16] %v3982, 128
      %4125 = vxpose.xlu0.b32.cont [6/16] %v3987, 128
      %4126 = vxpose.xlu0.b32.cont [7/16] %v3992, 128
      %4127 = vxpose.xlu0.b32.cont [8/16] %v3997, 128
      %4128 = vxpose.xlu0.b32.cont [9/16] %v4002, 128
      %4129 = vxpose.xlu0.b32.cont [10/16] %v4007, 128
      %4130 = vxpose.xlu0.b32.cont [11/16] %v4012, 128
      %4131 = vxpose.xlu0.b32.cont [12/16] %v4017, 128
      %4132 = vxpose.xlu0.b32.cont [13/16] %v4022, 128
      %4133 = vxpose.xlu0.b32.cont [14/16] %v4027, 128
      %4134 = vxpose.xlu0.b32.cont [15/16] %v4032, 128
      %4135 = vxpose.xlu0.b32.end [16/16] %v4037, 128
      %v4136 = vpop.trf.xlu0
      %v4137 = vpop.trf.xlu0
      %v4138 = vpop.trf.xlu0
      %v4139 = vpop.trf.xlu0
      %v4140 = vpop.trf.xlu0
      %v4141 = vpop.trf.xlu0
      %v4142 = vpop.trf.xlu0
      %v4143 = vpop.trf.xlu0
      %v4144 = vpop.trf.xlu0
      %v4145 = vpop.trf.xlu0
      %v4146 = vpop.trf.xlu0
      %v4147 = vpop.trf.xlu0
      %v4148 = vpop.trf.xlu0
      %v4149 = vpop.trf.xlu0
      %v4150 = vpop.trf.xlu0
      %v4151 = vpop.trf.xlu0
      %4152 = vxpose.xlu0.b32.start [1/16] %v4042, 128
      %4153 = vxpose.xlu0.b32.cont [2/16] %v4047, 128
      %4154 = vxpose.xlu0.b32.cont [3/16] %v4052, 128
      %4155 = vxpose.xlu0.b32.cont [4/16] %v4057, 128
      %4156 = vxpose.xlu0.b32.cont [5/16] %v4062, 128
      %4157 = vxpose.xlu0.b32.cont [6/16] %v4067, 128
      %4158 = vxpose.xlu0.b32.cont [7/16] %v4072, 128
      %4159 = vxpose.xlu0.b32.cont [8/16] %v4077, 128
      %4160 = vxpose.xlu0.b32.cont [9/16] %v4082, 128
      %4161 = vxpose.xlu0.b32.cont [10/16] %v4087, 128
      %4162 = vxpose.xlu0.b32.cont [11/16] %v4092, 128
      %4163 = vxpose.xlu0.b32.cont [12/16] %v4097, 128
      %4164 = vxpose.xlu0.b32.cont [13/16] %v4102, 128
      %4165 = vxpose.xlu0.b32.cont [14/16] %v4107, 128
      %4166 = vxpose.xlu0.b32.cont [15/16] %v4112, 128
      %4167 = vxpose.xlu0.b32.end [16/16] %v4117, 128
      %v4168 = vpop.trf.xlu0
      %v4169 = vpop.trf.xlu0
      %v4170 = vpop.trf.xlu0
      %v4171 = vpop.trf.xlu0
      %v4172 = vpop.trf.xlu0
      %v4173 = vpop.trf.xlu0
      %v4174 = vpop.trf.xlu0
      %v4175 = vpop.trf.xlu0
      %v4176 = vpop.trf.xlu0
      %v4177 = vpop.trf.xlu0
      %v4178 = vpop.trf.xlu0
      %v4179 = vpop.trf.xlu0
      %v4180 = vpop.trf.xlu0
      %v4181 = vpop.trf.xlu0
      %v4182 = vpop.trf.xlu0
      %v4183 = vpop.trf.xlu0
      %v4184 = vsel %vm3891, %v4136, 0.0
      %v4185 = vrot.slane %v4184, 4
      %v4186 = vadd.f32 %v4184, %v4185
      %v4187 = vrot.slane %v4186, 2
      %v4188 = vadd.f32 %v4186, %v4187
      %v4189 = vrot.slane %v4188, 1
      %v4190 = vadd.f32 %v4188, %v4189
      %v4191 = vsel %vm3891, %v4168, 0.0
      %v4192 = vrot.slane %v4191, 4
      %v4193 = vadd.f32 %v4191, %v4192
      %v4194 = vrot.slane %v4193, 2
      %v4195 = vadd.f32 %v4193, %v4194
      %v4196 = vrot.slane %v4195, 1
      %v4197 = vadd.f32 %v4195, %v4196
      %v4198 = vrcp.pop 4.0
      %v4199 = vmul.f32 %v4190, %v4198
      %v4200 = vmul.f32 %v4197, %v4198
      %v4201 = vmul.f32 %v4136, %v4136
      %v4202 = vmul.f32 %v4168, %v4168
      %v4203 = vsel %vm3891, %v4201, 0.0
      %v4204 = vrot.slane %v4203, 4
      %v4205 = vadd.f32 %v4203, %v4204
      %v4206 = vrot.slane %v4205, 2
      %v4207 = vadd.f32 %v4205, %v4206
      %v4208 = vrot.slane %v4207, 1
      %v4209 = vadd.f32 %v4207, %v4208
      %v4210 = vsel %vm3891, %v4202, 0.0
      %v4211 = vrot.slane %v4210, 4
      %v4212 = vadd.f32 %v4210, %v4211
      %v4213 = vrot.slane %v4212, 2
      %v4214 = vadd.f32 %v4212, %v4213
      %v4215 = vrot.slane %v4214, 1
      %v4216 = vadd.f32 %v4214, %v4215
      %v4217 = vmul.f32 %v4209, %v4198
      %v4218 = vmul.f32 %v4216, %v4198
      %v4219 = vmul.f32 %v4199, %v4199
      %v4220 = vmul.f32 %v4200, %v4200
      %v4221 = vsub.f32 %v4217, %v4219
      %v4222 = vsub.f32 %v4218, %v4220
      %v4223 = vadd.f32 %v4221, 1e-06
      %v4224 = vadd.f32 %v4222, 1e-06
      %v4225 = vrsqrt.pop %v4223
      %v4226 = vrsqrt.pop %v4224
      %v4227 = vld [vmem:[%s3] sm:$0xf]
      %v4229 = vsel %vm725, %v4227, 0
      %v4232 = vsel %vm3891, %v4136, 0
      %v4235 = vsel %vm3891, %v4168, 0
      %4237 = vmatprep.subr.mxu0 %v4235
      %4238 = vmatpush1.msra.mxu0 %v4232
      %4239 = vmatprep.subr.mxu0 0.0
      %4240 = vmatpush1.msra.mxu0 0.0
      %4241 = vmatprep.subr.mxu0 0.0
      %4242 = vmatpush1.msra.mxu0 0.0
      %4243 = vmatprep.subr.mxu0 0.0
      %4244 = vmatpush1.msra.mxu0 0.0
      %4245 = vmatprep.subr.mxu0 0.0
      %4246 = vmatpush1.msra.mxu0 0.0
      %4247 = vmatprep.subr.mxu0 0.0
      %4248 = vmatpush1.msra.mxu0 0.0
      %4249 = vmatprep.subr.mxu0 0.0
      %4250 = vmatpush1.msra.mxu0 0.0
      %4251 = vmatprep.subr.mxu0 0.0
      %4252 = vmatpush1.msra.mxu0 0.0
      %4253 = vmatprep.subr.mxu0 0.0
      %4254 = vmatpush1.msra.mxu0 0.0
      %4255 = vmatprep.subr.mxu0 0.0
      %4256 = vmatpush1.msra.mxu0 0.0
      %4257 = vmatprep.subr.mxu0 0.0
      %4258 = vmatpush1.msra.mxu0 0.0
      %4259 = vmatprep.subr.mxu0 0.0
      %4260 = vmatpush1.msra.mxu0 0.0
      %4261 = vmatprep.subr.mxu0 0.0
      %4262 = vmatpush1.msra.mxu0 0.0
      %4263 = vmatprep.subr.mxu0 0.0
      %4264 = vmatpush1.msra.mxu0 0.0
      %4265 = vmatprep.subr.mxu0 0.0
      %4266 = vmatpush1.msra.mxu0 0.0
      %4267 = vmatprep.subr.mxu0 0.0
      %4268 = vmatpush1.msra.mxu0 0.0
      %4269 = vmatprep.subr.mxu0 0.0
      %4270 = vmatpush1.msra.mxu0 0.0
      %4271 = vmatprep.subr.mxu0 0.0
      %4272 = vmatpush1.msra.mxu0 0.0
      %4273 = vmatprep.subr.mxu0 0.0
      %4274 = vmatpush1.msra.mxu0 0.0
      %4275 = vmatprep.subr.mxu0 0.0
      %4276 = vmatpush1.msra.mxu0 0.0
      %4277 = vmatprep.subr.mxu0 0.0
      %4278 = vmatpush1.msra.mxu0 0.0
      %4279 = vmatprep.subr.mxu0 0.0
      %4280 = vmatpush1.msra.mxu0 0.0
      %4281 = vmatprep.subr.mxu0 0.0
      %4282 = vmatpush1.msra.mxu0 0.0
      %4283 = vmatprep.subr.mxu0 0.0
      %4284 = vmatpush1.msra.mxu0 0.0
      %4285 = vmatprep.subr.mxu0 0.0
      %4286 = vmatpush1.msra.mxu0 0.0
      %4287 = vmatprep.subr.mxu0 0.0
      %4288 = vmatpush1.msra.mxu0 0.0
      %4289 = vmatprep.subr.mxu0 0.0
      %4290 = vmatpush1.msra.mxu0 0.0
      %4291 = vmatprep.subr.mxu0 0.0
      %4292 = vmatpush1.msra.mxu0 0.0
      %4293 = vmatprep.subr.mxu0 0.0
      %4294 = vmatpush1.msra.mxu0 0.0
      %4295 = vmatprep.subr.mxu0 0.0
      %4296 = vmatpush1.msra.mxu0 0.0
      %4297 = vmatprep.subr.mxu0 0.0
      %4298 = vmatpush1.msra.mxu0 0.0
      %4299 = vmatprep.subr.mxu0 0.0
      %4300 = vmatpush1.msra.mxu0 0.0
      %4301 = vmatprep.mubr.f32.mxu0 0.0
      %4302 = vmatmul.mubr.f32.gmra.mrb[0].mxu0 %v4229
      %v4303 = vpop.f32.mrb[0].mxu0
      %v4304 = vadd.f32 0.0, %v4303
      %v4305 = vpop.f32.mrb[0].mxu0
      %v4306 = vadd.f32 0.0, %v4305
      %4307 = vdwg.mxu0
      %v4308 = vld [vmem:[%s4] sm:$0xf]
      %4310 = vset.pattern.permute.xlu0 0
      %4311 = vperm.xlu0 %4310, %v4308
      %v4312 = vpop.permute.xlu0 %4311
      %v4314 = vmul.f32 %v4199, %v4312
      %v4315 = vmul.f32 %v4200, %v4312
      %v4316 = vsub.f32 %v4304, %v4314
      %v4317 = vsub.f32 %v4306, %v4315
      %v4318 = vmul.f32 %v4225, %v4316
      %v4319 = vmul.f32 %v4226, %v4317
      %v4320 = vld [vmem:[%s5] sm:$0xf]
      %4322 = vset.pattern.permute.xlu0 0
      %4323 = vperm.xlu0 %4322, %v4320
      %v4324 = vpop.permute.xlu0 %4323
      %v4326 = vadd.f32 %v4318, %v4324
      %v4327 = vadd.f32 %v4319, %v4324
      %v4328 = vmul.f32 %v4326, 0.5
      %v4329 = vmul.f32 %v4327, 0.5
      %v4330 = vmul.f32 %v4326, 0.70710677
      %v4331 = vmul.f32 %v4327, 0.70710677
      %vm4332 = vcmp.ge.f32.partialorder %v4330, 0.0
      %vm4333 = vcmp.ge.f32.partialorder %v4331, 0.0
      %v4334 = vsel %vm4332, 1.0, -1.0
      %v4335 = vsel %vm4333, 1.0, -1.0
      %v4336 = vand.u32 2147483647, %v4330
      %v4337 = vand.u32 2147483647, %v4331
      %v4338 = vmul.f32 %v4336, 0.3275911
      %v4339 = vmul.f32 %v4337, 0.3275911
      %v4340 = vadd.f32 %v4338, 1.0
      %v4341 = vadd.f32 %v4339, 1.0
      %v4342 = vrcp.pop %v4340
      %v4343 = vmul.f32 1.0, %v4342
      %v4344 = vrcp.pop %v4341
      %v4345 = vmul.f32 1.0, %v4344
      %v4346 = vmul.f32 %v4343, 1.0614054
      %v4347 = vmul.f32 %v4345, 1.0614054
      %v4348 = vadd.f32 %v4346, -1.4531521
      %v4349 = vadd.f32 %v4347, -1.4531521
      %v4350 = vmul.f32 %v4348, %v4343
      %v4351 = vmul.f32 %v4349, %v4345
      %v4352 = vadd.f32 %v4350, 1.4214138
      %v4353 = vadd.f32 %v4351, 1.4214138
      %v4354 = vmul.f32 %v4352, %v4343
      %v4355 = vmul.f32 %v4353, %v4345
      %v4356 = vadd.f32 %v4354, -0.28449672
      %v4357 = vadd.f32 %v4355, -0.28449672
      %v4358 = vmul.f32 %v4356, %v4343
      %v4359 = vmul.f32 %v4357, %v4345
      %v4360 = vadd.f32 %v4358, 0.2548296
      %v4361 = vadd.f32 %v4359, 0.2548296
      %v4362 = vmul.f32 %v4360, %v4343
      %v4363 = vmul.f32 %v4361, %v4345
      %v4364 = vsub.f32 0.0, %v4336
      %v4365 = vsub.f32 0.0, %v4337
      %v4366 = vmul.f32 %v4364, %v4336
      %v4367 = vmul.f32 %v4365, %v4337
      %v4368 = vmul.f32 %v4366, 1.442695
      %v4369 = vpow.pop %v4368
      %v4370 = vmul.f32 %v4367, 1.442695
      %v4371 = vpow.pop %v4370
      %v4372 = vmul.f32 %v4362, %v4369
      %v4373 = vmul.f32 %v4363, %v4371
      %v4374 = vsub.f32 1.0, %v4372
      %v4375 = vsub.f32 1.0, %v4373
      %v4376 = vmul.f32 %v4334, %v4374
      %v4377 = vmul.f32 %v4335, %v4375
      %v4378 = vadd.f32 %v4376, 1.0
      %v4379 = vadd.f32 %v4377, 1.0
      %v4380 = vmul.f32 %v4328, %v4378
      %v4381 = vmul.f32 %v4329, %v4379
      %v4384 = vcombine.low %v4380, %v4381
      %4386 = vst [vmem:[%s251] sm:$0xff] %v4384
      %p4387 = scmp.lt.s32.totalorder %s17, 1
      %s4388 = scalar_select %p4387, %s17, 1
      %s4389 = smul.addr %s4388, 2
      %s4390 = smul.addr %s4389, 4
      %s4391 = scalar_lea.vmem %s6, %s4390
      // Predicated region
      $region45: #{down_forward.1} parent=43 // pred_check
        %p4392 = pneg %p166
      $region46: #{down_forward.1} parent=43 // pred_check_branch
        %4394 = sbr.rel (%p4392) target = $region48
      $region47: #{down_forward.1} parent=43 // pred_region
        _
      $region48: #{down_forward.1} parent=43 // pred_fallthru
        _
    $region44: #{down_forward.1} parent=5 // pred_fallthru
      _
    %p4395 = scmp.le.s32.totalorder 2, %s12
    // Predicated region
    $region49: #{down_forward.1} parent=5 // pred_check
      %p4396 = pneg %p4395
    $region50: #{down_forward.1} parent=5 // pred_check_branch
      %4398 = sbr.rel (%p4396) target = $region52
    $region51: #{down_forward.1} parent=5 // pred_region
      %s4399 = ssub.s32 %s12, 2
      // Predicated region
      $region53: #{down_forward.1} parent=51 // pred_check
        %p4400 = pneg %p172
      $region54: #{down_forward.1} parent=51 // pred_check_branch
        %4402 = sbr.rel (%p4400) target = $region56
      $region55: #{down_forward.1} parent=51 // pred_region
        %p4403 = scmp.lt.s32.totalorder %s18, 1
        %s4404 = scalar_select %p4403, %s18, 1
        %s4405 = smul.addr %s4404, 2
        %s4406 = smul.addr %s4405, 4
        %s4407 = scalar_lea.vmem %s6, %s4406
      $region56: #{down_forward.1} parent=51 // pred_fallthru
        _
    $region52: #{down_forward.1} parent=5 // pred_fallthru
      _
  $region6: #{down_forward.1} parent=0 // loop_footer
    %s16 = sadd.s32 1, %s12
  $region7: #{down_forward.1} parent=0 // loop_footer_branch
    %11 = sbr.rel target = $region3
  $region8: #{down_forward.1} parent=0 // loop_exit
    _

</llo_original>
